<compile_context>
chip_gen: v7x
topology: tpu7x:2x2x1
jax: 0.10.0
libtpu: 0.0.40
codegen_flags: <defaults>
</compile_context>

<pallas_src>
import functools
import math

import jax
import jax.numpy as jnp
from jax.experimental import pallas as pl
from jax.experimental.pallas import tpu as pltpu

NEG_BIG = -1e30  # additive mask / maxpool pad value (never selected)


# ----------------------------- Pallas kernel --------------------------------

def _fused_encoder_kernel(
        x_ref, wqkv0_ref, bqkv0_ref, wo0_ref, bo0_ref,
        wc_ref, bc_ref,
        wqkv1_ref, bqkv1_ref, wo1_ref, bo1_ref,
        lng_ref, lnb_ref,
        pprev_ref, pnext_ref, mask0_ref, mask1_ref,
        sctr_ref, snxt_ref, sprv_ref, ppad_ref,
        badj_ref, gcnw_ref, gcnb_ref,
        o_ref, *, n_heads, alpha):
    x = x_ref[...]                                   # [N*L, D] slab for batch b
    d = x.shape[-1]
    dh = d // n_heads
    scale = 1.0 / math.sqrt(dh)

    def mha(h2, wqkv, bqkv, wo, bo, mask):
        # Dense multi-head self-attention on a (rows x D) slab. `mask` is a
        # block-diagonal additive mask that keeps each (b, n) time sequence
        # independent, so one matmul per head covers all sequences at once.
        # TODO(synk): ProbAttention's top-u query sparsification is replaced by
        # dense softmax attention (same math, no query subsampling).
        qkv = jnp.dot(h2, wqkv, preferred_element_type=jnp.float32) + bqkv
        y = jnp.zeros(h2.shape, jnp.float32)
        for hh in range(n_heads):                    # unrolled, only n_heads iters
            qs = qkv[:, hh * dh:(hh + 1) * dh]
            ks = qkv[:, d + hh * dh:d + (hh + 1) * dh]
            vs = qkv[:, 2 * d + hh * dh:2 * d + (hh + 1) * dh]
            s = jax.lax.dot_general(qs, ks, (((1,), (1,)), ((), ())),
                                    preferred_element_type=jnp.float32)
            s = s * scale + mask
            s = s - jnp.max(s, axis=-1, keepdims=True)
            p = jnp.exp(s)
            p = p * pl.reciprocal(jnp.sum(p, axis=-1, keepdims=True), approx=True)
            oh = jnp.dot(p, vs, preferred_element_type=jnp.float32)
            # accumulate the output projection per head slice (no lane concat)
            y = y + jnp.dot(oh, wo[hh * dh:(hh + 1) * dh, :],
                            preferred_element_type=jnp.float32)
        return h2 + y + bo

    # --- temporal attention 0 (residual) -------------------------------------
    h = mha(x, wqkv0_ref[...], bqkv0_ref[...], wo0_ref[...], bo0_ref[...],
            mask0_ref[...])

    # --- distilling conv: Conv1d(k=3, circular pad=1) -> ELU ------------------
    # TODO(synk): BatchNorm1d omitted (identity with default eval statistics).
    x_prev = jnp.dot(pprev_ref[...], h, preferred_element_type=jnp.float32)
    x_next = jnp.dot(pnext_ref[...], h, preferred_element_type=jnp.float32)
    cat = jnp.concatenate([x_prev, h, x_next], axis=1)        # [N*L, 3D]
    c = jnp.dot(cat, wc_ref[...], preferred_element_type=jnp.float32) + bc_ref[...]
    e = jnp.where(c > 0, c, jnp.exp(c) - 1.0)                 # ELU(alpha=1)

    # --- MaxPool1d(k=3, s=2, p=1): row-selection matmuls + elementwise max ----
    ctr = jnp.dot(sctr_ref[...], e, preferred_element_type=jnp.float32)
    nxt = jnp.dot(snxt_ref[...], e, preferred_element_type=jnp.float32)
    prv = jnp.dot(sprv_ref[...], e, preferred_element_type=jnp.float32) + ppad_ref[...]
    pooled = jnp.maximum(jnp.maximum(ctr, nxt), prv)          # [N*Lp, D]

    # --- temporal attention 1 (residual) --------------------------------------
    h = mha(pooled, wqkv1_ref[...], bqkv1_ref[...], wo1_ref[...], bo1_ref[...],
            mask1_ref[...])

    # --- LayerNorm over channels ----------------------------------------------
    mu = jnp.mean(h, axis=-1, keepdims=True)
    var = jnp.mean(jnp.square(h - mu), axis=-1, keepdims=True)
    et = (h - mu) * jax.lax.rsqrt(var + 1e-5) * lng_ref[...] + lnb_ref[...]

    # --- spatial GCN (adj contraction = kron(adj, I) matmul) + alpha blend ----
    # TODO(synk): Encoder_Spatial internals unavailable; a single vanilla GCN
    # layer (gcn_layers=1) is used as the spatial encoder.
    ax = jnp.dot(badj_ref[...], et, preferred_element_type=jnp.float32)
    es = jnp.dot(ax, gcnw_ref[...], preferred_element_type=jnp.float32) + gcnb_ref[...]
    es = jnp.maximum(es, 0.0)
    o_ref[...] = alpha * et + (1.0 - alpha) * es


# ------------------------------ wrapper --------------------------------------

def encoder_layer_forward(x, adj, params, n_heads, alpha):
    """ET: attn0 -> conv distill -> attn1 -> LayerNorm; ES: GCN; blend with alpha."""
    B, N, L, D = x.shape
    l_out = (L - 1) // 2 + 1
    R0, R1 = N * L, N * l_out
    f32 = jnp.float32

    # ----- pack weights (fused QKV, stacked conv taps) -----
    a0, a1 = params["attn0"], params["attn1"]
    wqkv0 = jnp.concatenate([a0["wq"], a0["wk"], a0["wv"]], axis=1)   # [D, 3D]
    bqkv0 = jnp.concatenate([a0["bq"], a0["bk"], a0["bv"]], axis=1)   # [1, 3D]
    wqkv1 = jnp.concatenate([a1["wq"], a1["wk"], a1["wv"]], axis=1)
    bqkv1 = jnp.concatenate([a1["bq"], a1["bk"], a1["bv"]], axis=1)
    wc = params["conv_w"].reshape(3 * D, D)                           # [3D, D]

    # ----- structural constants (built once, outside the kernel) -----
    r0 = jnp.arange(R0)
    blk0, pos0 = r0 // L, r0 % L
    prev_idx = blk0 * L + (pos0 - 1) % L
    next_idx = blk0 * L + (pos0 + 1) % L
    p_prev = (r0[None, :] == prev_idx[:, None]).astype(f32)           # [R0, R0]
    p_next = (r0[None, :] == next_idx[:, None]).astype(f32)
    mask0 = jnp.where(blk0[:, None] == blk0[None, :], 0.0, NEG_BIG).astype(f32)

    r1 = jnp.arange(R1)
    blk1, t1 = r1 // l_out, r1 % l_out
    mask1 = jnp.where(blk1[:, None] == blk1[None, :], 0.0, NEG_BIG).astype(f32)
    ctr_idx = blk1 * L + 2 * t1                                       # pool centers
    s_ctr = (r0[None, :] == ctr_idx[:, None]).astype(f32)             # [R1, R0]
    s_nxt = (r0[None, :] == (ctr_idx + 1)[:, None]).astype(f32)
    s_prv = ((r0[None, :] == (ctr_idx - 1)[:, None])
             & (t1 != 0)[:, None]).astype(f32)
    pool_pad = jnp.where(t1 == 0, NEG_BIG, 0.0).astype(f32)[:, None]  # [R1, 1]
    big_adj = jnp.kron(adj.astype(f32), jnp.eye(l_out, dtype=f32))    # [R1, R1]

    x2 = x.reshape(B, R0, D)

    operands = [x2, wqkv0, bqkv0, a0["wo"], a0["bo"], wc, params["conv_b"],
                wqkv1, bqkv1, a1["wo"], a1["bo"],
                params["ln_g"], params["ln_b"],
                p_prev, p_next, mask0, mask1,
                s_ctr, s_nxt, s_prv, pool_pad,
                big_adj, params["gcn_w"], params["gcn_b"]]

    in_specs = [pl.BlockSpec((None, R0, D), lambda b: (b, 0, 0))]
    in_specs += [pl.BlockSpec(a.shape, lambda b: (0, 0)) for a in operands[1:]]

    out = pl.pallas_call(
        functools.partial(_fused_encoder_kernel, n_heads=n_heads, alpha=alpha),
        out_shape=jax.ShapeDtypeStruct((B, R1, D), x.dtype),
        grid=(B,),
        in_specs=in_specs,
        out_specs=pl.BlockSpec((None, R1, D), lambda b: (b, 0, 0)),
        compiler_params=pltpu.CompilerParams(
            dimension_semantics=("parallel",)),
    )(*operands)
    return out.reshape(B, N, l_out, D)


# -------------------------- pure-JAX reference -------------------------------

def _reference_forward(x, adj, params, n_heads, alpha):
    B, N, L, D = x.shape
    dh = D // n_heads
    h = x.reshape(B * N, L, D)

    def attn_ref(h, p):
        bn, l, d = h.shape
        q = (h @ p["wq"] + p["bq"]).reshape(bn, l, n_heads, dh)
        k = (h @ p["wk"] + p["bk"]).reshape(bn, l, n_heads, dh)
        v = (h @ p["wv"] + p["bv"]).reshape(bn, l, n_heads, dh)
        s = jnp.einsum("blhd,bmhd->bhlm", q, k) / math.sqrt(dh)
        pr = jax.nn.softmax(s, axis=-1)
        o = jnp.einsum("bhlm,bmhd->blhd", pr, v).reshape(bn, l, d)
        return h + o @ p["wo"] + p["bo"]

    def conv_ref(h, w, b):
        c = (jnp.roll(h, 1, axis=1) @ w[0] + h @ w[1]
             + jnp.roll(h, -1, axis=1) @ w[2] + b)
        e = jnp.where(c > 0, c, jnp.exp(c) - 1.0)
        bn, l, d = e.shape
        pad = jnp.full((bn, 1, d), NEG_BIG, e.dtype)
        ep = jnp.concatenate([pad, e, pad], axis=1)
        l_out = (l - 1) // 2 + 1
        return jnp.stack([jnp.max(ep[:, 2 * t:2 * t + 3], axis=1)
                          for t in range(l_out)], axis=1)

    h = attn_ref(h, params["attn0"])
    h = conv_ref(h, params["conv_w"], params["conv_b"])
    h = attn_ref(h, params["attn1"])
    mu = jnp.mean(h, axis=-1, keepdims=True)
    var = jnp.mean(jnp.square(h - mu), axis=-1, keepdims=True)
    h = (h - mu) / jnp.sqrt(var + 1e-5) * params["ln_g"] + params["ln_b"]
    et = h.reshape(B, N, -1, D)
    ax = jnp.einsum("nm,bmtd->bntd", adj, et)
    es = jnp.maximum(ax @ params["gcn_w"] + params["gcn_b"], 0.0)
    return alpha * et + (1.0 - alpha) * es


# ------------------------------ params ----------------------------------------

def init_params(key, d_model):
    keys = jax.random.split(key, 24)
    nrm = lambda k, shp, s=0.1: (s * jax.random.normal(k, shp)).astype(jnp.float32)

    def attn_p(ks):
        return dict(wq=nrm(ks[0], (d_model, d_model)), wk=nrm(ks[1], (d_model, d_model)),
                    wv=nrm(ks[2], (d_model, d_model)), wo=nrm(ks[3], (d_model, d_model)),
                    bq=nrm(ks[4], (1, d_model)), bk=nrm(ks[5], (1, d_model)),
                    bv=nrm(ks[6], (1, d_model)), bo=nrm(ks[7], (1, d_model)))

    return dict(
        attn0=attn_p(keys[0:8]),
        attn1=attn_p(keys[8:16]),
        conv_w=nrm(keys[16], (3, d_model, d_model)),   # [tap, in, out]
        conv_b=nrm(keys[17], (1, d_model)),
        ln_g=jnp.ones((1, d_model), jnp.float32),
        ln_b=jnp.zeros((1, d_model), jnp.float32),
        gcn_w=nrm(keys[18], (d_model, d_model)),
        gcn_b=nrm(keys[19], (1, d_model)),
    )


# -------------------------------- main -----------------------------------------

if __name__ == "__main__":
    B, N, L, D, H = 2, 4, 8, 32, 4     # batch, num_nodes, seq len, d_model, n_heads
    ALPHA = 0.5                        # args.alpha

    key = jax.random.PRNGKey(0)
    kx, ka, kp = jax.random.split(key, 3)
    x = jax.random.normal(kx, (B, N, L, D), jnp.float32)
    a = jax.random.uniform(ka, (N, N), jnp.float32)
    a = 0.5 * (a + a.T) + jnp.eye(N, dtype=jnp.float32)
    adj = a / jnp.sum(a, axis=-1, keepdims=True)      # row-normalized adjacency

    params = init_params(kp, D)

    out = encoder_layer_forward(x, adj, params, H, ALPHA)
    out = jax.block_until_ready(out)

    ref = _reference_forward(x, adj, params, H, ALPHA)
    assert out.shape == (B, N, (L - 1) // 2 + 1, D), out.shape
    # Tolerance covers the EUP approx-reciprocal used for the softmax denominator.
    max_err = float(jnp.max(jnp.abs(out - ref)))
    assert max_err < 1e-2, f"mismatch vs reference: {max_err}"

    print("KERNEL_OK")
</pallas_src>

<mosaic_0001>
module attributes {stable_mosaic.version = 11 : i64} {
  func.func @_fused_encoder_kernel(%arg0: i32, %arg1: memref<1x32x32xf32, #tpu.memory_space<vmem>>, %arg2: memref<32x96xf32, #tpu.memory_space<vmem>>, %arg3: memref<1x96xf32, #tpu.memory_space<vmem>>, %arg4: memref<32x32xf32, #tpu.memory_space<vmem>>, %arg5: memref<1x32xf32, #tpu.memory_space<vmem>>, %arg6: memref<96x32xf32, #tpu.memory_space<vmem>>, %arg7: memref<1x32xf32, #tpu.memory_space<vmem>>, %arg8: memref<32x96xf32, #tpu.memory_space<vmem>>, %arg9: memref<1x96xf32, #tpu.memory_space<vmem>>, %arg10: memref<32x32xf32, #tpu.memory_space<vmem>>, %arg11: memref<1x32xf32, #tpu.memory_space<vmem>>, %arg12: memref<1x32xf32, #tpu.memory_space<vmem>>, %arg13: memref<1x32xf32, #tpu.memory_space<vmem>>, %arg14: memref<32x32xf32, #tpu.memory_space<vmem>>, %arg15: memref<32x32xf32, #tpu.memory_space<vmem>>, %arg16: memref<32x32xf32, #tpu.memory_space<vmem>>, %arg17: memref<16x16xf32, #tpu.memory_space<vmem>>, %arg18: memref<16x32xf32, #tpu.memory_space<vmem>>, %arg19: memref<16x32xf32, #tpu.memory_space<vmem>>, %arg20: memref<16x32xf32, #tpu.memory_space<vmem>>, %arg21: memref<16x1xf32, #tpu.memory_space<vmem>>, %arg22: memref<16x16xf32, #tpu.memory_space<vmem>>, %arg23: memref<32x32xf32, #tpu.memory_space<vmem>>, %arg24: memref<1x32xf32, #tpu.memory_space<vmem>>, %arg25: memref<1x16x32xf32, #tpu.memory_space<vmem>>) attributes {dimension_semantics = [#tpu.dimension_semantics<parallel>], iteration_bounds = array<i64: 2>, scalar_prefetch = 0 : i64, scratch_operands = 0 : i64, tpu.core_type = #tpu.core_type<tc>, window_params = [{transform_indices = @transform_0, window_bounds = array<i64: 1, 32, 32>}, {pipeline_mode = #tpu.pipeline_mode<synchronous>, transform_indices = @transform_1, window_bounds = array<i64: 32, 96>}, {pipeline_mode = #tpu.pipeline_mode<synchronous>, transform_indices = @transform_2, window_bounds = array<i64: 1, 96>}, {pipeline_mode = #tpu.pipeline_mode<synchronous>, transform_indices = @transform_3, window_bounds = array<i64: 32, 32>}, {pipeline_mode = #tpu.pipeline_mode<synchronous>, transform_indices = @transform_4, window_bounds = array<i64: 1, 32>}, {pipeline_mode = #tpu.pipeline_mode<synchronous>, transform_indices = @transform_5, window_bounds = array<i64: 96, 32>}, {pipeline_mode = #tpu.pipeline_mode<synchronous>, transform_indices = @transform_6, window_bounds = array<i64: 1, 32>}, {pipeline_mode = #tpu.pipeline_mode<synchronous>, transform_indices = @transform_7, window_bounds = array<i64: 32, 96>}, {pipeline_mode = #tpu.pipeline_mode<synchronous>, transform_indices = @transform_8, window_bounds = array<i64: 1, 96>}, {pipeline_mode = #tpu.pipeline_mode<synchronous>, transform_indices = @transform_9, window_bounds = array<i64: 32, 32>}, {pipeline_mode = #tpu.pipeline_mode<synchronous>, transform_indices = @transform_10, window_bounds = array<i64: 1, 32>}, {pipeline_mode = #tpu.pipeline_mode<synchronous>, transform_indices = @transform_11, window_bounds = array<i64: 1, 32>}, {pipeline_mode = #tpu.pipeline_mode<synchronous>, transform_indices = @transform_12, window_bounds = array<i64: 1, 32>}, {pipeline_mode = #tpu.pipeline_mode<synchronous>, transform_indices = @transform_13, window_bounds = array<i64: 32, 32>}, {pipeline_mode = #tpu.pipeline_mode<synchronous>, transform_indices = @transform_14, window_bounds = array<i64: 32, 32>}, {pipeline_mode = #tpu.pipeline_mode<synchronous>, transform_indices = @transform_15, window_bounds = array<i64: 32, 32>}, {pipeline_mode = #tpu.pipeline_mode<synchronous>, transform_indices = @transform_16, window_bounds = array<i64: 16, 16>}, {pipeline_mode = #tpu.pipeline_mode<synchronous>, transform_indices = @transform_17, window_bounds = array<i64: 16, 32>}, {pipeline_mode = #tpu.pipeline_mode<synchronous>, transform_indices = @transform_18, window_bounds = array<i64: 16, 32>}, {pipeline_mode = #tpu.pipeline_mode<synchronous>, transform_indices = @transform_19, window_bounds = array<i64: 16, 32>}, {pipeline_mode = #tpu.pipeline_mode<synchronous>, transform_indices = @transform_20, window_bounds = array<i64: 16, 1>}, {pipeline_mode = #tpu.pipeline_mode<synchronous>, transform_indices = @transform_21, window_bounds = array<i64: 16, 16>}, {pipeline_mode = #tpu.pipeline_mode<synchronous>, transform_indices = @transform_22, window_bounds = array<i64: 32, 32>}, {pipeline_mode = #tpu.pipeline_mode<synchronous>, transform_indices = @transform_23, window_bounds = array<i64: 1, 32>}, {transform_indices = @transform_24, window_bounds = array<i64: 1, 16, 32>}]} {
    %c0 = arith.constant 0 : index
    %c0_0 = arith.constant 0 : index
    %c0_1 = arith.constant 0 : index
    %0 = vector.load %arg1[%c0, %c0_0, %c0_1] : memref<1x32x32xf32, #tpu.memory_space<vmem>>, vector<1x32x32xf32>
    %1 = vector.shape_cast %0 : vector<1x32x32xf32> to vector<32x32xf32>
    %c0_2 = arith.constant 0 : index
    %c0_3 = arith.constant 0 : index
    %2 = vector.load %arg2[%c0_2, %c0_3] : memref<32x96xf32, #tpu.memory_space<vmem>>, vector<32x96xf32>
    %c0_4 = arith.constant 0 : index
    %c0_5 = arith.constant 0 : index
    %3 = vector.load %arg3[%c0_4, %c0_5] : memref<1x96xf32, #tpu.memory_space<vmem>>, vector<1x96xf32>
    %c0_6 = arith.constant 0 : index
    %c0_7 = arith.constant 0 : index
    %4 = vector.load %arg4[%c0_6, %c0_7] : memref<32x32xf32, #tpu.memory_space<vmem>>, vector<32x32xf32>
    %c0_8 = arith.constant 0 : index
    %c0_9 = arith.constant 0 : index
    %5 = vector.load %arg5[%c0_8, %c0_9] : memref<1x32xf32, #tpu.memory_space<vmem>>, vector<1x32xf32>
    %c0_10 = arith.constant 0 : index
    %c0_11 = arith.constant 0 : index
    %6 = vector.load %arg16[%c0_10, %c0_11] : memref<32x32xf32, #tpu.memory_space<vmem>>, vector<32x32xf32>
    %cst = arith.constant dense<0.000000e+00> : vector<32x96xf32>
    %7 = tpu.matmul %1, %2, %cst {dimension_numbers = #tpu.dot_dimension_numbers<[1], [0], [0], [1], [0, 0, 1, 1], [], []>} : vector<32x32xf32>, vector<32x96xf32>, vector<32x96xf32> -> vector<32x96xf32>
    %8 = vector.broadcast %3 : vector<1x96xf32> to vector<32x96xf32>
    %9 = arith.addf %7, %8 : vector<32x96xf32>
    %cst_12 = arith.constant 0.000000e+00 : f32
    %10 = vector.broadcast %cst_12 : f32 to vector<32x32xf32>
    %11 = vector.extract_strided_slice %9 {offsets = [0, 0], sizes = [32, 8], strides = [1, 1]} : vector<32x96xf32> to vector<32x8xf32>
    %12 = vector.extract_strided_slice %9 {offsets = [0, 32], sizes = [32, 8], strides = [1, 1]} : vector<32x96xf32> to vector<32x8xf32>
    %13 = vector.extract_strided_slice %9 {offsets = [0, 64], sizes = [32, 8], strides = [1, 1]} : vector<32x96xf32> to vector<32x8xf32>
    %cst_13 = arith.constant dense<0.000000e+00> : vector<32x32xf32>
    %14 = tpu.matmul %11, %12, %cst_13 {dimension_numbers = #tpu.dot_dimension_numbers<[1], [1], [0], [0], [0, 0, 1, 0], [], []>} : vector<32x8xf32>, vector<32x8xf32>, vector<32x32xf32> -> vector<32x32xf32>
    %cst_14 = arith.constant 0.353553385 : f32
    %15 = vector.broadcast %cst_14 : f32 to vector<32x32xf32>
    %16 = arith.mulf %14, %15 : vector<32x32xf32>
    %17 = arith.addf %16, %6 : vector<32x32xf32>
    %cst_15 = arith.constant dense<0xFF800000> : vector<32xf32>
    %18 = vector.multi_reduction <maximumf>, %17, %cst_15 [1] : vector<32x32xf32> to vector<32xf32>
    %19 = vector.shape_cast %18 : vector<32xf32> to vector<32x1xf32>
    %20 = vector.broadcast %19 : vector<32x1xf32> to vector<32x32xf32>
    %21 = arith.subf %17, %20 : vector<32x32xf32>
    %22 = math.exp %21 : vector<32x32xf32>
    %cst_16 = arith.constant dense<0.000000e+00> : vector<32xf32>
    %23 = vector.multi_reduction <add>, %22, %cst_16 [1] : vector<32x32xf32> to vector<32xf32>
    %24 = vector.shape_cast %23 : vector<32xf32> to vector<32x1xf32>
    %25 = tpu.reciprocal %24 {approx = true} : vector<32x1xf32> -> vector<32x1xf32>
    %26 = vector.broadcast %25 : vector<32x1xf32> to vector<32x32xf32>
    %27 = arith.mulf %22, %26 : vector<32x32xf32>
    %cst_17 = arith.constant dense<0.000000e+00> : vector<32x8xf32>
    %28 = tpu.matmul %27, %13, %cst_17 {dimension_numbers = #tpu.dot_dimension_numbers<[1], [0], [0], [1], [0, 0, 1, 1], [], []>} : vector<32x32xf32>, vector<32x8xf32>, vector<32x8xf32> -> vector<32x8xf32>
    %29 = vector.extract_strided_slice %4 {offsets = [0, 0], sizes = [8, 32], strides = [1, 1]} : vector<32x32xf32> to vector<8x32xf32>
    %cst_18 = arith.constant dense<0.000000e+00> : vector<32x32xf32>
    %30 = tpu.matmul %28, %29, %cst_18 {dimension_numbers = #tpu.dot_dimension_numbers<[1], [0], [0], [1], [0, 0, 1, 1], [], []>} : vector<32x8xf32>, vector<8x32xf32>, vector<32x32xf32> -> vector<32x32xf32>
    %31 = arith.addf %10, %30 : vector<32x32xf32>
    %32 = vector.extract_strided_slice %9 {offsets = [0, 8], sizes = [32, 8], strides = [1, 1]} : vector<32x96xf32> to vector<32x8xf32>
    %33 = vector.extract_strided_slice %9 {offsets = [0, 40], sizes = [32, 8], strides = [1, 1]} : vector<32x96xf32> to vector<32x8xf32>
    %34 = vector.extract_strided_slice %9 {offsets = [0, 72], sizes = [32, 8], strides = [1, 1]} : vector<32x96xf32> to vector<32x8xf32>
    %cst_19 = arith.constant dense<0.000000e+00> : vector<32x32xf32>
    %35 = tpu.matmul %32, %33, %cst_19 {dimension_numbers = #tpu.dot_dimension_numbers<[1], [1], [0], [0], [0, 0, 1, 0], [], []>} : vector<32x8xf32>, vector<32x8xf32>, vector<32x32xf32> -> vector<32x32xf32>
    %cst_20 = arith.constant 0.353553385 : f32
    %36 = vector.broadcast %cst_20 : f32 to vector<32x32xf32>
    %37 = arith.mulf %35, %36 : vector<32x32xf32>
    %38 = arith.addf %37, %6 : vector<32x32xf32>
    %cst_21 = arith.constant dense<0xFF800000> : vector<32xf32>
    %39 = vector.multi_reduction <maximumf>, %38, %cst_21 [1] : vector<32x32xf32> to vector<32xf32>
    %40 = vector.shape_cast %39 : vector<32xf32> to vector<32x1xf32>
    %41 = vector.broadcast %40 : vector<32x1xf32> to vector<32x32xf32>
    %42 = arith.subf %38, %41 : vector<32x32xf32>
    %43 = math.exp %42 : vector<32x32xf32>
    %cst_22 = arith.constant dense<0.000000e+00> : vector<32xf32>
    %44 = vector.multi_reduction <add>, %43, %cst_22 [1] : vector<32x32xf32> to vector<32xf32>
    %45 = vector.shape_cast %44 : vector<32xf32> to vector<32x1xf32>
    %46 = tpu.reciprocal %45 {approx = true} : vector<32x1xf32> -> vector<32x1xf32>
    %47 = vector.broadcast %46 : vector<32x1xf32> to vector<32x32xf32>
    %48 = arith.mulf %43, %47 : vector<32x32xf32>
    %cst_23 = arith.constant dense<0.000000e+00> : vector<32x8xf32>
    %49 = tpu.matmul %48, %34, %cst_23 {dimension_numbers = #tpu.dot_dimension_numbers<[1], [0], [0], [1], [0, 0, 1, 1], [], []>} : vector<32x32xf32>, vector<32x8xf32>, vector<32x8xf32> -> vector<32x8xf32>
    %50 = vector.extract_strided_slice %4 {offsets = [8, 0], sizes = [8, 32], strides = [1, 1]} : vector<32x32xf32> to vector<8x32xf32>
    %cst_24 = arith.constant dense<0.000000e+00> : vector<32x32xf32>
    %51 = tpu.matmul %49, %50, %cst_24 {dimension_numbers = #tpu.dot_dimension_numbers<[1], [0], [0], [1], [0, 0, 1, 1], [], []>} : vector<32x8xf32>, vector<8x32xf32>, vector<32x32xf32> -> vector<32x32xf32>
    %52 = arith.addf %31, %51 : vector<32x32xf32>
    %53 = vector.extract_strided_slice %9 {offsets = [0, 16], sizes = [32, 8], strides = [1, 1]} : vector<32x96xf32> to vector<32x8xf32>
    %54 = vector.extract_strided_slice %9 {offsets = [0, 48], sizes = [32, 8], strides = [1, 1]} : vector<32x96xf32> to vector<32x8xf32>
    %55 = vector.extract_strided_slice %9 {offsets = [0, 80], sizes = [32, 8], strides = [1, 1]} : vector<32x96xf32> to vector<32x8xf32>
    %cst_25 = arith.constant dense<0.000000e+00> : vector<32x32xf32>
    %56 = tpu.matmul %53, %54, %cst_25 {dimension_numbers = #tpu.dot_dimension_numbers<[1], [1], [0], [0], [0, 0, 1, 0], [], []>} : vector<32x8xf32>, vector<32x8xf32>, vector<32x32xf32> -> vector<32x32xf32>
    %cst_26 = arith.constant 0.353553385 : f32
    %57 = vector.broadcast %cst_26 : f32 to vector<32x32xf32>
    %58 = arith.mulf %56, %57 : vector<32x32xf32>
    %59 = arith.addf %58, %6 : vector<32x32xf32>
    %cst_27 = arith.constant dense<0xFF800000> : vector<32xf32>
    %60 = vector.multi_reduction <maximumf>, %59, %cst_27 [1] : vector<32x32xf32> to vector<32xf32>
    %61 = vector.shape_cast %60 : vector<32xf32> to vector<32x1xf32>
    %62 = vector.broadcast %61 : vector<32x1xf32> to vector<32x32xf32>
    %63 = arith.subf %59, %62 : vector<32x32xf32>
    %64 = math.exp %63 : vector<32x32xf32>
    %cst_28 = arith.constant dense<0.000000e+00> : vector<32xf32>
    %65 = vector.multi_reduction <add>, %64, %cst_28 [1] : vector<32x32xf32> to vector<32xf32>
    %66 = vector.shape_cast %65 : vector<32xf32> to vector<32x1xf32>
    %67 = tpu.reciprocal %66 {approx = true} : vector<32x1xf32> -> vector<32x1xf32>
    %68 = vector.broadcast %67 : vector<32x1xf32> to vector<32x32xf32>
    %69 = arith.mulf %64, %68 : vector<32x32xf32>
    %cst_29 = arith.constant dense<0.000000e+00> : vector<32x8xf32>
    %70 = tpu.matmul %69, %55, %cst_29 {dimension_numbers = #tpu.dot_dimension_numbers<[1], [0], [0], [1], [0, 0, 1, 1], [], []>} : vector<32x32xf32>, vector<32x8xf32>, vector<32x8xf32> -> vector<32x8xf32>
    %71 = vector.extract_strided_slice %4 {offsets = [16, 0], sizes = [8, 32], strides = [1, 1]} : vector<32x32xf32> to vector<8x32xf32>
    %cst_30 = arith.constant dense<0.000000e+00> : vector<32x32xf32>
    %72 = tpu.matmul %70, %71, %cst_30 {dimension_numbers = #tpu.dot_dimension_numbers<[1], [0], [0], [1], [0, 0, 1, 1], [], []>} : vector<32x8xf32>, vector<8x32xf32>, vector<32x32xf32> -> vector<32x32xf32>
    %73 = arith.addf %52, %72 : vector<32x32xf32>
    %74 = vector.extract_strided_slice %9 {offsets = [0, 24], sizes = [32, 8], strides = [1, 1]} : vector<32x96xf32> to vector<32x8xf32>
    %75 = vector.extract_strided_slice %9 {offsets = [0, 56], sizes = [32, 8], strides = [1, 1]} : vector<32x96xf32> to vector<32x8xf32>
    %76 = vector.extract_strided_slice %9 {offsets = [0, 88], sizes = [32, 8], strides = [1, 1]} : vector<32x96xf32> to vector<32x8xf32>
    %cst_31 = arith.constant dense<0.000000e+00> : vector<32x32xf32>
    %77 = tpu.matmul %74, %75, %cst_31 {dimension_numbers = #tpu.dot_dimension_numbers<[1], [1], [0], [0], [0, 0, 1, 0], [], []>} : vector<32x8xf32>, vector<32x8xf32>, vector<32x32xf32> -> vector<32x32xf32>
    %cst_32 = arith.constant 0.353553385 : f32
    %78 = vector.broadcast %cst_32 : f32 to vector<32x32xf32>
    %79 = arith.mulf %77, %78 : vector<32x32xf32>
    %80 = arith.addf %79, %6 : vector<32x32xf32>
    %cst_33 = arith.constant dense<0xFF800000> : vector<32xf32>
    %81 = vector.multi_reduction <maximumf>, %80, %cst_33 [1] : vector<32x32xf32> to vector<32xf32>
    %82 = vector.shape_cast %81 : vector<32xf32> to vector<32x1xf32>
    %83 = vector.broadcast %82 : vector<32x1xf32> to vector<32x32xf32>
    %84 = arith.subf %80, %83 : vector<32x32xf32>
    %85 = math.exp %84 : vector<32x32xf32>
    %cst_34 = arith.constant dense<0.000000e+00> : vector<32xf32>
    %86 = vector.multi_reduction <add>, %85, %cst_34 [1] : vector<32x32xf32> to vector<32xf32>
    %87 = vector.shape_cast %86 : vector<32xf32> to vector<32x1xf32>
    %88 = tpu.reciprocal %87 {approx = true} : vector<32x1xf32> -> vector<32x1xf32>
    %89 = vector.broadcast %88 : vector<32x1xf32> to vector<32x32xf32>
    %90 = arith.mulf %85, %89 : vector<32x32xf32>
    %cst_35 = arith.constant dense<0.000000e+00> : vector<32x8xf32>
    %91 = tpu.matmul %90, %76, %cst_35 {dimension_numbers = #tpu.dot_dimension_numbers<[1], [0], [0], [1], [0, 0, 1, 1], [], []>} : vector<32x32xf32>, vector<32x8xf32>, vector<32x8xf32> -> vector<32x8xf32>
    %92 = vector.extract_strided_slice %4 {offsets = [24, 0], sizes = [8, 32], strides = [1, 1]} : vector<32x32xf32> to vector<8x32xf32>
    %cst_36 = arith.constant dense<0.000000e+00> : vector<32x32xf32>
    %93 = tpu.matmul %91, %92, %cst_36 {dimension_numbers = #tpu.dot_dimension_numbers<[1], [0], [0], [1], [0, 0, 1, 1], [], []>} : vector<32x8xf32>, vector<8x32xf32>, vector<32x32xf32> -> vector<32x32xf32>
    %94 = arith.addf %73, %93 : vector<32x32xf32>
    %95 = arith.addf %1, %94 : vector<32x32xf32>
    %96 = vector.broadcast %5 : vector<1x32xf32> to vector<32x32xf32>
    %97 = arith.addf %95, %96 : vector<32x32xf32>
    %c0_37 = arith.constant 0 : index
    %c0_38 = arith.constant 0 : index
    %98 = vector.load %arg14[%c0_37, %c0_38] : memref<32x32xf32, #tpu.memory_space<vmem>>, vector<32x32xf32>
    %cst_39 = arith.constant dense<0.000000e+00> : vector<32x32xf32>
    %99 = tpu.matmul %98, %97, %cst_39 {dimension_numbers = #tpu.dot_dimension_numbers<[1], [0], [0], [1], [0, 0, 1, 1], [], []>} : vector<32x32xf32>, vector<32x32xf32>, vector<32x32xf32> -> vector<32x32xf32>
    %c0_40 = arith.constant 0 : index
    %c0_41 = arith.constant 0 : index
    %100 = vector.load %arg15[%c0_40, %c0_41] : memref<32x32xf32, #tpu.memory_space<vmem>>, vector<32x32xf32>
    %cst_42 = arith.constant dense<0.000000e+00> : vector<32x32xf32>
    %101 = tpu.matmul %100, %97, %cst_42 {dimension_numbers = #tpu.dot_dimension_numbers<[1], [0], [0], [1], [0, 0, 1, 1], [], []>} : vector<32x32xf32>, vector<32x32xf32>, vector<32x32xf32> -> vector<32x32xf32>
    %102 = tpu.concatenate %99, %97, %101 in 1 : vector<32x32xf32>, vector<32x32xf32>, vector<32x32xf32> -> vector<32x96xf32>
    %c0_43 = arith.constant 0 : index
    %c0_44 = arith.constant 0 : index
    %103 = vector.load %arg6[%c0_43, %c0_44] : memref<96x32xf32, #tpu.memory_space<vmem>>, vector<96x32xf32>
    %cst_45 = arith.constant dense<0.000000e+00> : vector<32x32xf32>
    %104 = tpu.matmul %102, %103, %cst_45 {dimension_numbers = #tpu.dot_dimension_numbers<[1], [0], [0], [1], [0, 0, 1, 1], [], []>} : vector<32x96xf32>, vector<96x32xf32>, vector<32x32xf32> -> vector<32x32xf32>
    %c0_46 = arith.constant 0 : index
    %c0_47 = arith.constant 0 : index
    %105 = vector.load %arg7[%c0_46, %c0_47] : memref<1x32xf32, #tpu.memory_space<vmem>>, vector<1x32xf32>
    %106 = vector.broadcast %105 : vector<1x32xf32> to vector<32x32xf32>
    %107 = arith.addf %104, %106 : vector<32x32xf32>
    %cst_48 = arith.constant 0.000000e+00 : f32
    %108 = vector.broadcast %cst_48 : f32 to vector<32x32xf32>
    %109 = arith.cmpf ogt, %107, %108 : vector<32x32xf32>
    %110 = math.exp %107 : vector<32x32xf32>
    %cst_49 = arith.constant 1.000000e+00 : f32
    %111 = vector.broadcast %cst_49 : f32 to vector<32x32xf32>
    %112 = arith.subf %110, %111 : vector<32x32xf32>
    %113 = arith.select %109, %107, %112 : vector<32x32xi1>, vector<32x32xf32>
    %c0_50 = arith.constant 0 : index
    %c0_51 = arith.constant 0 : index
    %114 = vector.load %arg18[%c0_50, %c0_51] : memref<16x32xf32, #tpu.memory_space<vmem>>, vector<16x32xf32>
    %cst_52 = arith.constant dense<0.000000e+00> : vector<16x32xf32>
    %115 = tpu.matmul %114, %113, %cst_52 {dimension_numbers = #tpu.dot_dimension_numbers<[1], [0], [0], [1], [0, 0, 1, 1], [], []>} : vector<16x32xf32>, vector<32x32xf32>, vector<16x32xf32> -> vector<16x32xf32>
    %c0_53 = arith.constant 0 : index
    %c0_54 = arith.constant 0 : index
    %116 = vector.load %arg19[%c0_53, %c0_54] : memref<16x32xf32, #tpu.memory_space<vmem>>, vector<16x32xf32>
    %cst_55 = arith.constant dense<0.000000e+00> : vector<16x32xf32>
    %117 = tpu.matmul %116, %113, %cst_55 {dimension_numbers = #tpu.dot_dimension_numbers<[1], [0], [0], [1], [0, 0, 1, 1], [], []>} : vector<16x32xf32>, vector<32x32xf32>, vector<16x32xf32> -> vector<16x32xf32>
    %c0_56 = arith.constant 0 : index
    %c0_57 = arith.constant 0 : index
    %118 = vector.load %arg20[%c0_56, %c0_57] : memref<16x32xf32, #tpu.memory_space<vmem>>, vector<16x32xf32>
    %cst_58 = arith.constant dense<0.000000e+00> : vector<16x32xf32>
    %119 = tpu.matmul %118, %113, %cst_58 {dimension_numbers = #tpu.dot_dimension_numbers<[1], [0], [0], [1], [0, 0, 1, 1], [], []>} : vector<16x32xf32>, vector<32x32xf32>, vector<16x32xf32> -> vector<16x32xf32>
    %c0_59 = arith.constant 0 : index
    %c0_60 = arith.constant 0 : index
    %120 = vector.load %arg21[%c0_59, %c0_60] : memref<16x1xf32, #tpu.memory_space<vmem>>, vector<16x1xf32>
    %121 = vector.broadcast %120 : vector<16x1xf32> to vector<16x32xf32>
    %122 = arith.addf %119, %121 : vector<16x32xf32>
    %123 = arith.maximumf %115, %117 : vector<16x32xf32>
    %124 = arith.maximumf %123, %122 : vector<16x32xf32>
    %c0_61 = arith.constant 0 : index
    %c0_62 = arith.constant 0 : index
    %125 = vector.load %arg8[%c0_61, %c0_62] : memref<32x96xf32, #tpu.memory_space<vmem>>, vector<32x96xf32>
    %c0_63 = arith.constant 0 : index
    %c0_64 = arith.constant 0 : index
    %126 = vector.load %arg9[%c0_63, %c0_64] : memref<1x96xf32, #tpu.memory_space<vmem>>, vector<1x96xf32>
    %c0_65 = arith.constant 0 : index
    %c0_66 = arith.constant 0 : index
    %127 = vector.load %arg10[%c0_65, %c0_66] : memref<32x32xf32, #tpu.memory_space<vmem>>, vector<32x32xf32>
    %c0_67 = arith.constant 0 : index
    %c0_68 = arith.constant 0 : index
    %128 = vector.load %arg11[%c0_67, %c0_68] : memref<1x32xf32, #tpu.memory_space<vmem>>, vector<1x32xf32>
    %c0_69 = arith.constant 0 : index
    %c0_70 = arith.constant 0 : index
    %129 = vector.load %arg17[%c0_69, %c0_70] : memref<16x16xf32, #tpu.memory_space<vmem>>, vector<16x16xf32>
    %cst_71 = arith.constant dense<0.000000e+00> : vector<16x96xf32>
    %130 = tpu.matmul %124, %125, %cst_71 {dimension_numbers = #tpu.dot_dimension_numbers<[1], [0], [0], [1], [0, 0, 1, 1], [], []>} : vector<16x32xf32>, vector<32x96xf32>, vector<16x96xf32> -> vector<16x96xf32>
    %131 = vector.broadcast %126 : vector<1x96xf32> to vector<16x96xf32>
    %132 = arith.addf %130, %131 : vector<16x96xf32>
    %cst_72 = arith.constant 0.000000e+00 : f32
    %133 = vector.broadcast %cst_72 : f32 to vector<16x32xf32>
    %134 = vector.extract_strided_slice %132 {offsets = [0, 0], sizes = [16, 8], strides = [1, 1]} : vector<16x96xf32> to vector<16x8xf32>
    %135 = vector.extract_strided_slice %132 {offsets = [0, 32], sizes = [16, 8], strides = [1, 1]} : vector<16x96xf32> to vector<16x8xf32>
    %136 = vector.extract_strided_slice %132 {offsets = [0, 64], sizes = [16, 8], strides = [1, 1]} : vector<16x96xf32> to vector<16x8xf32>
    %cst_73 = arith.constant dense<0.000000e+00> : vector<16x16xf32>
    %137 = tpu.matmul %134, %135, %cst_73 {dimension_numbers = #tpu.dot_dimension_numbers<[1], [1], [0], [0], [0, 0, 1, 0], [], []>} : vector<16x8xf32>, vector<16x8xf32>, vector<16x16xf32> -> vector<16x16xf32>
    %cst_74 = arith.constant 0.353553385 : f32
    %138 = vector.broadcast %cst_74 : f32 to vector<16x16xf32>
    %139 = arith.mulf %137, %138 : vector<16x16xf32>
    %140 = arith.addf %139, %129 : vector<16x16xf32>
    %cst_75 = arith.constant dense<0xFF800000> : vector<16xf32>
    %141 = vector.multi_reduction <maximumf>, %140, %cst_75 [1] : vector<16x16xf32> to vector<16xf32>
    %142 = vector.shape_cast %141 : vector<16xf32> to vector<16x1xf32>
    %143 = vector.broadcast %142 : vector<16x1xf32> to vector<16x16xf32>
    %144 = arith.subf %140, %143 : vector<16x16xf32>
    %145 = math.exp %144 : vector<16x16xf32>
    %cst_76 = arith.constant dense<0.000000e+00> : vector<16xf32>
    %146 = vector.multi_reduction <add>, %145, %cst_76 [1] : vector<16x16xf32> to vector<16xf32>
    %147 = vector.shape_cast %146 : vector<16xf32> to vector<16x1xf32>
    %148 = tpu.reciprocal %147 {approx = true} : vector<16x1xf32> -> vector<16x1xf32>
    %149 = vector.broadcast %148 : vector<16x1xf32> to vector<16x16xf32>
    %150 = arith.mulf %145, %149 : vector<16x16xf32>
    %cst_77 = arith.constant dense<0.000000e+00> : vector<16x8xf32>
    %151 = tpu.matmul %150, %136, %cst_77 {dimension_numbers = #tpu.dot_dimension_numbers<[1], [0], [0], [1], [0, 0, 1, 1], [], []>} : vector<16x16xf32>, vector<16x8xf32>, vector<16x8xf32> -> vector<16x8xf32>
    %152 = vector.extract_strided_slice %127 {offsets = [0, 0], sizes = [8, 32], strides = [1, 1]} : vector<32x32xf32> to vector<8x32xf32>
    %cst_78 = arith.constant dense<0.000000e+00> : vector<16x32xf32>
    %153 = tpu.matmul %151, %152, %cst_78 {dimension_numbers = #tpu.dot_dimension_numbers<[1], [0], [0], [1], [0, 0, 1, 1], [], []>} : vector<16x8xf32>, vector<8x32xf32>, vector<16x32xf32> -> vector<16x32xf32>
    %154 = arith.addf %133, %153 : vector<16x32xf32>
    %155 = vector.extract_strided_slice %132 {offsets = [0, 8], sizes = [16, 8], strides = [1, 1]} : vector<16x96xf32> to vector<16x8xf32>
    %156 = vector.extract_strided_slice %132 {offsets = [0, 40], sizes = [16, 8], strides = [1, 1]} : vector<16x96xf32> to vector<16x8xf32>
    %157 = vector.extract_strided_slice %132 {offsets = [0, 72], sizes = [16, 8], strides = [1, 1]} : vector<16x96xf32> to vector<16x8xf32>
    %cst_79 = arith.constant dense<0.000000e+00> : vector<16x16xf32>
    %158 = tpu.matmul %155, %156, %cst_79 {dimension_numbers = #tpu.dot_dimension_numbers<[1], [1], [0], [0], [0, 0, 1, 0], [], []>} : vector<16x8xf32>, vector<16x8xf32>, vector<16x16xf32> -> vector<16x16xf32>
    %cst_80 = arith.constant 0.353553385 : f32
    %159 = vector.broadcast %cst_80 : f32 to vector<16x16xf32>
    %160 = arith.mulf %158, %159 : vector<16x16xf32>
    %161 = arith.addf %160, %129 : vector<16x16xf32>
    %cst_81 = arith.constant dense<0xFF800000> : vector<16xf32>
    %162 = vector.multi_reduction <maximumf>, %161, %cst_81 [1] : vector<16x16xf32> to vector<16xf32>
    %163 = vector.shape_cast %162 : vector<16xf32> to vector<16x1xf32>
    %164 = vector.broadcast %163 : vector<16x1xf32> to vector<16x16xf32>
    %165 = arith.subf %161, %164 : vector<16x16xf32>
    %166 = math.exp %165 : vector<16x16xf32>
    %cst_82 = arith.constant dense<0.000000e+00> : vector<16xf32>
    %167 = vector.multi_reduction <add>, %166, %cst_82 [1] : vector<16x16xf32> to vector<16xf32>
    %168 = vector.shape_cast %167 : vector<16xf32> to vector<16x1xf32>
    %169 = tpu.reciprocal %168 {approx = true} : vector<16x1xf32> -> vector<16x1xf32>
    %170 = vector.broadcast %169 : vector<16x1xf32> to vector<16x16xf32>
    %171 = arith.mulf %166, %170 : vector<16x16xf32>
    %cst_83 = arith.constant dense<0.000000e+00> : vector<16x8xf32>
    %172 = tpu.matmul %171, %157, %cst_83 {dimension_numbers = #tpu.dot_dimension_numbers<[1], [0], [0], [1], [0, 0, 1, 1], [], []>} : vector<16x16xf32>, vector<16x8xf32>, vector<16x8xf32> -> vector<16x8xf32>
    %173 = vector.extract_strided_slice %127 {offsets = [8, 0], sizes = [8, 32], strides = [1, 1]} : vector<32x32xf32> to vector<8x32xf32>
    %cst_84 = arith.constant dense<0.000000e+00> : vector<16x32xf32>
    %174 = tpu.matmul %172, %173, %cst_84 {dimension_numbers = #tpu.dot_dimension_numbers<[1], [0], [0], [1], [0, 0, 1, 1], [], []>} : vector<16x8xf32>, vector<8x32xf32>, vector<16x32xf32> -> vector<16x32xf32>
    %175 = arith.addf %154, %174 : vector<16x32xf32>
    %176 = vector.extract_strided_slice %132 {offsets = [0, 16], sizes = [16, 8], strides = [1, 1]} : vector<16x96xf32> to vector<16x8xf32>
    %177 = vector.extract_strided_slice %132 {offsets = [0, 48], sizes = [16, 8], strides = [1, 1]} : vector<16x96xf32> to vector<16x8xf32>
    %178 = vector.extract_strided_slice %132 {offsets = [0, 80], sizes = [16, 8], strides = [1, 1]} : vector<16x96xf32> to vector<16x8xf32>
    %cst_85 = arith.constant dense<0.000000e+00> : vector<16x16xf32>
    %179 = tpu.matmul %176, %177, %cst_85 {dimension_numbers = #tpu.dot_dimension_numbers<[1], [1], [0], [0], [0, 0, 1, 0], [], []>} : vector<16x8xf32>, vector<16x8xf32>, vector<16x16xf32> -> vector<16x16xf32>
    %cst_86 = arith.constant 0.353553385 : f32
    %180 = vector.broadcast %cst_86 : f32 to vector<16x16xf32>
    %181 = arith.mulf %179, %180 : vector<16x16xf32>
    %182 = arith.addf %181, %129 : vector<16x16xf32>
    %cst_87 = arith.constant dense<0xFF800000> : vector<16xf32>
    %183 = vector.multi_reduction <maximumf>, %182, %cst_87 [1] : vector<16x16xf32> to vector<16xf32>
    %184 = vector.shape_cast %183 : vector<16xf32> to vector<16x1xf32>
    %185 = vector.broadcast %184 : vector<16x1xf32> to vector<16x16xf32>
    %186 = arith.subf %182, %185 : vector<16x16xf32>
    %187 = math.exp %186 : vector<16x16xf32>
    %cst_88 = arith.constant dense<0.000000e+00> : vector<16xf32>
    %188 = vector.multi_reduction <add>, %187, %cst_88 [1] : vector<16x16xf32> to vector<16xf32>
    %189 = vector.shape_cast %188 : vector<16xf32> to vector<16x1xf32>
    %190 = tpu.reciprocal %189 {approx = true} : vector<16x1xf32> -> vector<16x1xf32>
    %191 = vector.broadcast %190 : vector<16x1xf32> to vector<16x16xf32>
    %192 = arith.mulf %187, %191 : vector<16x16xf32>
    %cst_89 = arith.constant dense<0.000000e+00> : vector<16x8xf32>
    %193 = tpu.matmul %192, %178, %cst_89 {dimension_numbers = #tpu.dot_dimension_numbers<[1], [0], [0], [1], [0, 0, 1, 1], [], []>} : vector<16x16xf32>, vector<16x8xf32>, vector<16x8xf32> -> vector<16x8xf32>
    %194 = vector.extract_strided_slice %127 {offsets = [16, 0], sizes = [8, 32], strides = [1, 1]} : vector<32x32xf32> to vector<8x32xf32>
    %cst_90 = arith.constant dense<0.000000e+00> : vector<16x32xf32>
    %195 = tpu.matmul %193, %194, %cst_90 {dimension_numbers = #tpu.dot_dimension_numbers<[1], [0], [0], [1], [0, 0, 1, 1], [], []>} : vector<16x8xf32>, vector<8x32xf32>, vector<16x32xf32> -> vector<16x32xf32>
    %196 = arith.addf %175, %195 : vector<16x32xf32>
    %197 = vector.extract_strided_slice %132 {offsets = [0, 24], sizes = [16, 8], strides = [1, 1]} : vector<16x96xf32> to vector<16x8xf32>
    %198 = vector.extract_strided_slice %132 {offsets = [0, 56], sizes = [16, 8], strides = [1, 1]} : vector<16x96xf32> to vector<16x8xf32>
    %199 = vector.extract_strided_slice %132 {offsets = [0, 88], sizes = [16, 8], strides = [1, 1]} : vector<16x96xf32> to vector<16x8xf32>
    %cst_91 = arith.constant dense<0.000000e+00> : vector<16x16xf32>
    %200 = tpu.matmul %197, %198, %cst_91 {dimension_numbers = #tpu.dot_dimension_numbers<[1], [1], [0], [0], [0, 0, 1, 0], [], []>} : vector<16x8xf32>, vector<16x8xf32>, vector<16x16xf32> -> vector<16x16xf32>
    %cst_92 = arith.constant 0.353553385 : f32
    %201 = vector.broadcast %cst_92 : f32 to vector<16x16xf32>
    %202 = arith.mulf %200, %201 : vector<16x16xf32>
    %203 = arith.addf %202, %129 : vector<16x16xf32>
    %cst_93 = arith.constant dense<0xFF800000> : vector<16xf32>
    %204 = vector.multi_reduction <maximumf>, %203, %cst_93 [1] : vector<16x16xf32> to vector<16xf32>
    %205 = vector.shape_cast %204 : vector<16xf32> to vector<16x1xf32>
    %206 = vector.broadcast %205 : vector<16x1xf32> to vector<16x16xf32>
    %207 = arith.subf %203, %206 : vector<16x16xf32>
    %208 = math.exp %207 : vector<16x16xf32>
    %cst_94 = arith.constant dense<0.000000e+00> : vector<16xf32>
    %209 = vector.multi_reduction <add>, %208, %cst_94 [1] : vector<16x16xf32> to vector<16xf32>
    %210 = vector.shape_cast %209 : vector<16xf32> to vector<16x1xf32>
    %211 = tpu.reciprocal %210 {approx = true} : vector<16x1xf32> -> vector<16x1xf32>
    %212 = vector.broadcast %211 : vector<16x1xf32> to vector<16x16xf32>
    %213 = arith.mulf %208, %212 : vector<16x16xf32>
    %cst_95 = arith.constant dense<0.000000e+00> : vector<16x8xf32>
    %214 = tpu.matmul %213, %199, %cst_95 {dimension_numbers = #tpu.dot_dimension_numbers<[1], [0], [0], [1], [0, 0, 1, 1], [], []>} : vector<16x16xf32>, vector<16x8xf32>, vector<16x8xf32> -> vector<16x8xf32>
    %215 = vector.extract_strided_slice %127 {offsets = [24, 0], sizes = [8, 32], strides = [1, 1]} : vector<32x32xf32> to vector<8x32xf32>
    %cst_96 = arith.constant dense<0.000000e+00> : vector<16x32xf32>
    %216 = tpu.matmul %214, %215, %cst_96 {dimension_numbers = #tpu.dot_dimension_numbers<[1], [0], [0], [1], [0, 0, 1, 1], [], []>} : vector<16x8xf32>, vector<8x32xf32>, vector<16x32xf32> -> vector<16x32xf32>
    %217 = arith.addf %196, %216 : vector<16x32xf32>
    %218 = arith.addf %124, %217 : vector<16x32xf32>
    %219 = vector.broadcast %128 : vector<1x32xf32> to vector<16x32xf32>
    %220 = arith.addf %218, %219 : vector<16x32xf32>
    %cst_97 = arith.constant dense<0.000000e+00> : vector<16xf32>
    %221 = vector.multi_reduction <add>, %220, %cst_97 [1] : vector<16x32xf32> to vector<16xf32>
    %222 = vector.shape_cast %221 : vector<16xf32> to vector<16x1xf32>
    %cst_98 = arith.constant 3.200000e+01 : f32
    %223 = vector.broadcast %cst_98 : f32 to vector<16x1xf32>
    %224 = arith.divf %222, %223 : vector<16x1xf32>
    %225 = vector.broadcast %224 : vector<16x1xf32> to vector<16x32xf32>
    %226 = arith.subf %220, %225 : vector<16x32xf32>
    %227 = arith.mulf %226, %226 : vector<16x32xf32>
    %cst_99 = arith.constant dense<0.000000e+00> : vector<16xf32>
    %228 = vector.multi_reduction <add>, %227, %cst_99 [1] : vector<16x32xf32> to vector<16xf32>
    %229 = vector.shape_cast %228 : vector<16xf32> to vector<16x1xf32>
    %cst_100 = arith.constant 3.200000e+01 : f32
    %230 = vector.broadcast %cst_100 : f32 to vector<16x1xf32>
    %231 = arith.divf %229, %230 : vector<16x1xf32>
    %232 = vector.broadcast %224 : vector<16x1xf32> to vector<16x32xf32>
    %233 = arith.subf %220, %232 : vector<16x32xf32>
    %cst_101 = arith.constant 9.99999974E-6 : f32
    %234 = vector.broadcast %cst_101 : f32 to vector<16x1xf32>
    %235 = arith.addf %231, %234 : vector<16x1xf32>
    %236 = math.rsqrt %235 : vector<16x1xf32>
    %237 = vector.broadcast %236 : vector<16x1xf32> to vector<16x32xf32>
    %238 = arith.mulf %233, %237 : vector<16x32xf32>
    %c0_102 = arith.constant 0 : index
    %c0_103 = arith.constant 0 : index
    %239 = vector.load %arg12[%c0_102, %c0_103] : memref<1x32xf32, #tpu.memory_space<vmem>>, vector<1x32xf32>
    %240 = vector.broadcast %239 : vector<1x32xf32> to vector<16x32xf32>
    %241 = arith.mulf %238, %240 : vector<16x32xf32>
    %c0_104 = arith.constant 0 : index
    %c0_105 = arith.constant 0 : index
    %242 = vector.load %arg13[%c0_104, %c0_105] : memref<1x32xf32, #tpu.memory_space<vmem>>, vector<1x32xf32>
    %243 = vector.broadcast %242 : vector<1x32xf32> to vector<16x32xf32>
    %244 = arith.addf %241, %243 : vector<16x32xf32>
    %c0_106 = arith.constant 0 : index
    %c0_107 = arith.constant 0 : index
    %245 = vector.load %arg22[%c0_106, %c0_107] : memref<16x16xf32, #tpu.memory_space<vmem>>, vector<16x16xf32>
    %cst_108 = arith.constant dense<0.000000e+00> : vector<16x32xf32>
    %246 = tpu.matmul %245, %244, %cst_108 {dimension_numbers = #tpu.dot_dimension_numbers<[1], [0], [0], [1], [0, 0, 1, 1], [], []>} : vector<16x16xf32>, vector<16x32xf32>, vector<16x32xf32> -> vector<16x32xf32>
    %c0_109 = arith.constant 0 : index
    %c0_110 = arith.constant 0 : index
    %247 = vector.load %arg23[%c0_109, %c0_110] : memref<32x32xf32, #tpu.memory_space<vmem>>, vector<32x32xf32>
    %cst_111 = arith.constant dense<0.000000e+00> : vector<16x32xf32>
    %248 = tpu.matmul %246, %247, %cst_111 {dimension_numbers = #tpu.dot_dimension_numbers<[1], [0], [0], [1], [0, 0, 1, 1], [], []>} : vector<16x32xf32>, vector<32x32xf32>, vector<16x32xf32> -> vector<16x32xf32>
    %c0_112 = arith.constant 0 : index
    %c0_113 = arith.constant 0 : index
    %249 = vector.load %arg24[%c0_112, %c0_113] : memref<1x32xf32, #tpu.memory_space<vmem>>, vector<1x32xf32>
    %250 = vector.broadcast %249 : vector<1x32xf32> to vector<16x32xf32>
    %251 = arith.addf %248, %250 : vector<16x32xf32>
    %cst_114 = arith.constant 0.000000e+00 : f32
    %252 = vector.broadcast %cst_114 : f32 to vector<16x32xf32>
    %253 = arith.maximumf %251, %252 : vector<16x32xf32>
    %cst_115 = arith.constant 5.000000e-01 : f32
    %254 = vector.broadcast %cst_115 : f32 to vector<16x32xf32>
    %255 = arith.mulf %254, %244 : vector<16x32xf32>
    %cst_116 = arith.constant 5.000000e-01 : f32
    %256 = vector.broadcast %cst_116 : f32 to vector<16x32xf32>
    %257 = arith.mulf %256, %253 : vector<16x32xf32>
    %258 = arith.addf %255, %257 : vector<16x32xf32>
    %c0_117 = arith.constant 0 : index
    %c0_118 = arith.constant 0 : index
    %c0_119 = arith.constant 0 : index
    %259 = vector.load %arg25[%c0_117, %c0_118, %c0_119] : memref<1x16x32xf32, #tpu.memory_space<vmem>>, vector<1x16x32xf32>
    %260 = vector.shape_cast %259 : vector<1x16x32xf32> to vector<16x32xf32>
    %261 = vector.shape_cast %258 : vector<16x32xf32> to vector<1x16x32xf32>
    tpu.vector_store %arg25[%c0_117, %c0_118, %c0_119], %261 {strides = array<i32>} : memref<1x16x32xf32, #tpu.memory_space<vmem>>, vector<1x16x32xf32>,
    return
  }
  func.func @transform_0(%arg0: i32) -> (i32, i32, i32) {
    %c0_i32 = arith.constant 0 : i32
    %c0_i32_0 = arith.constant 0 : i32
    %c0_i32_1 = arith.constant 0 : i32
    return %arg0, %c0_i32, %c0_i32_0 : i32, i32, i32
  }
  func.func @transform_1(%arg0: i32) -> (i32, i32) {
    %c0_i32 = arith.constant 0 : i32
    %c0_i32_0 = arith.constant 0 : i32
    %c0_i32_1 = arith.constant 0 : i32
    return %c0_i32, %c0_i32_0 : i32, i32
  }
  func.func @transform_2(%arg0: i32) -> (i32, i32) {
    %c0_i32 = arith.constant 0 : i32
    %c0_i32_0 = arith.constant 0 : i32
    %c0_i32_1 = arith.constant 0 : i32
    return %c0_i32, %c0_i32_0 : i32, i32
  }
  func.func @transform_3(%arg0: i32) -> (i32, i32) {
    %c0_i32 = arith.constant 0 : i32
    %c0_i32_0 = arith.constant 0 : i32
    %c0_i32_1 = arith.constant 0 : i32
    return %c0_i32, %c0_i32_0 : i32, i32
  }
  func.func @transform_4(%arg0: i32) -> (i32, i32) {
    %c0_i32 = arith.constant 0 : i32
    %c0_i32_0 = arith.constant 0 : i32
    %c0_i32_1 = arith.constant 0 : i32
    return %c0_i32, %c0_i32_0 : i32, i32
  }
  func.func @transform_5(%arg0: i32) -> (i32, i32) {
    %c0_i32 = arith.constant 0 : i32
    %c0_i32_0 = arith.constant 0 : i32
    %c0_i32_1 = arith.constant 0 : i32
    return %c0_i32, %c0_i32_0 : i32, i32
  }
  func.func @transform_6(%arg0: i32) -> (i32, i32) {
    %c0_i32 = arith.constant 0 : i32
    %c0_i32_0 = arith.constant 0 : i32
    %c0_i32_1 = arith.constant 0 : i32
    return %c0_i32, %c0_i32_0 : i32, i32
  }
  func.func @transform_7(%arg0: i32) -> (i32, i32) {
    %c0_i32 = arith.constant 0 : i32
    %c0_i32_0 = arith.constant 0 : i32
    %c0_i32_1 = arith.constant 0 : i32
    return %c0_i32, %c0_i32_0 : i32, i32
  }
  func.func @transform_8(%arg0: i32) -> (i32, i32) {
    %c0_i32 = arith.constant 0 : i32
    %c0_i32_0 = arith.constant 0 : i32
    %c0_i32_1 = arith.constant 0 : i32
    return %c0_i32, %c0_i32_0 : i32, i32
  }
  func.func @transform_9(%arg0: i32) -> (i32, i32) {
    %c0_i32 = arith.constant 0 : i32
    %c0_i32_0 = arith.constant 0 : i32
    %c0_i32_1 = arith.constant 0 : i32
    return %c0_i32, %c0_i32_0 : i32, i32
  }
  func.func @transform_10(%arg0: i32) -> (i32, i32) {
    %c0_i32 = arith.constant 0 : i32
    %c0_i32_0 = arith.constant 0 : i32
    %c0_i32_1 = arith.constant 0 : i32
    return %c0_i32, %c0_i32_0 : i32, i32
  }
  func.func @transform_11(%arg0: i32) -> (i32, i32) {
    %c0_i32 = arith.constant 0 : i32
    %c0_i32_0 = arith.constant 0 : i32
    %c0_i32_1 = arith.constant 0 : i32
    return %c0_i32, %c0_i32_0 : i32, i32
  }
  func.func @transform_12(%arg0: i32) -> (i32, i32) {
    %c0_i32 = arith.constant 0 : i32
    %c0_i32_0 = arith.constant 0 : i32
    %c0_i32_1 = arith.constant 0 : i32
    return %c0_i32, %c0_i32_0 : i32, i32
  }
  func.func @transform_13(%arg0: i32) -> (i32, i32) {
    %c0_i32 = arith.constant 0 : i32
    %c0_i32_0 = arith.constant 0 : i32
    %c0_i32_1 = arith.constant 0 : i32
    return %c0_i32, %c0_i32_0 : i32, i32
  }
  func.func @transform_14(%arg0: i32) -> (i32, i32) {
    %c0_i32 = arith.constant 0 : i32
    %c0_i32_0 = arith.constant 0 : i32
    %c0_i32_1 = arith.constant 0 : i32
    return %c0_i32, %c0_i32_0 : i32, i32
  }
  func.func @transform_15(%arg0: i32) -> (i32, i32) {
    %c0_i32 = arith.constant 0 : i32
    %c0_i32_0 = arith.constant 0 : i32
    %c0_i32_1 = arith.constant 0 : i32
    return %c0_i32, %c0_i32_0 : i32, i32
  }
  func.func @transform_16(%arg0: i32) -> (i32, i32) {
    %c0_i32 = arith.constant 0 : i32
    %c0_i32_0 = arith.constant 0 : i32
    %c0_i32_1 = arith.constant 0 : i32
    return %c0_i32, %c0_i32_0 : i32, i32
  }
  func.func @transform_17(%arg0: i32) -> (i32, i32) {
    %c0_i32 = arith.constant 0 : i32
    %c0_i32_0 = arith.constant 0 : i32
    %c0_i32_1 = arith.constant 0 : i32
    return %c0_i32, %c0_i32_0 : i32, i32
  }
  func.func @transform_18(%arg0: i32) -> (i32, i32) {
    %c0_i32 = arith.constant 0 : i32
    %c0_i32_0 = arith.constant 0 : i32
    %c0_i32_1 = arith.constant 0 : i32
    return %c0_i32, %c0_i32_0 : i32, i32
  }
  func.func @transform_19(%arg0: i32) -> (i32, i32) {
    %c0_i32 = arith.constant 0 : i32
    %c0_i32_0 = arith.constant 0 : i32
    %c0_i32_1 = arith.constant 0 : i32
    return %c0_i32, %c0_i32_0 : i32, i32
  }
  func.func @transform_20(%arg0: i32) -> (i32, i32) {
    %c0_i32 = arith.constant 0 : i32
    %c0_i32_0 = arith.constant 0 : i32
    %c0_i32_1 = arith.constant 0 : i32
    return %c0_i32, %c0_i32_0 : i32, i32
  }
  func.func @transform_21(%arg0: i32) -> (i32, i32) {
    %c0_i32 = arith.constant 0 : i32
    %c0_i32_0 = arith.constant 0 : i32
    %c0_i32_1 = arith.constant 0 : i32
    return %c0_i32, %c0_i32_0 : i32, i32
  }
  func.func @transform_22(%arg0: i32) -> (i32, i32) {
    %c0_i32 = arith.constant 0 : i32
    %c0_i32_0 = arith.constant 0 : i32
    %c0_i32_1 = arith.constant 0 : i32
    return %c0_i32, %c0_i32_0 : i32, i32
  }
  func.func @transform_23(%arg0: i32) -> (i32, i32) {
    %c0_i32 = arith.constant 0 : i32
    %c0_i32_0 = arith.constant 0 : i32
    %c0_i32_1 = arith.constant 0 : i32
    return %c0_i32, %c0_i32_0 : i32, i32
  }
  func.func @transform_24(%arg0: i32) -> (i32, i32, i32) {
    %c0_i32 = arith.constant 0 : i32
    %c0_i32_0 = arith.constant 0 : i32
    %c0_i32_1 = arith.constant 0 : i32
    return %arg0, %c0_i32, %c0_i32_0 : i32, i32, i32
  }
}

</mosaic_0001>

<llo_original>
// kernel: tpu_custom_call.1
$region0: #{tpu_custom_call.1}
  #allocation0 [shape = 'u32[]', space=smem, size = 0x4, offset = 0x4, fixed_abs, tag = 'smem constant byte address 0x4 - core index']
  #allocation1 [shape = 'u32[144,128]{1,0:T(1,128)}', space=vmem, size = 0x12000, scoped, tag = 'internal scratch']
  %s0 = inlined_call_operand.vmem [shape: f32[2,32,32], index: 0, kind: input, shape index: {}]
  %s1 = inlined_call_operand.vmem [shape: f32[32,96], index: 1, kind: input, shape index: {}]
  %s2 = inlined_call_operand.hbm [shape: f32[1,96], index: 2, kind: input, shape index: {}]
  %s3 = inlined_call_operand.vmem [shape: f32[32,32], index: 3, kind: input, shape index: {}]
  %s4 = inlined_call_operand.hbm [shape: f32[1,32], index: 4, kind: input, shape index: {}]
  %s5 = inlined_call_operand.vmem [shape: f32[96,32], index: 5, kind: input, shape index: {}]
  %s6 = inlined_call_operand.hbm [shape: f32[1,32], index: 6, kind: input, shape index: {}]
  %s7 = inlined_call_operand.vmem [shape: f32[32,96], index: 7, kind: input, shape index: {}]
  %s8 = inlined_call_operand.hbm [shape: f32[1,96], index: 8, kind: input, shape index: {}]
  %s9 = inlined_call_operand.hbm [shape: f32[32,32], index: 9, kind: input, shape index: {}]
  %s10 = inlined_call_operand.hbm [shape: f32[1,32], index: 10, kind: input, shape index: {}]
  %s11 = inlined_call_operand.hbm [shape: f32[1,32], index: 11, kind: input, shape index: {}]
  %s12 = inlined_call_operand.hbm [shape: f32[1,32], index: 12, kind: input, shape index: {}]
  %s13 = inlined_call_operand.vmem [shape: f32[32,32], index: 13, kind: input, shape index: {}]
  %s14 = inlined_call_operand.hbm [shape: f32[32,32], index: 14, kind: input, shape index: {}]
  %s15 = inlined_call_operand.hbm [shape: f32[32,32], index: 15, kind: input, shape index: {}]
  %s16 = inlined_call_operand.hbm [shape: f32[16,16], index: 16, kind: input, shape index: {}]
  %s17 = inlined_call_operand.hbm [shape: f32[16,32], index: 17, kind: input, shape index: {}]
  %s18 = inlined_call_operand.hbm [shape: f32[16,32], index: 18, kind: input, shape index: {}]
  %s19 = inlined_call_operand.hbm [shape: f32[16,32], index: 19, kind: input, shape index: {}]
  %s20 = inlined_call_operand.vmem [shape: f32[16,1], index: 20, kind: input, shape index: {}]
  %s21 = inlined_call_operand.hbm [shape: f32[16,16], index: 21, kind: input, shape index: {}]
  %s22 = inlined_call_operand.vmem [shape: f32[32,32], index: 22, kind: input, shape index: {}]
  %s23 = inlined_call_operand.vmem [shape: f32[1,32], index: 23, kind: input, shape index: {}]
  %s24 = inlined_call_operand.hbm [shape: f32[2,16,32], index: 24, kind: output, shape index: {}]
  %s25 = sld [smem:[#allocation0]]
  $region189: #{tpu_custom_call.1} parent=0
    _
  %s27 = ssub.s32 1, %s25
  %s28 = scalar_select 0, %s27, %s25
  $region1: #{tpu_custom_call.1} parent=0
    #allocation2 [shape = 'u8[512]{0}', space=vmem, size = 0x400, scoped, tag = 'input window, operand 2, single buffered']
    #allocation3 [shape = 's32[2]{0}', space=sflag, size = 0x8, scoped, tag = 'scoped memory for tpu_custom_call.1']
    #allocation4 [shape = 's32[2]{0}', space=sflag, size = 0x8, scoped, tag = 'scoped memory for tpu_custom_call.1']
    #allocation5 [shape = 'u8[512]{0}', space=vmem, size = 0x400, scoped, tag = 'input window, operand 4, single buffered']
    #allocation6 [shape = 's32[1]{0}', space=sflag, size = 0x4, scoped, tag = 'scoped memory for tpu_custom_call.1']
    #allocation7 [shape = 'u8[512]{0}', space=vmem, size = 0x400, scoped, tag = 'input window, operand 6, single buffered']
    #allocation8 [shape = 'u8[512]{0}', space=vmem, size = 0x400, scoped, tag = 'input window, operand 8, single buffered']
    #allocation9 [shape = 's32[1]{0}', space=sflag, size = 0x4, scoped, tag = 'scoped memory for tpu_custom_call.1']
    #allocation10 [shape = 'u8[16384]{0}', space=vmem, size = 0x4000, scoped, tag = 'input window, operand 9, single buffered']
    #allocation11 [shape = 'u8[512]{0}', space=vmem, size = 0x400, scoped, tag = 'input window, operand 10, single buffered']
    #allocation12 [shape = 's32[1]{0}', space=sflag, size = 0x4, scoped, tag = 'scoped memory for tpu_custom_call.1']
    #allocation13 [shape = 'u8[512]{0}', space=vmem, size = 0x400, scoped, tag = 'input window, operand 11, single buffered']
    #allocation14 [shape = 'u8[512]{0}', space=vmem, size = 0x400, scoped, tag = 'input window, operand 12, single buffered']
    #allocation15 [shape = 's32[1]{0}', space=sflag, size = 0x4, scoped, tag = 'scoped memory for tpu_custom_call.1']
    #allocation16 [shape = 'u8[16384]{0}', space=vmem, size = 0x4000, scoped, tag = 'input window, operand 14, single buffered']
    #allocation17 [shape = 'u8[16384]{0}', space=vmem, size = 0x4000, scoped, tag = 'input window, operand 15, single buffered']
    #allocation18 [shape = 's32[1]{0}', space=sflag, size = 0x4, scoped, tag = 'scoped memory for tpu_custom_call.1']
    #allocation19 [shape = 'u8[8192]{0}', space=vmem, size = 0x2000, scoped, tag = 'input window, operand 16, single buffered']
    #allocation20 [shape = 'u8[8192]{0}', space=vmem, size = 0x2000, scoped, tag = 'input window, operand 17, single buffered']
    #allocation21 [shape = 's32[1]{0}', space=sflag, size = 0x4, scoped, tag = 'scoped memory for tpu_custom_call.1']
    #allocation22 [shape = 'u8[8192]{0}', space=vmem, size = 0x2000, scoped, tag = 'input window, operand 18, single buffered']
    #allocation23 [shape = 'u8[8192]{0}', space=vmem, size = 0x2000, scoped, tag = 'input window, operand 19, single buffered']
    #allocation24 [shape = 's32[1]{0}', space=sflag, size = 0x4, scoped, tag = 'scoped memory for tpu_custom_call.1']
    #allocation25 [shape = 'u8[8192]{0}', space=vmem, size = 0x2000, scoped, tag = 'input window, operand 21, single buffered']
    #allocation26 [shape = 'u8[16384]{0}', space=vmem, size = 0x4000, scoped, tag = 'output window, operand 0']
    %29 = vsyncpa [#allocation3], 0
    %30 = vsyncpa [#allocation6], 0
    %31 = vsyncpa [#allocation9], 0
    %32 = vsyncpa [#allocation12], 0
    %33 = vsyncpa [#allocation15], 0
    %34 = vsyncpa [#allocation18], 0
    %35 = vsyncpa [#allocation21], 0
    %36 = vsyncpa [#allocation24], 0
    %37 = vsyncpa [#allocation4], 0
    %s38 = scalar_lea.sflag [#allocation4], 1
    %39 = vsyncpa %s38, 0
    loop: start=0, step=1, limit=4
    $region2: #{tpu_custom_call.1} parent=1 // loop_pre_header
      _
    $region3: #{tpu_custom_call.1} parent=1 // loop_header
      %s41 = sphi 0, %s45
      %p42 = scmp.ge.s32.totalorder %s41, 4
      %s51 = sphi 0, %s53
      %s54 = sphi 0, %s51
      %s55 = sphi 0, %s54
      %s71 = sphi 0, %s55
      %s75 = sphi 0, %s75
      %s77 = sphi 0, %s75
      %s78 = sphi 0, %s77
      %s92 = sphi 0, %s78
      %s96 = sphi 0, %s96
      %s98 = sphi 0, %s96
      %s99 = sphi 0, %s98
      %s113 = sphi 0, %s99
      %s117 = sphi 0, %s117
      %s119 = sphi 0, %s117
      %s120 = sphi 0, %s119
      %s134 = sphi 0, %s120
      %s138 = sphi 0, %s138
      %s140 = sphi 0, %s138
      %s141 = sphi 0, %s140
      %s155 = sphi 0, %s141
      %s159 = sphi 0, %s159
      %s161 = sphi 0, %s159
      %s162 = sphi 0, %s161
      %s176 = sphi 0, %s162
      %s180 = sphi 0, %s180
      %s182 = sphi 0, %s180
      %s183 = sphi 0, %s182
      %s197 = sphi 0, %s183
      %s201 = sphi 0, %s201
      %s203 = sphi 0, %s201
      %s204 = sphi 0, %s203
      %s218 = sphi 0, %s204
      %s222 = sphi 0, %s222
      %s224 = sphi 0, %s222
      %s225 = sphi 0, %s224
      %s239 = sphi 0, %s225
      %s243 = sphi 0, %s243
      %s245 = sphi 0, %s243
      %s246 = sphi 0, %s245
      %s260 = sphi 0, %s246
      %s264 = sphi 0, %s264
      %s266 = sphi 0, %s264
      %s267 = sphi 0, %s266
      %s281 = sphi 0, %s267
      %s285 = sphi 0, %s285
      %s287 = sphi 0, %s285
      %s288 = sphi 0, %s287
      %s302 = sphi 0, %s288
      %s306 = sphi 0, %s306
      %s308 = sphi 0, %s306
      %s309 = sphi 0, %s308
      %s323 = sphi 0, %s309
      %s327 = sphi 0, %s327
      %s329 = sphi 0, %s327
      %s330 = sphi 0, %s329
      %s344 = sphi 0, %s330
      %s348 = sphi 0, %s348
      %s350 = sphi 0, %s348
      %s351 = sphi 0, %s350
      %s365 = sphi 0, %s351
      %s369 = sphi 0, %s369
      %s371 = sphi 0, %s369
      %s372 = sphi 0, %s371
      %s386 = sphi 0, %s372
      %s390 = sphi 0, %s390
      %s392 = sphi 0, %s390
      %s393 = sphi 0, %s392
      %s407 = sphi 0, %s393
      %s411 = sphi 0, %s411
      %s413 = sphi 0, %s411
      %s414 = sphi 0, %s413
      %s428 = sphi 0, %s414
      %s432 = sphi 0, %s432
      %s434 = sphi 0, %s432
      %s435 = sphi 0, %s434
      %s449 = sphi 0, %s435
      %s453 = sphi 0, %s453
      %s455 = sphi 0, %s453
      %s456 = sphi 0, %s455
      %s470 = sphi 0, %s456
      %s474 = sphi 0, %s474
      %s476 = sphi 0, %s474
      %s477 = sphi 0, %s476
      %s491 = sphi 0, %s477
      %s495 = sphi 0, %s495
      %s497 = sphi 0, %s495
      %s498 = sphi 0, %s497
      %s512 = sphi 0, %s498
      %s516 = sphi 0, %s516
      %s518 = sphi 0, %s516
      %s519 = sphi 0, %s518
      %s533 = sphi 0, %s519
      %s537 = sphi 0, %s537
      %s539 = sphi 0, %s537
      %s540 = sphi 0, %s539
      %s554 = sphi 0, %s540
      %s560 = sphi 0, %s562
      %s563 = sphi 0, %s560
      %s564 = sphi 0, %s563
      %s580 = sphi 0, %s564
    $region4: #{tpu_custom_call.1} parent=1 // loop_header_branch
      %44 = sbr.rel (%p42) target = $region8
    $region5: #{tpu_custom_call.1} parent=1 // loop_body
      %s46 = ssub.s32 %s41, 1
      %s47 = ssub.s32 %s41, 2
      %s48 = sadd.s32 %s41, 1
      %s49 = ssub.s32 %s41, %s48
      %p50 = scmp.eq.s32.totalorder %s49, 0
      %s52 = sadd.s32 %s51, 1
      %s53 = scalar_select %p50, %s51, %s52
      %p56 = pneg %p50
      %p57 = scmp.eq.s32.totalorder %s41, 1
      %p58 = por %p56, %p57
      %p59 = scmp.ne.s32.totalorder %s51, %s54
      %p60 = scmp.eq.s32.totalorder %s41, 0
      %p61 = por %p59, %p60
      %p62 = scmp.ne.s32.totalorder %s51, %s54
      %p63 = scmp.eq.s32.totalorder %s46, 1
      %p64 = por %p62, %p63
      %p65 = scmp.ne.s32.totalorder %s54, %s55
      %p66 = scmp.eq.s32.totalorder %s46, 0
      %p67 = por %p65, %p66
      %p68 = scmp.ne.s32.totalorder %s54, %s55
      %p69 = scmp.eq.s32.totalorder %s47, 1
      %p70 = por %p68, %p69
      %p72 = scmp.ne.s32.totalorder %s55, %s71
      %p73 = scmp.eq.s32.totalorder %s47, 0
      %p74 = por %p72, %p73
      %s76 = sadd.s32 %s75, 1
      %p79 = scmp.eq.s32.totalorder %s41, 1
      %p80 = scmp.ne.s32.totalorder %s75, %s77
      %p81 = scmp.eq.s32.totalorder %s41, 0
      %p82 = por %p80, %p81
      %p83 = scmp.ne.s32.totalorder %s75, %s77
      %p84 = scmp.eq.s32.totalorder %s46, 1
      %p85 = por %p83, %p84
      %p86 = scmp.ne.s32.totalorder %s77, %s78
      %p87 = scmp.eq.s32.totalorder %s46, 0
      %p88 = por %p86, %p87
      %p89 = scmp.ne.s32.totalorder %s77, %s78
      %p90 = scmp.eq.s32.totalorder %s47, 1
      %p91 = por %p89, %p90
      %p93 = scmp.ne.s32.totalorder %s78, %s92
      %p94 = scmp.eq.s32.totalorder %s47, 0
      %p95 = por %p93, %p94
      %s97 = sadd.s32 %s96, 1
      %p100 = scmp.eq.s32.totalorder %s41, 1
      %p101 = scmp.ne.s32.totalorder %s96, %s98
      %p102 = scmp.eq.s32.totalorder %s41, 0
      %p103 = por %p101, %p102
      %p104 = scmp.ne.s32.totalorder %s96, %s98
      %p105 = scmp.eq.s32.totalorder %s46, 1
      %p106 = por %p104, %p105
      %p107 = scmp.ne.s32.totalorder %s98, %s99
      %p108 = scmp.eq.s32.totalorder %s46, 0
      %p109 = por %p107, %p108
      %p110 = scmp.ne.s32.totalorder %s98, %s99
      %p111 = scmp.eq.s32.totalorder %s47, 1
      %p112 = por %p110, %p111
      %p114 = scmp.ne.s32.totalorder %s99, %s113
      %p115 = scmp.eq.s32.totalorder %s47, 0
      %p116 = por %p114, %p115
      %s118 = sadd.s32 %s117, 1
      %p121 = scmp.eq.s32.totalorder %s41, 1
      %p122 = scmp.ne.s32.totalorder %s117, %s119
      %p123 = scmp.eq.s32.totalorder %s41, 0
      %p124 = por %p122, %p123
      %p125 = scmp.ne.s32.totalorder %s117, %s119
      %p126 = scmp.eq.s32.totalorder %s46, 1
      %p127 = por %p125, %p126
      %p128 = scmp.ne.s32.totalorder %s119, %s120
      %p129 = scmp.eq.s32.totalorder %s46, 0
      %p130 = por %p128, %p129
      %p131 = scmp.ne.s32.totalorder %s119, %s120
      %p132 = scmp.eq.s32.totalorder %s47, 1
      %p133 = por %p131, %p132
      %p135 = scmp.ne.s32.totalorder %s120, %s134
      %p136 = scmp.eq.s32.totalorder %s47, 0
      %p137 = por %p135, %p136
      %s139 = sadd.s32 %s138, 1
      %p142 = scmp.eq.s32.totalorder %s41, 1
      %p143 = scmp.ne.s32.totalorder %s138, %s140
      %p144 = scmp.eq.s32.totalorder %s41, 0
      %p145 = por %p143, %p144
      %p146 = scmp.ne.s32.totalorder %s138, %s140
      %p147 = scmp.eq.s32.totalorder %s46, 1
      %p148 = por %p146, %p147
      %p149 = scmp.ne.s32.totalorder %s140, %s141
      %p150 = scmp.eq.s32.totalorder %s46, 0
      %p151 = por %p149, %p150
      %p152 = scmp.ne.s32.totalorder %s140, %s141
      %p153 = scmp.eq.s32.totalorder %s47, 1
      %p154 = por %p152, %p153
      %p156 = scmp.ne.s32.totalorder %s141, %s155
      %p157 = scmp.eq.s32.totalorder %s47, 0
      %p158 = por %p156, %p157
      %s160 = sadd.s32 %s159, 1
      %p163 = scmp.eq.s32.totalorder %s41, 1
      %p164 = scmp.ne.s32.totalorder %s159, %s161
      %p165 = scmp.eq.s32.totalorder %s41, 0
      %p166 = por %p164, %p165
      %p167 = scmp.ne.s32.totalorder %s159, %s161
      %p168 = scmp.eq.s32.totalorder %s46, 1
      %p169 = por %p167, %p168
      %p170 = scmp.ne.s32.totalorder %s161, %s162
      %p171 = scmp.eq.s32.totalorder %s46, 0
      %p172 = por %p170, %p171
      %p173 = scmp.ne.s32.totalorder %s161, %s162
      %p174 = scmp.eq.s32.totalorder %s47, 1
      %p175 = por %p173, %p174
      %p177 = scmp.ne.s32.totalorder %s162, %s176
      %p178 = scmp.eq.s32.totalorder %s47, 0
      %p179 = por %p177, %p178
      %s181 = sadd.s32 %s180, 1
      %p184 = scmp.eq.s32.totalorder %s41, 1
      %p185 = scmp.ne.s32.totalorder %s180, %s182
      %p186 = scmp.eq.s32.totalorder %s41, 0
      %p187 = por %p185, %p186
      %p188 = scmp.ne.s32.totalorder %s180, %s182
      %p189 = scmp.eq.s32.totalorder %s46, 1
      %p190 = por %p188, %p189
      %p191 = scmp.ne.s32.totalorder %s182, %s183
      %p192 = scmp.eq.s32.totalorder %s46, 0
      %p193 = por %p191, %p192
      %p194 = scmp.ne.s32.totalorder %s182, %s183
      %p195 = scmp.eq.s32.totalorder %s47, 1
      %p196 = por %p194, %p195
      %p198 = scmp.ne.s32.totalorder %s183, %s197
      %p199 = scmp.eq.s32.totalorder %s47, 0
      %p200 = por %p198, %p199
      %s202 = sadd.s32 %s201, 1
      %p205 = scmp.eq.s32.totalorder %s41, 1
      %p206 = scmp.ne.s32.totalorder %s201, %s203
      %p207 = scmp.eq.s32.totalorder %s41, 0
      %p208 = por %p206, %p207
      %p209 = scmp.ne.s32.totalorder %s201, %s203
      %p210 = scmp.eq.s32.totalorder %s46, 1
      %p211 = por %p209, %p210
      %p212 = scmp.ne.s32.totalorder %s203, %s204
      %p213 = scmp.eq.s32.totalorder %s46, 0
      %p214 = por %p212, %p213
      %p215 = scmp.ne.s32.totalorder %s203, %s204
      %p216 = scmp.eq.s32.totalorder %s47, 1
      %p217 = por %p215, %p216
      %p219 = scmp.ne.s32.totalorder %s204, %s218
      %p220 = scmp.eq.s32.totalorder %s47, 0
      %p221 = por %p219, %p220
      %s223 = sadd.s32 %s222, 1
      %p226 = scmp.eq.s32.totalorder %s41, 1
      %p227 = scmp.ne.s32.totalorder %s222, %s224
      %p228 = scmp.eq.s32.totalorder %s41, 0
      %p229 = por %p227, %p228
      %p230 = scmp.ne.s32.totalorder %s222, %s224
      %p231 = scmp.eq.s32.totalorder %s46, 1
      %p232 = por %p230, %p231
      %p233 = scmp.ne.s32.totalorder %s224, %s225
      %p234 = scmp.eq.s32.totalorder %s46, 0
      %p235 = por %p233, %p234
      %p236 = scmp.ne.s32.totalorder %s224, %s225
      %p237 = scmp.eq.s32.totalorder %s47, 1
      %p238 = por %p236, %p237
      %p240 = scmp.ne.s32.totalorder %s225, %s239
      %p241 = scmp.eq.s32.totalorder %s47, 0
      %p242 = por %p240, %p241
      %s244 = sadd.s32 %s243, 1
      %p247 = scmp.eq.s32.totalorder %s41, 1
      %p248 = scmp.ne.s32.totalorder %s243, %s245
      %p249 = scmp.eq.s32.totalorder %s41, 0
      %p250 = por %p248, %p249
      %p251 = scmp.ne.s32.totalorder %s243, %s245
      %p252 = scmp.eq.s32.totalorder %s46, 1
      %p253 = por %p251, %p252
      %p254 = scmp.ne.s32.totalorder %s245, %s246
      %p255 = scmp.eq.s32.totalorder %s46, 0
      %p256 = por %p254, %p255
      %p257 = scmp.ne.s32.totalorder %s245, %s246
      %p258 = scmp.eq.s32.totalorder %s47, 1
      %p259 = por %p257, %p258
      %p261 = scmp.ne.s32.totalorder %s246, %s260
      %p262 = scmp.eq.s32.totalorder %s47, 0
      %p263 = por %p261, %p262
      %s265 = sadd.s32 %s264, 1
      %p268 = scmp.eq.s32.totalorder %s41, 1
      %p269 = scmp.ne.s32.totalorder %s264, %s266
      %p270 = scmp.eq.s32.totalorder %s41, 0
      %p271 = por %p269, %p270
      %p272 = scmp.ne.s32.totalorder %s264, %s266
      %p273 = scmp.eq.s32.totalorder %s46, 1
      %p274 = por %p272, %p273
      %p275 = scmp.ne.s32.totalorder %s266, %s267
      %p276 = scmp.eq.s32.totalorder %s46, 0
      %p277 = por %p275, %p276
      %p278 = scmp.ne.s32.totalorder %s266, %s267
      %p279 = scmp.eq.s32.totalorder %s47, 1
      %p280 = por %p278, %p279
      %p282 = scmp.ne.s32.totalorder %s267, %s281
      %p283 = scmp.eq.s32.totalorder %s47, 0
      %p284 = por %p282, %p283
      %s286 = sadd.s32 %s285, 1
      %p289 = scmp.eq.s32.totalorder %s41, 1
      %p290 = scmp.ne.s32.totalorder %s285, %s287
      %p291 = scmp.eq.s32.totalorder %s41, 0
      %p292 = por %p290, %p291
      %p293 = scmp.ne.s32.totalorder %s285, %s287
      %p294 = scmp.eq.s32.totalorder %s46, 1
      %p295 = por %p293, %p294
      %p296 = scmp.ne.s32.totalorder %s287, %s288
      %p297 = scmp.eq.s32.totalorder %s46, 0
      %p298 = por %p296, %p297
      %p299 = scmp.ne.s32.totalorder %s287, %s288
      %p300 = scmp.eq.s32.totalorder %s47, 1
      %p301 = por %p299, %p300
      %p303 = scmp.ne.s32.totalorder %s288, %s302
      %p304 = scmp.eq.s32.totalorder %s47, 0
      %p305 = por %p303, %p304
      %s307 = sadd.s32 %s306, 1
      %p310 = scmp.eq.s32.totalorder %s41, 1
      %p311 = scmp.ne.s32.totalorder %s306, %s308
      %p312 = scmp.eq.s32.totalorder %s41, 0
      %p313 = por %p311, %p312
      %p314 = scmp.ne.s32.totalorder %s306, %s308
      %p315 = scmp.eq.s32.totalorder %s46, 1
      %p316 = por %p314, %p315
      %p317 = scmp.ne.s32.totalorder %s308, %s309
      %p318 = scmp.eq.s32.totalorder %s46, 0
      %p319 = por %p317, %p318
      %p320 = scmp.ne.s32.totalorder %s308, %s309
      %p321 = scmp.eq.s32.totalorder %s47, 1
      %p322 = por %p320, %p321
      %p324 = scmp.ne.s32.totalorder %s309, %s323
      %p325 = scmp.eq.s32.totalorder %s47, 0
      %p326 = por %p324, %p325
      %s328 = sadd.s32 %s327, 1
      %p331 = scmp.eq.s32.totalorder %s41, 1
      %p332 = scmp.ne.s32.totalorder %s327, %s329
      %p333 = scmp.eq.s32.totalorder %s41, 0
      %p334 = por %p332, %p333
      %p335 = scmp.ne.s32.totalorder %s327, %s329
      %p336 = scmp.eq.s32.totalorder %s46, 1
      %p337 = por %p335, %p336
      %p338 = scmp.ne.s32.totalorder %s329, %s330
      %p339 = scmp.eq.s32.totalorder %s46, 0
      %p340 = por %p338, %p339
      %p341 = scmp.ne.s32.totalorder %s329, %s330
      %p342 = scmp.eq.s32.totalorder %s47, 1
      %p343 = por %p341, %p342
      %p345 = scmp.ne.s32.totalorder %s330, %s344
      %p346 = scmp.eq.s32.totalorder %s47, 0
      %p347 = por %p345, %p346
      %s349 = sadd.s32 %s348, 1
      %p352 = scmp.eq.s32.totalorder %s41, 1
      %p353 = scmp.ne.s32.totalorder %s348, %s350
      %p354 = scmp.eq.s32.totalorder %s41, 0
      %p355 = por %p353, %p354
      %p356 = scmp.ne.s32.totalorder %s348, %s350
      %p357 = scmp.eq.s32.totalorder %s46, 1
      %p358 = por %p356, %p357
      %p359 = scmp.ne.s32.totalorder %s350, %s351
      %p360 = scmp.eq.s32.totalorder %s46, 0
      %p361 = por %p359, %p360
      %p362 = scmp.ne.s32.totalorder %s350, %s351
      %p363 = scmp.eq.s32.totalorder %s47, 1
      %p364 = por %p362, %p363
      %p366 = scmp.ne.s32.totalorder %s351, %s365
      %p367 = scmp.eq.s32.totalorder %s47, 0
      %p368 = por %p366, %p367
      %s370 = sadd.s32 %s369, 1
      %p373 = scmp.eq.s32.totalorder %s41, 1
      %p374 = scmp.ne.s32.totalorder %s369, %s371
      %p375 = scmp.eq.s32.totalorder %s41, 0
      %p376 = por %p374, %p375
      %p377 = scmp.ne.s32.totalorder %s369, %s371
      %p378 = scmp.eq.s32.totalorder %s46, 1
      %p379 = por %p377, %p378
      %p380 = scmp.ne.s32.totalorder %s371, %s372
      %p381 = scmp.eq.s32.totalorder %s46, 0
      %p382 = por %p380, %p381
      %p383 = scmp.ne.s32.totalorder %s371, %s372
      %p384 = scmp.eq.s32.totalorder %s47, 1
      %p385 = por %p383, %p384
      %p387 = scmp.ne.s32.totalorder %s372, %s386
      %p388 = scmp.eq.s32.totalorder %s47, 0
      %p389 = por %p387, %p388
      %s391 = sadd.s32 %s390, 1
      %p394 = scmp.eq.s32.totalorder %s41, 1
      %p395 = scmp.ne.s32.totalorder %s390, %s392
      %p396 = scmp.eq.s32.totalorder %s41, 0
      %p397 = por %p395, %p396
      %p398 = scmp.ne.s32.totalorder %s390, %s392
      %p399 = scmp.eq.s32.totalorder %s46, 1
      %p400 = por %p398, %p399
      %p401 = scmp.ne.s32.totalorder %s392, %s393
      %p402 = scmp.eq.s32.totalorder %s46, 0
      %p403 = por %p401, %p402
      %p404 = scmp.ne.s32.totalorder %s392, %s393
      %p405 = scmp.eq.s32.totalorder %s47, 1
      %p406 = por %p404, %p405
      %p408 = scmp.ne.s32.totalorder %s393, %s407
      %p409 = scmp.eq.s32.totalorder %s47, 0
      %p410 = por %p408, %p409
      %s412 = sadd.s32 %s411, 1
      %p415 = scmp.eq.s32.totalorder %s41, 1
      %p416 = scmp.ne.s32.totalorder %s411, %s413
      %p417 = scmp.eq.s32.totalorder %s41, 0
      %p418 = por %p416, %p417
      %p419 = scmp.ne.s32.totalorder %s411, %s413
      %p420 = scmp.eq.s32.totalorder %s46, 1
      %p421 = por %p419, %p420
      %p422 = scmp.ne.s32.totalorder %s413, %s414
      %p423 = scmp.eq.s32.totalorder %s46, 0
      %p424 = por %p422, %p423
      %p425 = scmp.ne.s32.totalorder %s413, %s414
      %p426 = scmp.eq.s32.totalorder %s47, 1
      %p427 = por %p425, %p426
      %p429 = scmp.ne.s32.totalorder %s414, %s428
      %p430 = scmp.eq.s32.totalorder %s47, 0
      %p431 = por %p429, %p430
      %s433 = sadd.s32 %s432, 1
      %p436 = scmp.eq.s32.totalorder %s41, 1
      %p437 = scmp.ne.s32.totalorder %s432, %s434
      %p438 = scmp.eq.s32.totalorder %s41, 0
      %p439 = por %p437, %p438
      %p440 = scmp.ne.s32.totalorder %s432, %s434
      %p441 = scmp.eq.s32.totalorder %s46, 1
      %p442 = por %p440, %p441
      %p443 = scmp.ne.s32.totalorder %s434, %s435
      %p444 = scmp.eq.s32.totalorder %s46, 0
      %p445 = por %p443, %p444
      %p446 = scmp.ne.s32.totalorder %s434, %s435
      %p447 = scmp.eq.s32.totalorder %s47, 1
      %p448 = por %p446, %p447
      %p450 = scmp.ne.s32.totalorder %s435, %s449
      %p451 = scmp.eq.s32.totalorder %s47, 0
      %p452 = por %p450, %p451
      %s454 = sadd.s32 %s453, 1
      %p457 = scmp.eq.s32.totalorder %s41, 1
      %p458 = scmp.ne.s32.totalorder %s453, %s455
      %p459 = scmp.eq.s32.totalorder %s41, 0
      %p460 = por %p458, %p459
      %p461 = scmp.ne.s32.totalorder %s453, %s455
      %p462 = scmp.eq.s32.totalorder %s46, 1
      %p463 = por %p461, %p462
      %p464 = scmp.ne.s32.totalorder %s455, %s456
      %p465 = scmp.eq.s32.totalorder %s46, 0
      %p466 = por %p464, %p465
      %p467 = scmp.ne.s32.totalorder %s455, %s456
      %p468 = scmp.eq.s32.totalorder %s47, 1
      %p469 = por %p467, %p468
      %p471 = scmp.ne.s32.totalorder %s456, %s470
      %p472 = scmp.eq.s32.totalorder %s47, 0
      %p473 = por %p471, %p472
      %s475 = sadd.s32 %s474, 1
      %p478 = scmp.eq.s32.totalorder %s41, 1
      %p479 = scmp.ne.s32.totalorder %s474, %s476
      %p480 = scmp.eq.s32.totalorder %s41, 0
      %p481 = por %p479, %p480
      %p482 = scmp.ne.s32.totalorder %s474, %s476
      %p483 = scmp.eq.s32.totalorder %s46, 1
      %p484 = por %p482, %p483
      %p485 = scmp.ne.s32.totalorder %s476, %s477
      %p486 = scmp.eq.s32.totalorder %s46, 0
      %p487 = por %p485, %p486
      %p488 = scmp.ne.s32.totalorder %s476, %s477
      %p489 = scmp.eq.s32.totalorder %s47, 1
      %p490 = por %p488, %p489
      %p492 = scmp.ne.s32.totalorder %s477, %s491
      %p493 = scmp.eq.s32.totalorder %s47, 0
      %p494 = por %p492, %p493
      %s496 = sadd.s32 %s495, 1
      %p499 = scmp.eq.s32.totalorder %s41, 1
      %p500 = scmp.ne.s32.totalorder %s495, %s497
      %p501 = scmp.eq.s32.totalorder %s41, 0
      %p502 = por %p500, %p501
      %p503 = scmp.ne.s32.totalorder %s495, %s497
      %p504 = scmp.eq.s32.totalorder %s46, 1
      %p505 = por %p503, %p504
      %p506 = scmp.ne.s32.totalorder %s497, %s498
      %p507 = scmp.eq.s32.totalorder %s46, 0
      %p508 = por %p506, %p507
      %p509 = scmp.ne.s32.totalorder %s497, %s498
      %p510 = scmp.eq.s32.totalorder %s47, 1
      %p511 = por %p509, %p510
      %p513 = scmp.ne.s32.totalorder %s498, %s512
      %p514 = scmp.eq.s32.totalorder %s47, 0
      %p515 = por %p513, %p514
      %s517 = sadd.s32 %s516, 1
      %p520 = scmp.eq.s32.totalorder %s41, 1
      %p521 = scmp.ne.s32.totalorder %s516, %s518
      %p522 = scmp.eq.s32.totalorder %s41, 0
      %p523 = por %p521, %p522
      %p524 = scmp.ne.s32.totalorder %s516, %s518
      %p525 = scmp.eq.s32.totalorder %s46, 1
      %p526 = por %p524, %p525
      %p527 = scmp.ne.s32.totalorder %s518, %s519
      %p528 = scmp.eq.s32.totalorder %s46, 0
      %p529 = por %p527, %p528
      %p530 = scmp.ne.s32.totalorder %s518, %s519
      %p531 = scmp.eq.s32.totalorder %s47, 1
      %p532 = por %p530, %p531
      %p534 = scmp.ne.s32.totalorder %s519, %s533
      %p535 = scmp.eq.s32.totalorder %s47, 0
      %p536 = por %p534, %p535
      %s538 = sadd.s32 %s537, 1
      %p541 = scmp.eq.s32.totalorder %s41, 1
      %p542 = scmp.ne.s32.totalorder %s537, %s539
      %p543 = scmp.eq.s32.totalorder %s41, 0
      %p544 = por %p542, %p543
      %p545 = scmp.ne.s32.totalorder %s537, %s539
      %p546 = scmp.eq.s32.totalorder %s46, 1
      %p547 = por %p545, %p546
      %p548 = scmp.ne.s32.totalorder %s539, %s540
      %p549 = scmp.eq.s32.totalorder %s46, 0
      %p550 = por %p548, %p549
      %p551 = scmp.ne.s32.totalorder %s539, %s540
      %p552 = scmp.eq.s32.totalorder %s47, 1
      %p553 = por %p551, %p552
      %p555 = scmp.ne.s32.totalorder %s540, %s554
      %p556 = scmp.eq.s32.totalorder %s47, 0
      %p557 = por %p555, %p556
      %s558 = ssub.s32 %s41, %s48
      %p559 = scmp.eq.s32.totalorder %s558, 0
      %s561 = sadd.s32 %s560, 1
      %s562 = scalar_select %p559, %s560, %s561
      %p565 = pneg %p559
      %p566 = scmp.eq.s32.totalorder %s41, 1
      %p567 = por %p565, %p566
      %p568 = scmp.ne.s32.totalorder %s560, %s563
      %p569 = scmp.eq.s32.totalorder %s41, 0
      %p570 = por %p568, %p569
      %p571 = scmp.ne.s32.totalorder %s560, %s563
      %p572 = scmp.eq.s32.totalorder %s46, 1
      %p573 = por %p571, %p572
      %p574 = scmp.ne.s32.totalorder %s563, %s564
      %p575 = scmp.eq.s32.totalorder %s46, 0
      %p576 = por %p574, %p575
      %p577 = scmp.ne.s32.totalorder %s563, %s564
      %p578 = scmp.eq.s32.totalorder %s47, 1
      %p579 = por %p577, %p578
      %p581 = scmp.ne.s32.totalorder %s564, %s580
      %p582 = scmp.eq.s32.totalorder %s47, 0
      %p583 = por %p581, %p582
      %p584 = scmp.le.s32.totalorder 1, %s41
      %p585 = scmp.lt.s32.totalorder %s41, 3
      %p586 = pnand %p584, %p585
      %p587 = pneg %p586
      // Predicated region
      $region9: #{tpu_custom_call.1} parent=5 // pred_check
        _
      $region10: #{tpu_custom_call.1} parent=5 // pred_check_branch
        %589 = sbr.rel (%p586) target = $region12
      $region11: #{tpu_custom_call.1} parent=5 // pred_region
        %s590 = ssub.s32 %s41, 1
        // Predicated region
        $region13: #{tpu_custom_call.1} parent=11 // pred_check
          %p591 = pneg %p88
        $region14: #{tpu_custom_call.1} parent=11 // pred_check_branch
          %593 = sbr.rel (%p591) target = $region16
        $region15: #{tpu_custom_call.1} parent=11 // pred_region
          _
        $region16: #{tpu_custom_call.1} parent=11 // pred_fallthru
          _
        // Predicated region
        $region17: #{tpu_custom_call.1} parent=11 // pred_check
          %p594 = pneg %p109
        $region18: #{tpu_custom_call.1} parent=11 // pred_check_branch
          %596 = sbr.rel (%p594) target = $region20
        $region19: #{tpu_custom_call.1} parent=11 // pred_region
          %s598 = ssub.s32 16, 16
          %599 = vsyncadd [#allocation3], %s598
          %s601 = sshll.u32 [#allocation2], 4
          %s602 = int_to_ptr.vmem [resolvable:$true] %s601
          %604 = dma.hbm_to_vmem [thread:$0]  %s2, 16, %s602, [#allocation3]
        $region20: #{tpu_custom_call.1} parent=11 // pred_fallthru
          _
        // Predicated region
        $region21: #{tpu_custom_call.1} parent=11 // pred_check
          %p605 = pneg %p130
        $region22: #{tpu_custom_call.1} parent=11 // pred_check_branch
          %607 = sbr.rel (%p605) target = $region24
        $region23: #{tpu_custom_call.1} parent=11 // pred_region
          _
        $region24: #{tpu_custom_call.1} parent=11 // pred_fallthru
          _
        // Predicated region
        $region25: #{tpu_custom_call.1} parent=11 // pred_check
          %p608 = pneg %p151
        $region26: #{tpu_custom_call.1} parent=11 // pred_check_branch
          %610 = sbr.rel (%p608) target = $region28
        $region27: #{tpu_custom_call.1} parent=11 // pred_region
          %s612 = ssub.s32 16, 16
          %613 = vsyncadd [#allocation6], %s612
          %s615 = sshll.u32 [#allocation5], 4
          %s616 = int_to_ptr.vmem [resolvable:$true] %s615
          %618 = dma.hbm_to_vmem [thread:$0]  %s4, 16, %s616, [#allocation6]
        $region28: #{tpu_custom_call.1} parent=11 // pred_fallthru
          _
        // Predicated region
        $region29: #{tpu_custom_call.1} parent=11 // pred_check
          %p619 = pneg %p172
        $region30: #{tpu_custom_call.1} parent=11 // pred_check_branch
          %621 = sbr.rel (%p619) target = $region32
        $region31: #{tpu_custom_call.1} parent=11 // pred_region
          _
        $region32: #{tpu_custom_call.1} parent=11 // pred_fallthru
          _
        // Predicated region
        $region33: #{tpu_custom_call.1} parent=11 // pred_check
          %p622 = pneg %p193
        $region34: #{tpu_custom_call.1} parent=11 // pred_check_branch
          %624 = sbr.rel (%p622) target = $region36
        $region35: #{tpu_custom_call.1} parent=11 // pred_region
          %s626 = ssub.s32 16, 16
          %627 = vsyncadd [#allocation6], %s626
          %s629 = sshll.u32 [#allocation7], 4
          %s630 = int_to_ptr.vmem [resolvable:$true] %s629
          %632 = dma.hbm_to_vmem [thread:$0]  %s6, 16, %s630, [#allocation6]
        $region36: #{tpu_custom_call.1} parent=11 // pred_fallthru
          _
        // Predicated region
        $region37: #{tpu_custom_call.1} parent=11 // pred_check
          %p633 = pneg %p214
        $region38: #{tpu_custom_call.1} parent=11 // pred_check_branch
          %635 = sbr.rel (%p633) target = $region40
        $region39: #{tpu_custom_call.1} parent=11 // pred_region
          _
        $region40: #{tpu_custom_call.1} parent=11 // pred_fallthru
          _
        // Predicated region
        $region41: #{tpu_custom_call.1} parent=11 // pred_check
          %p636 = pneg %p235
        $region42: #{tpu_custom_call.1} parent=11 // pred_check_branch
          %638 = sbr.rel (%p636) target = $region44
        $region43: #{tpu_custom_call.1} parent=11 // pred_region
          %s640 = ssub.s32 16, 16
          %641 = vsyncadd [#allocation9], %s640
          %s643 = sshll.u32 [#allocation8], 4
          %s644 = int_to_ptr.vmem [resolvable:$true] %s643
          %646 = dma.hbm_to_vmem [thread:$0]  %s8, 16, %s644, [#allocation9]
        $region44: #{tpu_custom_call.1} parent=11 // pred_fallthru
          _
        // Predicated region
        $region45: #{tpu_custom_call.1} parent=11 // pred_check
          %p647 = pneg %p256
        $region46: #{tpu_custom_call.1} parent=11 // pred_check_branch
          %649 = sbr.rel (%p647) target = $region48
        $region47: #{tpu_custom_call.1} parent=11 // pred_region
          %s651 = ssub.s32 512, 512
          %652 = vsyncadd [#allocation9], %s651
          %s653 = sshll.u32 [#allocation10], 4
          %s654 = int_to_ptr.vmem [resolvable:$true] %s653
          %659 = dma.hbm_to_vmem [thread:$0]  %s9, 512, %s654, [#allocation9], 128, 128, 8
        $region48: #{tpu_custom_call.1} parent=11 // pred_fallthru
          _
        // Predicated region
        $region49: #{tpu_custom_call.1} parent=11 // pred_check
          %p660 = pneg %p277
        $region50: #{tpu_custom_call.1} parent=11 // pred_check_branch
          %662 = sbr.rel (%p660) target = $region52
        $region51: #{tpu_custom_call.1} parent=11 // pred_region
          %s664 = ssub.s32 16, 16
          %665 = vsyncadd [#allocation12], %s664
          %s667 = sshll.u32 [#allocation11], 4
          %s668 = int_to_ptr.vmem [resolvable:$true] %s667
          %670 = dma.hbm_to_vmem [thread:$0]  %s10, 16, %s668, [#allocation12]
        $region52: #{tpu_custom_call.1} parent=11 // pred_fallthru
          _
        // Predicated region
        $region53: #{tpu_custom_call.1} parent=11 // pred_check
          %p671 = pneg %p298
        $region54: #{tpu_custom_call.1} parent=11 // pred_check_branch
          %673 = sbr.rel (%p671) target = $region56
        $region55: #{tpu_custom_call.1} parent=11 // pred_region
          %s675 = ssub.s32 16, 16
          %676 = vsyncadd [#allocation12], %s675
          %s678 = sshll.u32 [#allocation13], 4
          %s679 = int_to_ptr.vmem [resolvable:$true] %s678
          %681 = dma.hbm_to_vmem [thread:$0]  %s11, 16, %s679, [#allocation12]
        $region56: #{tpu_custom_call.1} parent=11 // pred_fallthru
          _
        // Predicated region
        $region57: #{tpu_custom_call.1} parent=11 // pred_check
          %p682 = pneg %p319
        $region58: #{tpu_custom_call.1} parent=11 // pred_check_branch
          %684 = sbr.rel (%p682) target = $region60
        $region59: #{tpu_custom_call.1} parent=11 // pred_region
          %s686 = ssub.s32 16, 16
          %687 = vsyncadd [#allocation15], %s686
          %s689 = sshll.u32 [#allocation14], 4
          %s690 = int_to_ptr.vmem [resolvable:$true] %s689
          %692 = dma.hbm_to_vmem [thread:$0]  %s12, 16, %s690, [#allocation15]
        $region60: #{tpu_custom_call.1} parent=11 // pred_fallthru
          _
        // Predicated region
        $region61: #{tpu_custom_call.1} parent=11 // pred_check
          %p693 = pneg %p340
        $region62: #{tpu_custom_call.1} parent=11 // pred_check_branch
          %695 = sbr.rel (%p693) target = $region64
        $region63: #{tpu_custom_call.1} parent=11 // pred_region
          _
        $region64: #{tpu_custom_call.1} parent=11 // pred_fallthru
          _
        // Predicated region
        $region65: #{tpu_custom_call.1} parent=11 // pred_check
          %p696 = pneg %p361
        $region66: #{tpu_custom_call.1} parent=11 // pred_check_branch
          %698 = sbr.rel (%p696) target = $region68
        $region67: #{tpu_custom_call.1} parent=11 // pred_region
          %s700 = ssub.s32 512, 512
          %701 = vsyncadd [#allocation15], %s700
          %s702 = sshll.u32 [#allocation16], 4
          %s703 = int_to_ptr.vmem [resolvable:$true] %s702
          %708 = dma.hbm_to_vmem [thread:$0]  %s14, 512, %s703, [#allocation15], 128, 128, 8
        $region68: #{tpu_custom_call.1} parent=11 // pred_fallthru
          _
        // Predicated region
        $region69: #{tpu_custom_call.1} parent=11 // pred_check
          %p709 = pneg %p382
        $region70: #{tpu_custom_call.1} parent=11 // pred_check_branch
          %711 = sbr.rel (%p709) target = $region72
        $region71: #{tpu_custom_call.1} parent=11 // pred_region
          %s713 = ssub.s32 512, 512
          %714 = vsyncadd [#allocation18], %s713
          %s715 = sshll.u32 [#allocation17], 4
          %s716 = int_to_ptr.vmem [resolvable:$true] %s715
          %721 = dma.hbm_to_vmem [thread:$0]  %s15, 512, %s716, [#allocation18], 128, 128, 8
        $region72: #{tpu_custom_call.1} parent=11 // pred_fallthru
          _
        // Predicated region
        $region73: #{tpu_custom_call.1} parent=11 // pred_check
          %p722 = pneg %p403
        $region74: #{tpu_custom_call.1} parent=11 // pred_check_branch
          %724 = sbr.rel (%p722) target = $region76
        $region75: #{tpu_custom_call.1} parent=11 // pred_region
          %s726 = ssub.s32 256, 256
          %727 = vsyncadd [#allocation18], %s726
          %s728 = sshll.u32 [#allocation19], 4
          %s729 = int_to_ptr.vmem [resolvable:$true] %s728
          %734 = dma.hbm_to_vmem [thread:$0]  %s16, 256, %s729, [#allocation18], 128, 128, 8
        $region76: #{tpu_custom_call.1} parent=11 // pred_fallthru
          _
        // Predicated region
        $region77: #{tpu_custom_call.1} parent=11 // pred_check
          %p735 = pneg %p424
        $region78: #{tpu_custom_call.1} parent=11 // pred_check_branch
          %737 = sbr.rel (%p735) target = $region80
        $region79: #{tpu_custom_call.1} parent=11 // pred_region
          %s739 = ssub.s32 256, 256
          %740 = vsyncadd [#allocation21], %s739
          %s741 = sshll.u32 [#allocation20], 4
          %s742 = int_to_ptr.vmem [resolvable:$true] %s741
          %747 = dma.hbm_to_vmem [thread:$0]  %s17, 256, %s742, [#allocation21], 128, 128, 8
        $region80: #{tpu_custom_call.1} parent=11 // pred_fallthru
          _
        // Predicated region
        $region81: #{tpu_custom_call.1} parent=11 // pred_check
          %p748 = pneg %p445
        $region82: #{tpu_custom_call.1} parent=11 // pred_check_branch
          %750 = sbr.rel (%p748) target = $region84
        $region83: #{tpu_custom_call.1} parent=11 // pred_region
          %s752 = ssub.s32 256, 256
          %753 = vsyncadd [#allocation21], %s752
          %s754 = sshll.u32 [#allocation22], 4
          %s755 = int_to_ptr.vmem [resolvable:$true] %s754
          %760 = dma.hbm_to_vmem [thread:$0]  %s18, 256, %s755, [#allocation21], 128, 128, 8
        $region84: #{tpu_custom_call.1} parent=11 // pred_fallthru
          _
        // Predicated region
        $region85: #{tpu_custom_call.1} parent=11 // pred_check
          %p761 = pneg %p466
        $region86: #{tpu_custom_call.1} parent=11 // pred_check_branch
          %763 = sbr.rel (%p761) target = $region88
        $region87: #{tpu_custom_call.1} parent=11 // pred_region
          %s765 = ssub.s32 256, 256
          %766 = vsyncadd [#allocation24], %s765
          %s767 = sshll.u32 [#allocation23], 4
          %s768 = int_to_ptr.vmem [resolvable:$true] %s767
          %773 = dma.hbm_to_vmem [thread:$0]  %s19, 256, %s768, [#allocation24], 128, 128, 8
        $region88: #{tpu_custom_call.1} parent=11 // pred_fallthru
          _
        // Predicated region
        $region89: #{tpu_custom_call.1} parent=11 // pred_check
          %p774 = pneg %p487
        $region90: #{tpu_custom_call.1} parent=11 // pred_check_branch
          %776 = sbr.rel (%p774) target = $region92
        $region91: #{tpu_custom_call.1} parent=11 // pred_region
          _
        $region92: #{tpu_custom_call.1} parent=11 // pred_fallthru
          _
        // Predicated region
        $region93: #{tpu_custom_call.1} parent=11 // pred_check
          %p777 = pneg %p508
        $region94: #{tpu_custom_call.1} parent=11 // pred_check_branch
          %779 = sbr.rel (%p777) target = $region96
        $region95: #{tpu_custom_call.1} parent=11 // pred_region
          %s781 = ssub.s32 256, 256
          %782 = vsyncadd [#allocation24], %s781
          %s783 = sshll.u32 [#allocation25], 4
          %s784 = int_to_ptr.vmem [resolvable:$true] %s783
          %789 = dma.hbm_to_vmem [thread:$0]  %s21, 256, %s784, [#allocation24], 128, 128, 8
        $region96: #{tpu_custom_call.1} parent=11 // pred_fallthru
          _
        // Predicated region
        $region97: #{tpu_custom_call.1} parent=11 // pred_check
          %p790 = pneg %p529
        $region98: #{tpu_custom_call.1} parent=11 // pred_check_branch
          %792 = sbr.rel (%p790) target = $region100
        $region99: #{tpu_custom_call.1} parent=11 // pred_region
          _
        $region100: #{tpu_custom_call.1} parent=11 // pred_fallthru
          _
        // Predicated region
        $region101: #{tpu_custom_call.1} parent=11 // pred_check
          %p793 = pneg %p550
        $region102: #{tpu_custom_call.1} parent=11 // pred_check_branch
          %795 = sbr.rel (%p793) target = $region104
        $region103: #{tpu_custom_call.1} parent=11 // pred_region
          _
        $region104: #{tpu_custom_call.1} parent=11 // pred_fallthru
          _
      $region12: #{tpu_custom_call.1} parent=5 // pred_fallthru
        _
      %p796 = scmp.lt.s32.totalorder %s41, 2
      // Predicated region
      $region105: #{tpu_custom_call.1} parent=5 // pred_check
        %p797 = pneg %p796
      $region106: #{tpu_custom_call.1} parent=5 // pred_check_branch
        %799 = sbr.rel (%p797) target = $region108
      $region107: #{tpu_custom_call.1} parent=5 // pred_region
        // Predicated region
        $region109: #{tpu_custom_call.1} parent=107 // pred_check
          %p800 = pneg %p61
        $region110: #{tpu_custom_call.1} parent=107 // pred_check_branch
          %802 = sbr.rel (%p800) target = $region112
        $region111: #{tpu_custom_call.1} parent=107 // pred_region
          %p803 = scmp.lt.s32.totalorder %s41, 1
          %s804 = scalar_select %p803, %s41, 1
          %s805 = smul.addr %s804, 4
          %s806 = smul.addr %s805, 8
          %s807 = scalar_lea.vmem %s0, %s806
        $region112: #{tpu_custom_call.1} parent=107 // pred_fallthru
          _
      $region108: #{tpu_custom_call.1} parent=5 // pred_fallthru
        _
      %p808 = scmp.le.s32.totalorder 1, %s41
      %p809 = scmp.lt.s32.totalorder %s41, 3
      %p810 = pnand %p808, %p809
      %p811 = pneg %p810
      // Predicated region
      $region113: #{tpu_custom_call.1} parent=5 // pred_check
        _
      $region114: #{tpu_custom_call.1} parent=5 // pred_check_branch
        %813 = sbr.rel (%p810) target = $region116
      $region115: #{tpu_custom_call.1} parent=5 // pred_region
        %s814 = ssub.s32 %s41, 1
        // Predicated region
        $region117: #{tpu_custom_call.1} parent=115 // pred_check
          %p815 = pneg %p109
        $region118: #{tpu_custom_call.1} parent=115 // pred_check_branch
          %817 = sbr.rel (%p815) target = $region120
        $region119: #{tpu_custom_call.1} parent=115 // pred_region
          %818 = dma.done [#allocation3], 16
        $region120: #{tpu_custom_call.1} parent=115 // pred_fallthru
          _
        // Predicated region
        $region121: #{tpu_custom_call.1} parent=115 // pred_check
          %p819 = pneg %p151
        $region122: #{tpu_custom_call.1} parent=115 // pred_check_branch
          %821 = sbr.rel (%p819) target = $region124
        $region123: #{tpu_custom_call.1} parent=115 // pred_region
          %822 = dma.done [#allocation6], 16
        $region124: #{tpu_custom_call.1} parent=115 // pred_fallthru
          _
        // Predicated region
        $region125: #{tpu_custom_call.1} parent=115 // pred_check
          %p823 = pneg %p193
        $region126: #{tpu_custom_call.1} parent=115 // pred_check_branch
          %825 = sbr.rel (%p823) target = $region128
        $region127: #{tpu_custom_call.1} parent=115 // pred_region
          %826 = dma.done [#allocation6], 16
        $region128: #{tpu_custom_call.1} parent=115 // pred_fallthru
          _
        // Predicated region
        $region129: #{tpu_custom_call.1} parent=115 // pred_check
          %p827 = pneg %p235
        $region130: #{tpu_custom_call.1} parent=115 // pred_check_branch
          %829 = sbr.rel (%p827) target = $region132
        $region131: #{tpu_custom_call.1} parent=115 // pred_region
          %830 = dma.done [#allocation9], 16
        $region132: #{tpu_custom_call.1} parent=115 // pred_fallthru
          _
        // Predicated region
        $region133: #{tpu_custom_call.1} parent=115 // pred_check
          %p831 = pneg %p256
        $region134: #{tpu_custom_call.1} parent=115 // pred_check_branch
          %833 = sbr.rel (%p831) target = $region136
        $region135: #{tpu_custom_call.1} parent=115 // pred_region
          %834 = dma.done [#allocation9], 512
        $region136: #{tpu_custom_call.1} parent=115 // pred_fallthru
          _
        // Predicated region
        $region137: #{tpu_custom_call.1} parent=115 // pred_check
          %p835 = pneg %p277
        $region138: #{tpu_custom_call.1} parent=115 // pred_check_branch
          %837 = sbr.rel (%p835) target = $region140
        $region139: #{tpu_custom_call.1} parent=115 // pred_region
          %838 = dma.done [#allocation12], 16
        $region140: #{tpu_custom_call.1} parent=115 // pred_fallthru
          _
        // Predicated region
        $region141: #{tpu_custom_call.1} parent=115 // pred_check
          %p839 = pneg %p298
        $region142: #{tpu_custom_call.1} parent=115 // pred_check_branch
          %841 = sbr.rel (%p839) target = $region144
        $region143: #{tpu_custom_call.1} parent=115 // pred_region
          %842 = dma.done [#allocation12], 16
        $region144: #{tpu_custom_call.1} parent=115 // pred_fallthru
          _
        // Predicated region
        $region145: #{tpu_custom_call.1} parent=115 // pred_check
          %p843 = pneg %p319
        $region146: #{tpu_custom_call.1} parent=115 // pred_check_branch
          %845 = sbr.rel (%p843) target = $region148
        $region147: #{tpu_custom_call.1} parent=115 // pred_region
          %846 = dma.done [#allocation15], 16
        $region148: #{tpu_custom_call.1} parent=115 // pred_fallthru
          _
        // Predicated region
        $region149: #{tpu_custom_call.1} parent=115 // pred_check
          %p847 = pneg %p361
        $region150: #{tpu_custom_call.1} parent=115 // pred_check_branch
          %849 = sbr.rel (%p847) target = $region152
        $region151: #{tpu_custom_call.1} parent=115 // pred_region
          %850 = dma.done [#allocation15], 512
        $region152: #{tpu_custom_call.1} parent=115 // pred_fallthru
          _
        // Predicated region
        $region153: #{tpu_custom_call.1} parent=115 // pred_check
          %p851 = pneg %p382
        $region154: #{tpu_custom_call.1} parent=115 // pred_check_branch
          %853 = sbr.rel (%p851) target = $region156
        $region155: #{tpu_custom_call.1} parent=115 // pred_region
          %854 = dma.done [#allocation18], 512
        $region156: #{tpu_custom_call.1} parent=115 // pred_fallthru
          _
        // Predicated region
        $region157: #{tpu_custom_call.1} parent=115 // pred_check
          %p855 = pneg %p403
        $region158: #{tpu_custom_call.1} parent=115 // pred_check_branch
          %857 = sbr.rel (%p855) target = $region160
        $region159: #{tpu_custom_call.1} parent=115 // pred_region
          %858 = dma.done [#allocation18], 256
        $region160: #{tpu_custom_call.1} parent=115 // pred_fallthru
          _
        // Predicated region
        $region161: #{tpu_custom_call.1} parent=115 // pred_check
          %p859 = pneg %p424
        $region162: #{tpu_custom_call.1} parent=115 // pred_check_branch
          %861 = sbr.rel (%p859) target = $region164
        $region163: #{tpu_custom_call.1} parent=115 // pred_region
          %862 = dma.done [#allocation21], 256
        $region164: #{tpu_custom_call.1} parent=115 // pred_fallthru
          _
        // Predicated region
        $region165: #{tpu_custom_call.1} parent=115 // pred_check
          %p863 = pneg %p445
        $region166: #{tpu_custom_call.1} parent=115 // pred_check_branch
          %865 = sbr.rel (%p863) target = $region168
        $region167: #{tpu_custom_call.1} parent=115 // pred_region
          %866 = dma.done [#allocation21], 256
        $region168: #{tpu_custom_call.1} parent=115 // pred_fallthru
          _
        // Predicated region
        $region169: #{tpu_custom_call.1} parent=115 // pred_check
          %p867 = pneg %p466
        $region170: #{tpu_custom_call.1} parent=115 // pred_check_branch
          %869 = sbr.rel (%p867) target = $region172
        $region171: #{tpu_custom_call.1} parent=115 // pred_region
          %870 = dma.done [#allocation24], 256
        $region172: #{tpu_custom_call.1} parent=115 // pred_fallthru
          _
        // Predicated region
        $region173: #{tpu_custom_call.1} parent=115 // pred_check
          %p871 = pneg %p508
        $region174: #{tpu_custom_call.1} parent=115 // pred_check_branch
          %873 = sbr.rel (%p871) target = $region176
        $region175: #{tpu_custom_call.1} parent=115 // pred_region
          %874 = dma.done [#allocation24], 256
        $region176: #{tpu_custom_call.1} parent=115 // pred_fallthru
          _
        %p875 = scmp.lt.s32.totalorder %s46, 1
        %s876 = scalar_select %p875, %s46, 1
        %s877 = smul.addr %s876, 4
        %s878 = smul.addr %s877, 8
        %s879 = scalar_lea.vmem %s0, %s878
        %p880 = pneg %p67
        %p881 = pneg %p64
        %p882 = pneg %p88
        %p883 = pneg %p85
        %p884 = pneg %p109
        %p885 = pneg %p106
        %p886 = pneg %p130
        %p887 = pneg %p127
        %p888 = pneg %p151
        %p889 = pneg %p148
        %p890 = pneg %p172
        %p891 = pneg %p169
        %p892 = pneg %p193
        %p893 = pneg %p190
        %p894 = pneg %p214
        %p895 = pneg %p211
        %p896 = pneg %p235
        %p897 = pneg %p232
        %p898 = pneg %p256
        %p899 = pneg %p253
        %p900 = pneg %p277
        %p901 = pneg %p274
        %p902 = pneg %p298
        %p903 = pneg %p295
        %p904 = pneg %p319
        %p905 = pneg %p316
        %p906 = pneg %p340
        %p907 = pneg %p337
        %p908 = pneg %p361
        %p909 = pneg %p358
        %p910 = pneg %p382
        %p911 = pneg %p379
        %p912 = pneg %p403
        %p913 = pneg %p400
        %p914 = pneg %p424
        %p915 = pneg %p421
        %p916 = pneg %p445
        %p917 = pneg %p442
        %p918 = pneg %p466
        %p919 = pneg %p463
        %p920 = pneg %p487
        %p921 = pneg %p484
        %p922 = pneg %p508
        %p923 = pneg %p505
        %p924 = pneg %p529
        %p925 = pneg %p526
        %p926 = pneg %p550
        %p927 = pneg %p547
        %p928 = pneg %p576
        %p929 = pneg %p573
        %s930 = sand.u32 %s563, 1
        %s931 = scalar_lea.sflag [#allocation4], %s930
        %s932 = sand.u32 %s563, 1
        %s933 = smul.addr %s932, 16
        %s934 = scalar_lea.vmem [#allocation26], %s933
        %p935 = scmp.lt.s32.totalorder %s46, 1
        %s936 = scalar_select %p935, %s46, 1
        %s937 = smul.addr %s936, 4
        %s938 = smul.addr %s937, 8
        %s939 = scalar_lea.vmem %s0, %s938
        %v940 = vld [vmem:[%s939] sm:$0xff]
        %v941 = vld [vmem:[%s939 + $0x8] sm:$0xff]
        %v942 = vld [vmem:[%s939 + $0x10] sm:$0xff]
        %v943 = vld [vmem:[%s939 + $0x18] sm:$0xff]
        %v944 = vld [vmem:[%s1] sm:$0xff]
        %v945 = vld [vmem:[%s1 + $0x8] sm:$0xff]
        %v946 = vld [vmem:[%s1 + $0x10] sm:$0xff]
        %v947 = vld [vmem:[%s1 + $0x18] sm:$0xff]
        %v948 = vld [vmem:[#allocation2] sm:$0x1]
        %v949 = vld [vmem:[%s3] sm:$0xff]
        %v950 = vld [vmem:[%s3 + $0x8] sm:$0xff]
        %v951 = vld [vmem:[%s3 + $0x10] sm:$0xff]
        %v952 = vld [vmem:[%s3 + $0x18] sm:$0xff]
        %v953 = vld [vmem:[#allocation5] sm:$0x1]
        %v954 = vld [vmem:[#allocation17] sm:$0xff]
        %v955 = vld [vmem:[#allocation17 + $0x8] sm:$0xff]
        %v956 = vld [vmem:[#allocation17 + $0x10] sm:$0xff]
        %v957 = vld [vmem:[#allocation17 + $0x18] sm:$0xff]
        %v959 = vlaneseq
        %v960 = vshrl.u32 %v959, 7
        %v961 = vsub.s32 0, %v960
        %v962 = vrot.slane %v948, %v961
        %vm964 = vcmask 261120
        %v966 = vsel %vm964, %v940, 0
        %v969 = vsel %vm964, %v941, 0
        %v972 = vsel %vm964, %v942, 0
        %v975 = vsel %vm964, %v943, 0
        %977 = vmatprep.subr.mxu0 0.0
        %978 = vmatpush1.msra.mxu0 %v944
        %979 = vmatprep.subr.mxu0 0.0
        %980 = vmatpush1.msra.mxu0 %v945
        %981 = vmatprep.subr.mxu0 0.0
        %982 = vmatpush1.msra.mxu0 %v946
        %983 = vmatprep.subr.mxu0 0.0
        %984 = vmatpush1.msra.mxu0 %v947
        %985 = vmatprep.subr.mxu0 0.0
        %986 = vmatpush1.msra.mxu0 0.0
        %987 = vmatprep.subr.mxu0 0.0
        %988 = vmatpush1.msra.mxu0 0.0
        %989 = vmatprep.subr.mxu0 0.0
        %990 = vmatpush1.msra.mxu0 0.0
        %991 = vmatprep.subr.mxu0 0.0
        %992 = vmatpush1.msra.mxu0 0.0
        %993 = vmatprep.subr.mxu0 0.0
        %994 = vmatpush1.msra.mxu0 0.0
        %995 = vmatprep.subr.mxu0 0.0
        %996 = vmatpush1.msra.mxu0 0.0
        %997 = vmatprep.subr.mxu0 0.0
        %998 = vmatpush1.msra.mxu0 0.0
        %999 = vmatprep.subr.mxu0 0.0
        %1000 = vmatpush1.msra.mxu0 0.0
        %1001 = vmatprep.subr.mxu0 0.0
        %1002 = vmatpush1.msra.mxu0 0.0
        %1003 = vmatprep.subr.mxu0 0.0
        %1004 = vmatpush1.msra.mxu0 0.0
        %1005 = vmatprep.subr.mxu0 0.0
        %1006 = vmatpush1.msra.mxu0 0.0
        %1007 = vmatprep.subr.mxu0 0.0
        %1008 = vmatpush1.msra.mxu0 0.0
        %1009 = vmatprep.subr.mxu0 0.0
        %1010 = vmatpush1.msra.mxu0 0.0
        %1011 = vmatprep.subr.mxu0 0.0
        %1012 = vmatpush1.msra.mxu0 0.0
        %1013 = vmatprep.subr.mxu0 0.0
        %1014 = vmatpush1.msra.mxu0 0.0
        %1015 = vmatprep.subr.mxu0 0.0
        %1016 = vmatpush1.msra.mxu0 0.0
        %1017 = vmatprep.subr.mxu0 0.0
        %1018 = vmatpush1.msra.mxu0 0.0
        %1019 = vmatprep.subr.mxu0 0.0
        %1020 = vmatpush1.msra.mxu0 0.0
        %1021 = vmatprep.subr.mxu0 0.0
        %1022 = vmatpush1.msra.mxu0 0.0
        %1023 = vmatprep.subr.mxu0 0.0
        %1024 = vmatpush1.msra.mxu0 0.0
        %1025 = vmatprep.subr.mxu0 0.0
        %1026 = vmatpush1.msra.mxu0 0.0
        %1027 = vmatprep.subr.mxu0 0.0
        %1028 = vmatpush1.msra.mxu0 0.0
        %1029 = vmatprep.subr.mxu0 0.0
        %1030 = vmatpush1.msra.mxu0 0.0
        %1031 = vmatprep.subr.mxu0 0.0
        %1032 = vmatpush1.msra.mxu0 0.0
        %1033 = vmatprep.subr.mxu0 0.0
        %1034 = vmatpush1.msra.mxu0 0.0
        %1035 = vmatprep.subr.mxu0 0.0
        %1036 = vmatpush1.msra.mxu0 0.0
        %1037 = vmatprep.subr.mxu0 0.0
        %1038 = vmatpush1.msra.mxu0 0.0
        %1039 = vmatprep.subr.mxu0 0.0
        %1040 = vmatpush1.msra.mxu0 0.0
        %1041 = vmatprep.mubr.f32.mxu0 0.0
        %1042 = vmatmul.mubr.f32.gmra.mrb[0].mxu0 %v966
        %v1043 = vpop.f32.mrb[0].mxu0
        %v1044 = vadd.f32 %v962, %v1043
        %v1045 = vpop.f32.mrb[0].mxu0
        %1046 = vmatprep.mubr.f32.mxu0 0.0
        %1047 = vmatmul.mubr.f32.gmra.mrb[0].mxu0 %v969
        %v1048 = vpop.f32.mrb[0].mxu0
        %v1049 = vadd.f32 %v962, %v1048
        %v1050 = vpop.f32.mrb[0].mxu0
        %1051 = vmatprep.mubr.f32.mxu0 0.0
        %1052 = vmatmul.mubr.f32.gmra.mrb[0].mxu0 %v972
        %v1053 = vpop.f32.mrb[0].mxu0
        %v1054 = vadd.f32 %v962, %v1053
        %v1055 = vpop.f32.mrb[0].mxu0
        %1056 = vmatprep.mubr.f32.mxu0 0.0
        %1057 = vmatmul.mubr.f32.gmra.mrb[0].mxu0 %v975
        %v1058 = vpop.f32.mrb[0].mxu0
        %v1059 = vadd.f32 %v962, %v1058
        %v1060 = vpop.f32.mrb[0].mxu0
        %1061 = vdwg.mxu0
        %1066 = vrot.lane.b32.xlu0 %v1044, 96
        %v1067 = vpop.permute.xlu0 %1066
        %1068 = vrot.lane.b32.xlu0 %v1049, 96
        %v1069 = vpop.permute.xlu0 %1068
        %1070 = vrot.lane.b32.xlu0 %v1054, 96
        %v1071 = vpop.permute.xlu0 %1070
        %1072 = vrot.lane.b32.xlu0 %v1059, 96
        %v1073 = vpop.permute.xlu0 %1072
        %vm1074 = vcmask 64512
        %v1075 = vsel %vm1074, %v1044, 0
        %v1077 = vsel %vm1074, %v1049, 0
        %v1079 = vsel %vm1074, %v1054, 0
        %v1081 = vsel %vm1074, %v1059, 0
        %v1083 = vsel %vm1074, %v1067, 0
        %v1085 = vsel %vm1074, %v1069, 0
        %v1087 = vsel %vm1074, %v1071, 0
        %v1089 = vsel %vm1074, %v1073, 0
        %1091 = vmatprep.subr.mxu0 0.0
        %1092 = vmatpush1.xpose.msra.mxu0 %v1083
        %1093 = vmatprep.subr.mxu0 0.0
        %1094 = vmatpush1.xpose.msra.mxu0 %v1085
        %1095 = vmatprep.subr.mxu0 0.0
        %1096 = vmatpush1.xpose.msra.mxu0 %v1087
        %1097 = vmatprep.subr.mxu0 0.0
        %1098 = vmatpush1.xpose.msra.mxu0 %v1089
        %1099 = vmatprep.subr.mxu0 0.0
        %1100 = vmatpush1.xpose.msra.mxu0 0.0
        %1101 = vmatprep.subr.mxu0 0.0
        %1102 = vmatpush1.xpose.msra.mxu0 0.0
        %1103 = vmatprep.subr.mxu0 0.0
        %1104 = vmatpush1.xpose.msra.mxu0 0.0
        %1105 = vmatprep.subr.mxu0 0.0
        %1106 = vmatpush1.xpose.msra.mxu0 0.0
        %1107 = vmatprep.subr.mxu0 0.0
        %1108 = vmatpush1.xpose.msra.mxu0 0.0
        %1109 = vmatprep.subr.mxu0 0.0
        %1110 = vmatpush1.xpose.msra.mxu0 0.0
        %1111 = vmatprep.subr.mxu0 0.0
        %1112 = vmatpush1.xpose.msra.mxu0 0.0
        %1113 = vmatprep.subr.mxu0 0.0
        %1114 = vmatpush1.xpose.msra.mxu0 0.0
        %1115 = vmatprep.subr.mxu0 0.0
        %1116 = vmatpush1.xpose.msra.mxu0 0.0
        %1117 = vmatprep.subr.mxu0 0.0
        %1118 = vmatpush1.xpose.msra.mxu0 0.0
        %1119 = vmatprep.subr.mxu0 0.0
        %1120 = vmatpush1.xpose.msra.mxu0 0.0
        %1121 = vmatprep.subr.mxu0 0.0
        %1122 = vmatpush1.xpose.msra.mxu0 0.0
        %1123 = vmatprep.subr.mxu0 0.0
        %1124 = vmatpush1.xpose.msra.mxu0 0.0
        %1125 = vmatprep.subr.mxu0 0.0
        %1126 = vmatpush1.xpose.msra.mxu0 0.0
        %1127 = vmatprep.subr.mxu0 0.0
        %1128 = vmatpush1.xpose.msra.mxu0 0.0
        %1129 = vmatprep.subr.mxu0 0.0
        %1130 = vmatpush1.xpose.msra.mxu0 0.0
        %1131 = vmatprep.subr.mxu0 0.0
        %1132 = vmatpush1.xpose.msra.mxu0 0.0
        %1133 = vmatprep.subr.mxu0 0.0
        %1134 = vmatpush1.xpose.msra.mxu0 0.0
        %1135 = vmatprep.subr.mxu0 0.0
        %1136 = vmatpush1.xpose.msra.mxu0 0.0
        %1137 = vmatprep.subr.mxu0 0.0
        %1138 = vmatpush1.xpose.msra.mxu0 0.0
        %1139 = vmatprep.subr.mxu0 0.0
        %1140 = vmatpush1.xpose.msra.mxu0 0.0
        %1141 = vmatprep.subr.mxu0 0.0
        %1142 = vmatpush1.xpose.msra.mxu0 0.0
        %1143 = vmatprep.subr.mxu0 0.0
        %1144 = vmatpush1.xpose.msra.mxu0 0.0
        %1145 = vmatprep.subr.mxu0 0.0
        %1146 = vmatpush1.xpose.msra.mxu0 0.0
        %1147 = vmatprep.subr.mxu0 0.0
        %1148 = vmatpush1.xpose.msra.mxu0 0.0
        %1149 = vmatprep.subr.mxu0 0.0
        %1150 = vmatpush1.xpose.msra.mxu0 0.0
        %1151 = vmatprep.subr.mxu0 0.0
        %1152 = vmatpush1.xpose.msra.mxu0 0.0
        %1153 = vmatprep.subr.mxu0 0.0
        %1154 = vmatpush1.xpose.msra.mxu0 0.0
        %1155 = vmatprep.mubr.f32.mxu0 0.0
        %1156 = vmatmul.mubr.f32.gmra.mrb[0].mxu0 %v1075
        %v1157 = vpop.f32.mrb[0].mxu0
        %v1158 = vadd.f32 0.0, %v1157
        %v1159 = vpop.f32.mrb[0].mxu0
        %1160 = vmatprep.mubr.f32.mxu0 0.0
        %1161 = vmatmul.mubr.f32.gmra.mrb[0].mxu0 %v1077
        %v1162 = vpop.f32.mrb[0].mxu0
        %v1163 = vadd.f32 0.0, %v1162
        %v1164 = vpop.f32.mrb[0].mxu0
        %1165 = vmatprep.mubr.f32.mxu0 0.0
        %1166 = vmatmul.mubr.f32.gmra.mrb[0].mxu0 %v1079
        %v1167 = vpop.f32.mrb[0].mxu0
        %v1168 = vadd.f32 0.0, %v1167
        %v1169 = vpop.f32.mrb[0].mxu0
        %1170 = vmatprep.mubr.f32.mxu0 0.0
        %1171 = vmatmul.mubr.f32.gmra.mrb[0].mxu0 %v1081
        %v1172 = vpop.f32.mrb[0].mxu0
        %v1173 = vadd.f32 0.0, %v1172
        %v1174 = vpop.f32.mrb[0].mxu0
        %1175 = vdwg.mxu0
        %v1176 = vmul.f32 %v1158, 0.35355338
        %v1177 = vmul.f32 %v1163, 0.35355338
        %v1178 = vmul.f32 %v1168, 0.35355338
        %v1179 = vmul.f32 %v1173, 0.35355338
        %v1180 = vadd.f32 %v1176, %v954
        %v1181 = vadd.f32 %v1177, %v955
        %v1182 = vadd.f32 %v1178, %v956
        %v1183 = vadd.f32 %v1179, %v957
        %v1184 = vsel %vm964, %v1180, -inf
        %1185 = vmax.xlane.f32.xlu0 %v1184
        %v1186 = vpop.xlane.xlu0 %1185
        %v1187 = vsel %vm964, %v1181, -inf
        %1188 = vmax.xlane.f32.xlu0 %v1187
        %v1189 = vpop.xlane.xlu0 %1188
        %v1190 = vsel %vm964, %v1182, -inf
        %1191 = vmax.xlane.f32.xlu0 %v1190
        %v1192 = vpop.xlane.xlu0 %1191
        %v1193 = vsel %vm964, %v1183, -inf
        %1194 = vmax.xlane.f32.xlu0 %v1193
        %v1195 = vpop.xlane.xlu0 %1194
        %v1196 = vsub.f32 %v1180, %v1186
        %v1197 = vsub.f32 %v1181, %v1189
        %v1198 = vsub.f32 %v1182, %v1192
        %v1199 = vsub.f32 %v1183, %v1195
        %v1200 = vmul.f32 %v1196, 1.442695
        %v1201 = vpow.pop %v1200
        %v1202 = vmul.f32 %v1197, 1.442695
        %v1203 = vpow.pop %v1202
        %v1204 = vmul.f32 %v1198, 1.442695
        %v1205 = vpow.pop %v1204
        %v1206 = vmul.f32 %v1199, 1.442695
        %v1207 = vpow.pop %v1206
        %v1208 = vsel %vm964, %v1201, 0.0
        %1209 = vadd.xlane.f32.xlu0 %v1208
        %v1210 = vpop.xlane.xlu0 %1209
        %v1211 = vsel %vm964, %v1203, 0.0
        %1212 = vadd.xlane.f32.xlu0 %v1211
        %v1213 = vpop.xlane.xlu0 %1212
        %v1214 = vsel %vm964, %v1205, 0.0
        %1215 = vadd.xlane.f32.xlu0 %v1214
        %v1216 = vpop.xlane.xlu0 %1215
        %v1217 = vsel %vm964, %v1207, 0.0
        %1218 = vadd.xlane.f32.xlu0 %v1217
        %v1219 = vpop.xlane.xlu0 %1218
        %v1220 = vrcp.pop %v1210
        %v1221 = vrcp.pop %v1213
        %v1222 = vrcp.pop %v1216
        %v1223 = vrcp.pop %v1219
        %v1224 = vmul.f32 %v1201, %v1220
        %v1225 = vmul.f32 %v1203, %v1221
        %v1226 = vmul.f32 %v1205, %v1222
        %v1227 = vmul.f32 %v1207, %v1223
        %1228 = vrot.lane.b32.xlu0 %v1044, 64
        %v1229 = vpop.permute.xlu0 %1228
        %1230 = vrot.lane.b32.xlu0 %v1049, 64
        %v1231 = vpop.permute.xlu0 %1230
        %1232 = vrot.lane.b32.xlu0 %v1054, 64
        %v1233 = vpop.permute.xlu0 %1232
        %1234 = vrot.lane.b32.xlu0 %v1059, 64
        %v1235 = vpop.permute.xlu0 %1234
        %v1241 = vsel %vm964, %v1224, 0
        %v1244 = vsel %vm964, %v1225, 0
        %v1247 = vsel %vm964, %v1226, 0
        %v1250 = vsel %vm964, %v1227, 0
        %1252 = vmatprep.subr.mxu0 0.0
        %1253 = vmatpush1.msra.mxu0 %v1229
        %1254 = vmatprep.subr.mxu0 0.0
        %1255 = vmatpush1.msra.mxu0 %v1231
        %1256 = vmatprep.subr.mxu0 0.0
        %1257 = vmatpush1.msra.mxu0 %v1233
        %1258 = vmatprep.subr.mxu0 0.0
        %1259 = vmatpush1.msra.mxu0 %v1235
        %1260 = vmatprep.subr.mxu0 0.0
        %1261 = vmatpush1.msra.mxu0 0.0
        %1262 = vmatprep.subr.mxu0 0.0
        %1263 = vmatpush1.msra.mxu0 0.0
        %1264 = vmatprep.subr.mxu0 0.0
        %1265 = vmatpush1.msra.mxu0 0.0
        %1266 = vmatprep.subr.mxu0 0.0
        %1267 = vmatpush1.msra.mxu0 0.0
        %1268 = vmatprep.subr.mxu0 0.0
        %1269 = vmatpush1.msra.mxu0 0.0
        %1270 = vmatprep.subr.mxu0 0.0
        %1271 = vmatpush1.msra.mxu0 0.0
        %1272 = vmatprep.subr.mxu0 0.0
        %1273 = vmatpush1.msra.mxu0 0.0
        %1274 = vmatprep.subr.mxu0 0.0
        %1275 = vmatpush1.msra.mxu0 0.0
        %1276 = vmatprep.subr.mxu0 0.0
        %1277 = vmatpush1.msra.mxu0 0.0
        %1278 = vmatprep.subr.mxu0 0.0
        %1279 = vmatpush1.msra.mxu0 0.0
        %1280 = vmatprep.subr.mxu0 0.0
        %1281 = vmatpush1.msra.mxu0 0.0
        %1282 = vmatprep.subr.mxu0 0.0
        %1283 = vmatpush1.msra.mxu0 0.0
        %1284 = vmatprep.subr.mxu0 0.0
        %1285 = vmatpush1.msra.mxu0 0.0
        %1286 = vmatprep.subr.mxu0 0.0
        %1287 = vmatpush1.msra.mxu0 0.0
        %1288 = vmatprep.subr.mxu0 0.0
        %1289 = vmatpush1.msra.mxu0 0.0
        %1290 = vmatprep.subr.mxu0 0.0
        %1291 = vmatpush1.msra.mxu0 0.0
        %1292 = vmatprep.subr.mxu0 0.0
        %1293 = vmatpush1.msra.mxu0 0.0
        %1294 = vmatprep.subr.mxu0 0.0
        %1295 = vmatpush1.msra.mxu0 0.0
        %1296 = vmatprep.subr.mxu0 0.0
        %1297 = vmatpush1.msra.mxu0 0.0
        %1298 = vmatprep.subr.mxu0 0.0
        %1299 = vmatpush1.msra.mxu0 0.0
        %1300 = vmatprep.subr.mxu0 0.0
        %1301 = vmatpush1.msra.mxu0 0.0
        %1302 = vmatprep.subr.mxu0 0.0
        %1303 = vmatpush1.msra.mxu0 0.0
        %1304 = vmatprep.subr.mxu0 0.0
        %1305 = vmatpush1.msra.mxu0 0.0
        %1306 = vmatprep.subr.mxu0 0.0
        %1307 = vmatpush1.msra.mxu0 0.0
        %1308 = vmatprep.subr.mxu0 0.0
        %1309 = vmatpush1.msra.mxu0 0.0
        %1310 = vmatprep.subr.mxu0 0.0
        %1311 = vmatpush1.msra.mxu0 0.0
        %1312 = vmatprep.subr.mxu0 0.0
        %1313 = vmatpush1.msra.mxu0 0.0
        %1314 = vmatprep.subr.mxu0 0.0
        %1315 = vmatpush1.msra.mxu0 0.0
        %1316 = vmatprep.mubr.f32.mxu0 0.0
        %1317 = vmatmul.mubr.f32.gmra.mrb[0].mxu0 %v1241
        %v1318 = vpop.f32.mrb[0].mxu0
        %v1319 = vadd.f32 0.0, %v1318
        %v1320 = vpop.f32.mrb[0].mxu0
        %1321 = vmatprep.mubr.f32.mxu0 0.0
        %1322 = vmatmul.mubr.f32.gmra.mrb[0].mxu0 %v1244
        %v1323 = vpop.f32.mrb[0].mxu0
        %v1324 = vadd.f32 0.0, %v1323
        %v1325 = vpop.f32.mrb[0].mxu0
        %1326 = vmatprep.mubr.f32.mxu0 0.0
        %1327 = vmatmul.mubr.f32.gmra.mrb[0].mxu0 %v1247
        %v1328 = vpop.f32.mrb[0].mxu0
        %v1329 = vadd.f32 0.0, %v1328
        %v1330 = vpop.f32.mrb[0].mxu0
        %1331 = vmatprep.mubr.f32.mxu0 0.0
        %1332 = vmatmul.mubr.f32.gmra.mrb[0].mxu0 %v1250
        %v1333 = vpop.f32.mrb[0].mxu0
        %v1334 = vadd.f32 0.0, %v1333
        %v1335 = vpop.f32.mrb[0].mxu0
        %1336 = vdwg.mxu0
        %1337 = vrot.lane.b32.xlu0 %v1044, 120
        %v1338 = vpop.permute.xlu0 %1337
        %1339 = vrot.lane.b32.xlu0 %v1049, 120
        %v1340 = vpop.permute.xlu0 %1339
        %1341 = vrot.lane.b32.xlu0 %v1054, 120
        %v1342 = vpop.permute.xlu0 %1341
        %1343 = vrot.lane.b32.xlu0 %v1059, 120
        %v1344 = vpop.permute.xlu0 %1343
        %1345 = vrot.lane.b32.xlu0 %v1044, 88
        %v1346 = vpop.permute.xlu0 %1345
        %1347 = vrot.lane.b32.xlu0 %v1049, 88
        %v1348 = vpop.permute.xlu0 %1347
        %1349 = vrot.lane.b32.xlu0 %v1054, 88
        %v1350 = vpop.permute.xlu0 %1349
        %1351 = vrot.lane.b32.xlu0 %v1059, 88
        %v1352 = vpop.permute.xlu0 %1351
        %v1353 = vsel %vm1074, %v1338, 0
        %v1355 = vsel %vm1074, %v1340, 0
        %v1357 = vsel %vm1074, %v1342, 0
        %v1359 = vsel %vm1074, %v1344, 0
        %v1361 = vsel %vm1074, %v1346, 0
        %v1363 = vsel %vm1074, %v1348, 0
        %v1365 = vsel %vm1074, %v1350, 0
        %v1367 = vsel %vm1074, %v1352, 0
        %1369 = vmatprep.subr.mxu0 0.0
        %1370 = vmatpush1.xpose.msra.mxu0 %v1361
        %1371 = vmatprep.subr.mxu0 0.0
        %1372 = vmatpush1.xpose.msra.mxu0 %v1363
        %1373 = vmatprep.subr.mxu0 0.0
        %1374 = vmatpush1.xpose.msra.mxu0 %v1365
        %1375 = vmatprep.subr.mxu0 0.0
        %1376 = vmatpush1.xpose.msra.mxu0 %v1367
        %1377 = vmatprep.subr.mxu0 0.0
        %1378 = vmatpush1.xpose.msra.mxu0 0.0
        %1379 = vmatprep.subr.mxu0 0.0
        %1380 = vmatpush1.xpose.msra.mxu0 0.0
        %1381 = vmatprep.subr.mxu0 0.0
        %1382 = vmatpush1.xpose.msra.mxu0 0.0
        %1383 = vmatprep.subr.mxu0 0.0
        %1384 = vmatpush1.xpose.msra.mxu0 0.0
        %1385 = vmatprep.subr.mxu0 0.0
        %1386 = vmatpush1.xpose.msra.mxu0 0.0
        %1387 = vmatprep.subr.mxu0 0.0
        %1388 = vmatpush1.xpose.msra.mxu0 0.0
        %1389 = vmatprep.subr.mxu0 0.0
        %1390 = vmatpush1.xpose.msra.mxu0 0.0
        %1391 = vmatprep.subr.mxu0 0.0
        %1392 = vmatpush1.xpose.msra.mxu0 0.0
        %1393 = vmatprep.subr.mxu0 0.0
        %1394 = vmatpush1.xpose.msra.mxu0 0.0
        %1395 = vmatprep.subr.mxu0 0.0
        %1396 = vmatpush1.xpose.msra.mxu0 0.0
        %1397 = vmatprep.subr.mxu0 0.0
        %1398 = vmatpush1.xpose.msra.mxu0 0.0
        %1399 = vmatprep.subr.mxu0 0.0
        %1400 = vmatpush1.xpose.msra.mxu0 0.0
        %1401 = vmatprep.subr.mxu0 0.0
        %1402 = vmatpush1.xpose.msra.mxu0 0.0
        %1403 = vmatprep.subr.mxu0 0.0
        %1404 = vmatpush1.xpose.msra.mxu0 0.0
        %1405 = vmatprep.subr.mxu0 0.0
        %1406 = vmatpush1.xpose.msra.mxu0 0.0
        %1407 = vmatprep.subr.mxu0 0.0
        %1408 = vmatpush1.xpose.msra.mxu0 0.0
        %1409 = vmatprep.subr.mxu0 0.0
        %1410 = vmatpush1.xpose.msra.mxu0 0.0
        %1411 = vmatprep.subr.mxu0 0.0
        %1412 = vmatpush1.xpose.msra.mxu0 0.0
        %1413 = vmatprep.subr.mxu0 0.0
        %1414 = vmatpush1.xpose.msra.mxu0 0.0
        %1415 = vmatprep.subr.mxu0 0.0
        %1416 = vmatpush1.xpose.msra.mxu0 0.0
        %1417 = vmatprep.subr.mxu0 0.0
        %1418 = vmatpush1.xpose.msra.mxu0 0.0
        %1419 = vmatprep.subr.mxu0 0.0
        %1420 = vmatpush1.xpose.msra.mxu0 0.0
        %1421 = vmatprep.subr.mxu0 0.0
        %1422 = vmatpush1.xpose.msra.mxu0 0.0
        %1423 = vmatprep.subr.mxu0 0.0
        %1424 = vmatpush1.xpose.msra.mxu0 0.0
        %1425 = vmatprep.subr.mxu0 0.0
        %1426 = vmatpush1.xpose.msra.mxu0 0.0
        %1427 = vmatprep.subr.mxu0 0.0
        %1428 = vmatpush1.xpose.msra.mxu0 0.0
        %1429 = vmatprep.subr.mxu0 0.0
        %1430 = vmatpush1.xpose.msra.mxu0 0.0
        %1431 = vmatprep.subr.mxu0 0.0
        %1432 = vmatpush1.xpose.msra.mxu0 0.0
        %1433 = vmatprep.mubr.f32.mxu0 0.0
        %1434 = vmatmul.mubr.f32.gmra.mrb[0].mxu0 %v1353
        %v1435 = vpop.f32.mrb[0].mxu0
        %v1436 = vadd.f32 0.0, %v1435
        %v1437 = vpop.f32.mrb[0].mxu0
        %1438 = vmatprep.mubr.f32.mxu0 0.0
        %1439 = vmatmul.mubr.f32.gmra.mrb[0].mxu0 %v1355
        %v1440 = vpop.f32.mrb[0].mxu0
        %v1441 = vadd.f32 0.0, %v1440
        %v1442 = vpop.f32.mrb[0].mxu0
        %1443 = vmatprep.mubr.f32.mxu0 0.0
        %1444 = vmatmul.mubr.f32.gmra.mrb[0].mxu0 %v1357
        %v1445 = vpop.f32.mrb[0].mxu0
        %v1446 = vadd.f32 0.0, %v1445
        %v1447 = vpop.f32.mrb[0].mxu0
        %1448 = vmatprep.mubr.f32.mxu0 0.0
        %1449 = vmatmul.mubr.f32.gmra.mrb[0].mxu0 %v1359
        %v1450 = vpop.f32.mrb[0].mxu0
        %v1451 = vadd.f32 0.0, %v1450
        %v1452 = vpop.f32.mrb[0].mxu0
        %1453 = vdwg.mxu0
        %v1454 = vmul.f32 %v1436, 0.35355338
        %v1455 = vmul.f32 %v1441, 0.35355338
        %v1456 = vmul.f32 %v1446, 0.35355338
        %v1457 = vmul.f32 %v1451, 0.35355338
        %v1458 = vadd.f32 %v1454, %v954
        %v1459 = vadd.f32 %v1455, %v955
        %v1460 = vadd.f32 %v1456, %v956
        %v1461 = vadd.f32 %v1457, %v957
        %v1462 = vsel %vm964, %v1458, -inf
        %1463 = vmax.xlane.f32.xlu0 %v1462
        %v1464 = vpop.xlane.xlu0 %1463
        %v1465 = vsel %vm964, %v1459, -inf
        %1466 = vmax.xlane.f32.xlu0 %v1465
        %v1467 = vpop.xlane.xlu0 %1466
        %v1468 = vsel %vm964, %v1460, -inf
        %1469 = vmax.xlane.f32.xlu0 %v1468
        %v1470 = vpop.xlane.xlu0 %1469
        %v1471 = vsel %vm964, %v1461, -inf
        %1472 = vmax.xlane.f32.xlu0 %v1471
        %v1473 = vpop.xlane.xlu0 %1472
        %v1474 = vsub.f32 %v1458, %v1464
        %v1475 = vsub.f32 %v1459, %v1467
        %v1476 = vsub.f32 %v1460, %v1470
        %v1477 = vsub.f32 %v1461, %v1473
        %v1478 = vmul.f32 %v1474, 1.442695
        %v1479 = vpow.pop %v1478
        %v1480 = vmul.f32 %v1475, 1.442695
        %v1481 = vpow.pop %v1480
        %v1482 = vmul.f32 %v1476, 1.442695
        %v1483 = vpow.pop %v1482
        %v1484 = vmul.f32 %v1477, 1.442695
        %v1485 = vpow.pop %v1484
        %v1486 = vsel %vm964, %v1479, 0.0
        %1487 = vadd.xlane.f32.xlu0 %v1486
        %v1488 = vpop.xlane.xlu0 %1487
        %v1489 = vsel %vm964, %v1481, 0.0
        %1490 = vadd.xlane.f32.xlu0 %v1489
        %v1491 = vpop.xlane.xlu0 %1490
        %v1492 = vsel %vm964, %v1483, 0.0
        %1493 = vadd.xlane.f32.xlu0 %v1492
        %v1494 = vpop.xlane.xlu0 %1493
        %v1495 = vsel %vm964, %v1485, 0.0
        %1496 = vadd.xlane.f32.xlu0 %v1495
        %v1497 = vpop.xlane.xlu0 %1496
        %v1498 = vrcp.pop %v1488
        %v1499 = vrcp.pop %v1491
        %v1500 = vrcp.pop %v1494
        %v1501 = vrcp.pop %v1497
        %v1502 = vmul.f32 %v1479, %v1498
        %v1503 = vmul.f32 %v1481, %v1499
        %v1504 = vmul.f32 %v1483, %v1500
        %v1505 = vmul.f32 %v1485, %v1501
        %1506 = vrot.lane.b32.xlu0 %v1044, 56
        %v1507 = vpop.permute.xlu0 %1506
        %1508 = vrot.lane.b32.xlu0 %v1049, 56
        %v1509 = vpop.permute.xlu0 %1508
        %1510 = vrot.lane.b32.xlu0 %v1054, 56
        %v1511 = vpop.permute.xlu0 %1510
        %1512 = vrot.lane.b32.xlu0 %v1059, 56
        %v1513 = vpop.permute.xlu0 %1512
        %v1519 = vsel %vm964, %v1502, 0
        %v1522 = vsel %vm964, %v1503, 0
        %v1525 = vsel %vm964, %v1504, 0
        %v1528 = vsel %vm964, %v1505, 0
        %1530 = vmatprep.subr.mxu0 0.0
        %1531 = vmatpush1.msra.mxu0 %v1507
        %1532 = vmatprep.subr.mxu0 0.0
        %1533 = vmatpush1.msra.mxu0 %v1509
        %1534 = vmatprep.subr.mxu0 0.0
        %1535 = vmatpush1.msra.mxu0 %v1511
        %1536 = vmatprep.subr.mxu0 0.0
        %1537 = vmatpush1.msra.mxu0 %v1513
        %1538 = vmatprep.subr.mxu0 0.0
        %1539 = vmatpush1.msra.mxu0 0.0
        %1540 = vmatprep.subr.mxu0 0.0
        %1541 = vmatpush1.msra.mxu0 0.0
        %1542 = vmatprep.subr.mxu0 0.0
        %1543 = vmatpush1.msra.mxu0 0.0
        %1544 = vmatprep.subr.mxu0 0.0
        %1545 = vmatpush1.msra.mxu0 0.0
        %1546 = vmatprep.subr.mxu0 0.0
        %1547 = vmatpush1.msra.mxu0 0.0
        %1548 = vmatprep.subr.mxu0 0.0
        %1549 = vmatpush1.msra.mxu0 0.0
        %1550 = vmatprep.subr.mxu0 0.0
        %1551 = vmatpush1.msra.mxu0 0.0
        %1552 = vmatprep.subr.mxu0 0.0
        %1553 = vmatpush1.msra.mxu0 0.0
        %1554 = vmatprep.subr.mxu0 0.0
        %1555 = vmatpush1.msra.mxu0 0.0
        %1556 = vmatprep.subr.mxu0 0.0
        %1557 = vmatpush1.msra.mxu0 0.0
        %1558 = vmatprep.subr.mxu0 0.0
        %1559 = vmatpush1.msra.mxu0 0.0
        %1560 = vmatprep.subr.mxu0 0.0
        %1561 = vmatpush1.msra.mxu0 0.0
        %1562 = vmatprep.subr.mxu0 0.0
        %1563 = vmatpush1.msra.mxu0 0.0
        %1564 = vmatprep.subr.mxu0 0.0
        %1565 = vmatpush1.msra.mxu0 0.0
        %1566 = vmatprep.subr.mxu0 0.0
        %1567 = vmatpush1.msra.mxu0 0.0
        %1568 = vmatprep.subr.mxu0 0.0
        %1569 = vmatpush1.msra.mxu0 0.0
        %1570 = vmatprep.subr.mxu0 0.0
        %1571 = vmatpush1.msra.mxu0 0.0
        %1572 = vmatprep.subr.mxu0 0.0
        %1573 = vmatpush1.msra.mxu0 0.0
        %1574 = vmatprep.subr.mxu0 0.0
        %1575 = vmatpush1.msra.mxu0 0.0
        %1576 = vmatprep.subr.mxu0 0.0
        %1577 = vmatpush1.msra.mxu0 0.0
        %1578 = vmatprep.subr.mxu0 0.0
        %1579 = vmatpush1.msra.mxu0 0.0
        %1580 = vmatprep.subr.mxu0 0.0
        %1581 = vmatpush1.msra.mxu0 0.0
        %1582 = vmatprep.subr.mxu0 0.0
        %1583 = vmatpush1.msra.mxu0 0.0
        %1584 = vmatprep.subr.mxu0 0.0
        %1585 = vmatpush1.msra.mxu0 0.0
        %1586 = vmatprep.subr.mxu0 0.0
        %1587 = vmatpush1.msra.mxu0 0.0
        %1588 = vmatprep.subr.mxu0 0.0
        %1589 = vmatpush1.msra.mxu0 0.0
        %1590 = vmatprep.subr.mxu0 0.0
        %1591 = vmatpush1.msra.mxu0 0.0
        %1592 = vmatprep.subr.mxu0 0.0
        %1593 = vmatpush1.msra.mxu0 0.0
        %1594 = vmatprep.mubr.f32.mxu0 0.0
        %1595 = vmatmul.mubr.f32.gmra.mrb[0].mxu0 %v1519
        %v1596 = vpop.f32.mrb[0].mxu0
        %v1597 = vadd.f32 0.0, %v1596
        %v1598 = vpop.f32.mrb[0].mxu0
        %1599 = vmatprep.mubr.f32.mxu0 0.0
        %1600 = vmatmul.mubr.f32.gmra.mrb[0].mxu0 %v1522
        %v1601 = vpop.f32.mrb[0].mxu0
        %v1602 = vadd.f32 0.0, %v1601
        %v1603 = vpop.f32.mrb[0].mxu0
        %1604 = vmatprep.mubr.f32.mxu0 0.0
        %1605 = vmatmul.mubr.f32.gmra.mrb[0].mxu0 %v1525
        %v1606 = vpop.f32.mrb[0].mxu0
        %v1607 = vadd.f32 0.0, %v1606
        %v1608 = vpop.f32.mrb[0].mxu0
        %1609 = vmatprep.mubr.f32.mxu0 0.0
        %1610 = vmatmul.mubr.f32.gmra.mrb[0].mxu0 %v1528
        %v1611 = vpop.f32.mrb[0].mxu0
        %v1612 = vadd.f32 0.0, %v1611
        %v1613 = vpop.f32.mrb[0].mxu0
        %1614 = vdwg.mxu0
        %v1616 = vsel %vm1074, %v1597, 0
        %v1619 = vsel %vm1074, %v1602, 0
        %v1622 = vsel %vm1074, %v1607, 0
        %v1625 = vsel %vm1074, %v1612, 0
        %1627 = vmatprep.subr.mxu0 0.0
        %1628 = vmatpush1.msra.mxu0 %v950
        %1629 = vmatprep.subr.mxu0 0.0
        %1630 = vmatpush1.msra.mxu0 0.0
        %1631 = vmatprep.subr.mxu0 0.0
        %1632 = vmatpush1.msra.mxu0 0.0
        %1633 = vmatprep.subr.mxu0 0.0
        %1634 = vmatpush1.msra.mxu0 0.0
        %1635 = vmatprep.subr.mxu0 0.0
        %1636 = vmatpush1.msra.mxu0 0.0
        %1637 = vmatprep.subr.mxu0 0.0
        %1638 = vmatpush1.msra.mxu0 0.0
        %1639 = vmatprep.subr.mxu0 0.0
        %1640 = vmatpush1.msra.mxu0 0.0
        %1641 = vmatprep.subr.mxu0 0.0
        %1642 = vmatpush1.msra.mxu0 0.0
        %1643 = vmatprep.subr.mxu0 0.0
        %1644 = vmatpush1.msra.mxu0 0.0
        %1645 = vmatprep.subr.mxu0 0.0
        %1646 = vmatpush1.msra.mxu0 0.0
        %1647 = vmatprep.subr.mxu0 0.0
        %1648 = vmatpush1.msra.mxu0 0.0
        %1649 = vmatprep.subr.mxu0 0.0
        %1650 = vmatpush1.msra.mxu0 0.0
        %1651 = vmatprep.subr.mxu0 0.0
        %1652 = vmatpush1.msra.mxu0 0.0
        %1653 = vmatprep.subr.mxu0 0.0
        %1654 = vmatpush1.msra.mxu0 0.0
        %1655 = vmatprep.subr.mxu0 0.0
        %1656 = vmatpush1.msra.mxu0 0.0
        %1657 = vmatprep.subr.mxu0 0.0
        %1658 = vmatpush1.msra.mxu0 0.0
        %1659 = vmatprep.subr.mxu0 0.0
        %1660 = vmatpush1.msra.mxu0 0.0
        %1661 = vmatprep.subr.mxu0 0.0
        %1662 = vmatpush1.msra.mxu0 0.0
        %1663 = vmatprep.subr.mxu0 0.0
        %1664 = vmatpush1.msra.mxu0 0.0
        %1665 = vmatprep.subr.mxu0 0.0
        %1666 = vmatpush1.msra.mxu0 0.0
        %1667 = vmatprep.subr.mxu0 0.0
        %1668 = vmatpush1.msra.mxu0 0.0
        %1669 = vmatprep.subr.mxu0 0.0
        %1670 = vmatpush1.msra.mxu0 0.0
        %1671 = vmatprep.subr.mxu0 0.0
        %1672 = vmatpush1.msra.mxu0 0.0
        %1673 = vmatprep.subr.mxu0 0.0
        %1674 = vmatpush1.msra.mxu0 0.0
        %1675 = vmatprep.subr.mxu0 0.0
        %1676 = vmatpush1.msra.mxu0 0.0
        %1677 = vmatprep.subr.mxu0 0.0
        %1678 = vmatpush1.msra.mxu0 0.0
        %1679 = vmatprep.subr.mxu0 0.0
        %1680 = vmatpush1.msra.mxu0 0.0
        %1681 = vmatprep.subr.mxu0 0.0
        %1682 = vmatpush1.msra.mxu0 0.0
        %1683 = vmatprep.subr.mxu0 0.0
        %1684 = vmatpush1.msra.mxu0 0.0
        %1685 = vmatprep.subr.mxu0 0.0
        %1686 = vmatpush1.msra.mxu0 0.0
        %1687 = vmatprep.subr.mxu0 0.0
        %1688 = vmatpush1.msra.mxu0 0.0
        %1689 = vmatprep.subr.mxu0 0.0
        %1690 = vmatpush1.msra.mxu0 0.0
        %1691 = vmatprep.mubr.f32.mxu0 0.0
        %1692 = vmatmul.mubr.f32.gmra.mrb[0].mxu0 %v1616
        %v1693 = vpop.f32.mrb[0].mxu0
        %v1694 = vadd.f32 0.0, %v1693
        %v1695 = vpop.f32.mrb[0].mxu0
        %1696 = vmatprep.mubr.f32.mxu0 0.0
        %1697 = vmatmul.mubr.f32.gmra.mrb[0].mxu0 %v1619
        %v1698 = vpop.f32.mrb[0].mxu0
        %v1699 = vadd.f32 0.0, %v1698
        %v1700 = vpop.f32.mrb[0].mxu0
        %1701 = vmatprep.mubr.f32.mxu0 0.0
        %1702 = vmatmul.mubr.f32.gmra.mrb[0].mxu0 %v1622
        %v1703 = vpop.f32.mrb[0].mxu0
        %v1704 = vadd.f32 0.0, %v1703
        %v1705 = vpop.f32.mrb[0].mxu0
        %1706 = vmatprep.mubr.f32.mxu0 0.0
        %1707 = vmatmul.mubr.f32.gmra.mrb[0].mxu0 %v1625
        %v1708 = vpop.f32.mrb[0].mxu0
        %v1709 = vadd.f32 0.0, %v1708
        %v1710 = vpop.f32.mrb[0].mxu0
        %1711 = vdwg.mxu0
        %v1713 = vsel %vm1074, %v1319, 0
        %v1716 = vsel %vm1074, %v1324, 0
        %v1719 = vsel %vm1074, %v1329, 0
        %v1722 = vsel %vm1074, %v1334, 0
        %1724 = vmatprep.subr.mxu0 0.0
        %1725 = vmatpush1.msra.mxu0 %v949
        %1726 = vmatprep.subr.mxu0 0.0
        %1727 = vmatpush1.msra.mxu0 0.0
        %1728 = vmatprep.subr.mxu0 0.0
        %1729 = vmatpush1.msra.mxu0 0.0
        %1730 = vmatprep.subr.mxu0 0.0
        %1731 = vmatpush1.msra.mxu0 0.0
        %1732 = vmatprep.subr.mxu0 0.0
        %1733 = vmatpush1.msra.mxu0 0.0
        %1734 = vmatprep.subr.mxu0 0.0
        %1735 = vmatpush1.msra.mxu0 0.0
        %1736 = vmatprep.subr.mxu0 0.0
        %1737 = vmatpush1.msra.mxu0 0.0
        %1738 = vmatprep.subr.mxu0 0.0
        %1739 = vmatpush1.msra.mxu0 0.0
        %1740 = vmatprep.subr.mxu0 0.0
        %1741 = vmatpush1.msra.mxu0 0.0
        %1742 = vmatprep.subr.mxu0 0.0
        %1743 = vmatpush1.msra.mxu0 0.0
        %1744 = vmatprep.subr.mxu0 0.0
        %1745 = vmatpush1.msra.mxu0 0.0
        %1746 = vmatprep.subr.mxu0 0.0
        %1747 = vmatpush1.msra.mxu0 0.0
        %1748 = vmatprep.subr.mxu0 0.0
        %1749 = vmatpush1.msra.mxu0 0.0
        %1750 = vmatprep.subr.mxu0 0.0
        %1751 = vmatpush1.msra.mxu0 0.0
        %1752 = vmatprep.subr.mxu0 0.0
        %1753 = vmatpush1.msra.mxu0 0.0
        %1754 = vmatprep.subr.mxu0 0.0
        %1755 = vmatpush1.msra.mxu0 0.0
        %1756 = vmatprep.subr.mxu0 0.0
        %1757 = vmatpush1.msra.mxu0 0.0
        %1758 = vmatprep.subr.mxu0 0.0
        %1759 = vmatpush1.msra.mxu0 0.0
        %1760 = vmatprep.subr.mxu0 0.0
        %1761 = vmatpush1.msra.mxu0 0.0
        %1762 = vmatprep.subr.mxu0 0.0
        %1763 = vmatpush1.msra.mxu0 0.0
        %1764 = vmatprep.subr.mxu0 0.0
        %1765 = vmatpush1.msra.mxu0 0.0
        %1766 = vmatprep.subr.mxu0 0.0
        %1767 = vmatpush1.msra.mxu0 0.0
        %1768 = vmatprep.subr.mxu0 0.0
        %1769 = vmatpush1.msra.mxu0 0.0
        %1770 = vmatprep.subr.mxu0 0.0
        %1771 = vmatpush1.msra.mxu0 0.0
        %1772 = vmatprep.subr.mxu0 0.0
        %1773 = vmatpush1.msra.mxu0 0.0
        %1774 = vmatprep.subr.mxu0 0.0
        %1775 = vmatpush1.msra.mxu0 0.0
        %1776 = vmatprep.subr.mxu0 0.0
        %1777 = vmatpush1.msra.mxu0 0.0
        %1778 = vmatprep.subr.mxu0 0.0
        %1779 = vmatpush1.msra.mxu0 0.0
        %1780 = vmatprep.subr.mxu0 0.0
        %1781 = vmatpush1.msra.mxu0 0.0
        %1782 = vmatprep.subr.mxu0 0.0
        %1783 = vmatpush1.msra.mxu0 0.0
        %1784 = vmatprep.subr.mxu0 0.0
        %1785 = vmatpush1.msra.mxu0 0.0
        %1786 = vmatprep.subr.mxu0 0.0
        %1787 = vmatpush1.msra.mxu0 0.0
        %1788 = vmatprep.mubr.f32.mxu0 0.0
        %1789 = vmatmul.mubr.f32.gmra.mrb[0].mxu0 %v1713
        %v1790 = vpop.f32.mrb[0].mxu0
        %v1791 = vadd.f32 %v1694, %v1790
        %v1792 = vpop.f32.mrb[0].mxu0
        %1793 = vmatprep.mubr.f32.mxu0 0.0
        %1794 = vmatmul.mubr.f32.gmra.mrb[0].mxu0 %v1716
        %v1795 = vpop.f32.mrb[0].mxu0
        %v1796 = vadd.f32 %v1699, %v1795
        %v1797 = vpop.f32.mrb[0].mxu0
        %1798 = vmatprep.mubr.f32.mxu0 0.0
        %1799 = vmatmul.mubr.f32.gmra.mrb[0].mxu0 %v1719
        %v1800 = vpop.f32.mrb[0].mxu0
        %v1801 = vadd.f32 %v1704, %v1800
        %v1802 = vpop.f32.mrb[0].mxu0
        %1803 = vmatprep.mubr.f32.mxu0 0.0
        %1804 = vmatmul.mubr.f32.gmra.mrb[0].mxu0 %v1722
        %v1805 = vpop.f32.mrb[0].mxu0
        %v1806 = vadd.f32 %v1709, %v1805
        %v1807 = vpop.f32.mrb[0].mxu0
        %1808 = vdwg.mxu0
        %1809 = vrot.lane.b32.xlu0 %v1044, 112
        %v1810 = vpop.permute.xlu0 %1809
        %1811 = vrot.lane.b32.xlu0 %v1049, 112
        %v1812 = vpop.permute.xlu0 %1811
        %1813 = vrot.lane.b32.xlu0 %v1054, 112
        %v1814 = vpop.permute.xlu0 %1813
        %1815 = vrot.lane.b32.xlu0 %v1059, 112
        %v1816 = vpop.permute.xlu0 %1815
        %1817 = vrot.lane.b32.xlu0 %v1044, 80
        %v1818 = vpop.permute.xlu0 %1817
        %1819 = vrot.lane.b32.xlu0 %v1049, 80
        %v1820 = vpop.permute.xlu0 %1819
        %1821 = vrot.lane.b32.xlu0 %v1054, 80
        %v1822 = vpop.permute.xlu0 %1821
        %1823 = vrot.lane.b32.xlu0 %v1059, 80
        %v1824 = vpop.permute.xlu0 %1823
        %v1825 = vsel %vm1074, %v1810, 0
        %v1827 = vsel %vm1074, %v1812, 0
        %v1829 = vsel %vm1074, %v1814, 0
        %v1831 = vsel %vm1074, %v1816, 0
        %v1833 = vsel %vm1074, %v1818, 0
        %v1835 = vsel %vm1074, %v1820, 0
        %v1837 = vsel %vm1074, %v1822, 0
        %v1839 = vsel %vm1074, %v1824, 0
        %1841 = vmatprep.subr.mxu0 0.0
        %1842 = vmatpush1.xpose.msra.mxu0 %v1833
        %1843 = vmatprep.subr.mxu0 0.0
        %1844 = vmatpush1.xpose.msra.mxu0 %v1835
        %1845 = vmatprep.subr.mxu0 0.0
        %1846 = vmatpush1.xpose.msra.mxu0 %v1837
        %1847 = vmatprep.subr.mxu0 0.0
        %1848 = vmatpush1.xpose.msra.mxu0 %v1839
        %1849 = vmatprep.subr.mxu0 0.0
        %1850 = vmatpush1.xpose.msra.mxu0 0.0
        %1851 = vmatprep.subr.mxu0 0.0
        %1852 = vmatpush1.xpose.msra.mxu0 0.0
        %1853 = vmatprep.subr.mxu0 0.0
        %1854 = vmatpush1.xpose.msra.mxu0 0.0
        %1855 = vmatprep.subr.mxu0 0.0
        %1856 = vmatpush1.xpose.msra.mxu0 0.0
        %1857 = vmatprep.subr.mxu0 0.0
        %1858 = vmatpush1.xpose.msra.mxu0 0.0
        %1859 = vmatprep.subr.mxu0 0.0
        %1860 = vmatpush1.xpose.msra.mxu0 0.0
        %1861 = vmatprep.subr.mxu0 0.0
        %1862 = vmatpush1.xpose.msra.mxu0 0.0
        %1863 = vmatprep.subr.mxu0 0.0
        %1864 = vmatpush1.xpose.msra.mxu0 0.0
        %1865 = vmatprep.subr.mxu0 0.0
        %1866 = vmatpush1.xpose.msra.mxu0 0.0
        %1867 = vmatprep.subr.mxu0 0.0
        %1868 = vmatpush1.xpose.msra.mxu0 0.0
        %1869 = vmatprep.subr.mxu0 0.0
        %1870 = vmatpush1.xpose.msra.mxu0 0.0
        %1871 = vmatprep.subr.mxu0 0.0
        %1872 = vmatpush1.xpose.msra.mxu0 0.0
        %1873 = vmatprep.subr.mxu0 0.0
        %1874 = vmatpush1.xpose.msra.mxu0 0.0
        %1875 = vmatprep.subr.mxu0 0.0
        %1876 = vmatpush1.xpose.msra.mxu0 0.0
        %1877 = vmatprep.subr.mxu0 0.0
        %1878 = vmatpush1.xpose.msra.mxu0 0.0
        %1879 = vmatprep.subr.mxu0 0.0
        %1880 = vmatpush1.xpose.msra.mxu0 0.0
        %1881 = vmatprep.subr.mxu0 0.0
        %1882 = vmatpush1.xpose.msra.mxu0 0.0
        %1883 = vmatprep.subr.mxu0 0.0
        %1884 = vmatpush1.xpose.msra.mxu0 0.0
        %1885 = vmatprep.subr.mxu0 0.0
        %1886 = vmatpush1.xpose.msra.mxu0 0.0
        %1887 = vmatprep.subr.mxu0 0.0
        %1888 = vmatpush1.xpose.msra.mxu0 0.0
        %1889 = vmatprep.subr.mxu0 0.0
        %1890 = vmatpush1.xpose.msra.mxu0 0.0
        %1891 = vmatprep.subr.mxu0 0.0
        %1892 = vmatpush1.xpose.msra.mxu0 0.0
        %1893 = vmatprep.subr.mxu0 0.0
        %1894 = vmatpush1.xpose.msra.mxu0 0.0
        %1895 = vmatprep.subr.mxu0 0.0
        %1896 = vmatpush1.xpose.msra.mxu0 0.0
        %1897 = vmatprep.subr.mxu0 0.0
        %1898 = vmatpush1.xpose.msra.mxu0 0.0
        %1899 = vmatprep.subr.mxu0 0.0
        %1900 = vmatpush1.xpose.msra.mxu0 0.0
        %1901 = vmatprep.subr.mxu0 0.0
        %1902 = vmatpush1.xpose.msra.mxu0 0.0
        %1903 = vmatprep.subr.mxu0 0.0
        %1904 = vmatpush1.xpose.msra.mxu0 0.0
        %1905 = vmatprep.mubr.f32.mxu0 0.0
        %1906 = vmatmul.mubr.f32.gmra.mrb[0].mxu0 %v1825
        %v1907 = vpop.f32.mrb[0].mxu0
        %v1908 = vadd.f32 0.0, %v1907
        %v1909 = vpop.f32.mrb[0].mxu0
        %1910 = vmatprep.mubr.f32.mxu0 0.0
        %1911 = vmatmul.mubr.f32.gmra.mrb[0].mxu0 %v1827
        %v1912 = vpop.f32.mrb[0].mxu0
        %v1913 = vadd.f32 0.0, %v1912
        %v1914 = vpop.f32.mrb[0].mxu0
        %1915 = vmatprep.mubr.f32.mxu0 0.0
        %1916 = vmatmul.mubr.f32.gmra.mrb[0].mxu0 %v1829
        %v1917 = vpop.f32.mrb[0].mxu0
        %v1918 = vadd.f32 0.0, %v1917
        %v1919 = vpop.f32.mrb[0].mxu0
        %1920 = vmatprep.mubr.f32.mxu0 0.0
        %1921 = vmatmul.mubr.f32.gmra.mrb[0].mxu0 %v1831
        %v1922 = vpop.f32.mrb[0].mxu0
        %v1923 = vadd.f32 0.0, %v1922
        %v1924 = vpop.f32.mrb[0].mxu0
        %1925 = vdwg.mxu0
        %v1926 = vmul.f32 %v1908, 0.35355338
        %v1927 = vmul.f32 %v1913, 0.35355338
        %v1928 = vmul.f32 %v1918, 0.35355338
        %v1929 = vmul.f32 %v1923, 0.35355338
        %v1930 = vadd.f32 %v1926, %v954
        %v1931 = vadd.f32 %v1927, %v955
        %v1932 = vadd.f32 %v1928, %v956
        %v1933 = vadd.f32 %v1929, %v957
        %v1934 = vsel %vm964, %v1930, -inf
        %1935 = vmax.xlane.f32.xlu0 %v1934
        %v1936 = vpop.xlane.xlu0 %1935
        %v1937 = vsel %vm964, %v1931, -inf
        %1938 = vmax.xlane.f32.xlu0 %v1937
        %v1939 = vpop.xlane.xlu0 %1938
        %v1940 = vsel %vm964, %v1932, -inf
        %1941 = vmax.xlane.f32.xlu0 %v1940
        %v1942 = vpop.xlane.xlu0 %1941
        %v1943 = vsel %vm964, %v1933, -inf
        %1944 = vmax.xlane.f32.xlu0 %v1943
        %v1945 = vpop.xlane.xlu0 %1944
        %v1946 = vsub.f32 %v1930, %v1936
        %v1947 = vsub.f32 %v1931, %v1939
        %v1948 = vsub.f32 %v1932, %v1942
        %v1949 = vsub.f32 %v1933, %v1945
        %v1950 = vmul.f32 %v1946, 1.442695
        %v1951 = vpow.pop %v1950
        %v1952 = vmul.f32 %v1947, 1.442695
        %v1953 = vpow.pop %v1952
        %v1954 = vmul.f32 %v1948, 1.442695
        %v1955 = vpow.pop %v1954
        %v1956 = vmul.f32 %v1949, 1.442695
        %v1957 = vpow.pop %v1956
        %v1958 = vsel %vm964, %v1951, 0.0
        %1959 = vadd.xlane.f32.xlu0 %v1958
        %v1960 = vpop.xlane.xlu0 %1959
        %v1961 = vsel %vm964, %v1953, 0.0
        %1962 = vadd.xlane.f32.xlu0 %v1961
        %v1963 = vpop.xlane.xlu0 %1962
        %v1964 = vsel %vm964, %v1955, 0.0
        %1965 = vadd.xlane.f32.xlu0 %v1964
        %v1966 = vpop.xlane.xlu0 %1965
        %v1967 = vsel %vm964, %v1957, 0.0
        %1968 = vadd.xlane.f32.xlu0 %v1967
        %v1969 = vpop.xlane.xlu0 %1968
        %v1970 = vrcp.pop %v1960
        %v1971 = vrcp.pop %v1963
        %v1972 = vrcp.pop %v1966
        %v1973 = vrcp.pop %v1969
        %v1974 = vmul.f32 %v1951, %v1970
        %v1975 = vmul.f32 %v1953, %v1971
        %v1976 = vmul.f32 %v1955, %v1972
        %v1977 = vmul.f32 %v1957, %v1973
        %1978 = vrot.lane.b32.xlu0 %v1044, 48
        %v1979 = vpop.permute.xlu0 %1978
        %1980 = vrot.lane.b32.xlu0 %v1049, 48
        %v1981 = vpop.permute.xlu0 %1980
        %1982 = vrot.lane.b32.xlu0 %v1054, 48
        %v1983 = vpop.permute.xlu0 %1982
        %1984 = vrot.lane.b32.xlu0 %v1059, 48
        %v1985 = vpop.permute.xlu0 %1984
        %v1991 = vsel %vm964, %v1974, 0
        %v1994 = vsel %vm964, %v1975, 0
        %v1997 = vsel %vm964, %v1976, 0
        %v2000 = vsel %vm964, %v1977, 0
        %2002 = vmatprep.subr.mxu0 0.0
        %2003 = vmatpush1.msra.mxu0 %v1979
        %2004 = vmatprep.subr.mxu0 0.0
        %2005 = vmatpush1.msra.mxu0 %v1981
        %2006 = vmatprep.subr.mxu0 0.0
        %2007 = vmatpush1.msra.mxu0 %v1983
        %2008 = vmatprep.subr.mxu0 0.0
        %2009 = vmatpush1.msra.mxu0 %v1985
        %2010 = vmatprep.subr.mxu0 0.0
        %2011 = vmatpush1.msra.mxu0 0.0
        %2012 = vmatprep.subr.mxu0 0.0
        %2013 = vmatpush1.msra.mxu0 0.0
        %2014 = vmatprep.subr.mxu0 0.0
        %2015 = vmatpush1.msra.mxu0 0.0
        %2016 = vmatprep.subr.mxu0 0.0
        %2017 = vmatpush1.msra.mxu0 0.0
        %2018 = vmatprep.subr.mxu0 0.0
        %2019 = vmatpush1.msra.mxu0 0.0
        %2020 = vmatprep.subr.mxu0 0.0
        %2021 = vmatpush1.msra.mxu0 0.0
        %2022 = vmatprep.subr.mxu0 0.0
        %2023 = vmatpush1.msra.mxu0 0.0
        %2024 = vmatprep.subr.mxu0 0.0
        %2025 = vmatpush1.msra.mxu0 0.0
        %2026 = vmatprep.subr.mxu0 0.0
        %2027 = vmatpush1.msra.mxu0 0.0
        %2028 = vmatprep.subr.mxu0 0.0
        %2029 = vmatpush1.msra.mxu0 0.0
        %2030 = vmatprep.subr.mxu0 0.0
        %2031 = vmatpush1.msra.mxu0 0.0
        %2032 = vmatprep.subr.mxu0 0.0
        %2033 = vmatpush1.msra.mxu0 0.0
        %2034 = vmatprep.subr.mxu0 0.0
        %2035 = vmatpush1.msra.mxu0 0.0
        %2036 = vmatprep.subr.mxu0 0.0
        %2037 = vmatpush1.msra.mxu0 0.0
        %2038 = vmatprep.subr.mxu0 0.0
        %2039 = vmatpush1.msra.mxu0 0.0
        %2040 = vmatprep.subr.mxu0 0.0
        %2041 = vmatpush1.msra.mxu0 0.0
        %2042 = vmatprep.subr.mxu0 0.0
        %2043 = vmatpush1.msra.mxu0 0.0
        %2044 = vmatprep.subr.mxu0 0.0
        %2045 = vmatpush1.msra.mxu0 0.0
        %2046 = vmatprep.subr.mxu0 0.0
        %2047 = vmatpush1.msra.mxu0 0.0
        %2048 = vmatprep.subr.mxu0 0.0
        %2049 = vmatpush1.msra.mxu0 0.0
        %2050 = vmatprep.subr.mxu0 0.0
        %2051 = vmatpush1.msra.mxu0 0.0
        %2052 = vmatprep.subr.mxu0 0.0
        %2053 = vmatpush1.msra.mxu0 0.0
        %2054 = vmatprep.subr.mxu0 0.0
        %2055 = vmatpush1.msra.mxu0 0.0
        %2056 = vmatprep.subr.mxu0 0.0
        %2057 = vmatpush1.msra.mxu0 0.0
        %2058 = vmatprep.subr.mxu0 0.0
        %2059 = vmatpush1.msra.mxu0 0.0
        %2060 = vmatprep.subr.mxu0 0.0
        %2061 = vmatpush1.msra.mxu0 0.0
        %2062 = vmatprep.subr.mxu0 0.0
        %2063 = vmatpush1.msra.mxu0 0.0
        %2064 = vmatprep.subr.mxu0 0.0
        %2065 = vmatpush1.msra.mxu0 0.0
        %2066 = vmatprep.mubr.f32.mxu0 0.0
        %2067 = vmatmul.mubr.f32.gmra.mrb[0].mxu0 %v1991
        %v2068 = vpop.f32.mrb[0].mxu0
        %v2069 = vadd.f32 0.0, %v2068
        %v2070 = vpop.f32.mrb[0].mxu0
        %2071 = vmatprep.mubr.f32.mxu0 0.0
        %2072 = vmatmul.mubr.f32.gmra.mrb[0].mxu0 %v1994
        %v2073 = vpop.f32.mrb[0].mxu0
        %v2074 = vadd.f32 0.0, %v2073
        %v2075 = vpop.f32.mrb[0].mxu0
        %2076 = vmatprep.mubr.f32.mxu0 0.0
        %2077 = vmatmul.mubr.f32.gmra.mrb[0].mxu0 %v1997
        %v2078 = vpop.f32.mrb[0].mxu0
        %v2079 = vadd.f32 0.0, %v2078
        %v2080 = vpop.f32.mrb[0].mxu0
        %2081 = vmatprep.mubr.f32.mxu0 0.0
        %2082 = vmatmul.mubr.f32.gmra.mrb[0].mxu0 %v2000
        %v2083 = vpop.f32.mrb[0].mxu0
        %v2084 = vadd.f32 0.0, %v2083
        %v2085 = vpop.f32.mrb[0].mxu0
        %2086 = vdwg.mxu0
        %v2088 = vsel %vm1074, %v2069, 0
        %v2091 = vsel %vm1074, %v2074, 0
        %v2094 = vsel %vm1074, %v2079, 0
        %v2097 = vsel %vm1074, %v2084, 0
        %2099 = vmatprep.subr.mxu0 0.0
        %2100 = vmatpush1.msra.mxu0 %v951
        %2101 = vmatprep.subr.mxu0 0.0
        %2102 = vmatpush1.msra.mxu0 0.0
        %2103 = vmatprep.subr.mxu0 0.0
        %2104 = vmatpush1.msra.mxu0 0.0
        %2105 = vmatprep.subr.mxu0 0.0
        %2106 = vmatpush1.msra.mxu0 0.0
        %2107 = vmatprep.subr.mxu0 0.0
        %2108 = vmatpush1.msra.mxu0 0.0
        %2109 = vmatprep.subr.mxu0 0.0
        %2110 = vmatpush1.msra.mxu0 0.0
        %2111 = vmatprep.subr.mxu0 0.0
        %2112 = vmatpush1.msra.mxu0 0.0
        %2113 = vmatprep.subr.mxu0 0.0
        %2114 = vmatpush1.msra.mxu0 0.0
        %2115 = vmatprep.subr.mxu0 0.0
        %2116 = vmatpush1.msra.mxu0 0.0
        %2117 = vmatprep.subr.mxu0 0.0
        %2118 = vmatpush1.msra.mxu0 0.0
        %2119 = vmatprep.subr.mxu0 0.0
        %2120 = vmatpush1.msra.mxu0 0.0
        %2121 = vmatprep.subr.mxu0 0.0
        %2122 = vmatpush1.msra.mxu0 0.0
        %2123 = vmatprep.subr.mxu0 0.0
        %2124 = vmatpush1.msra.mxu0 0.0
        %2125 = vmatprep.subr.mxu0 0.0
        %2126 = vmatpush1.msra.mxu0 0.0
        %2127 = vmatprep.subr.mxu0 0.0
        %2128 = vmatpush1.msra.mxu0 0.0
        %2129 = vmatprep.subr.mxu0 0.0
        %2130 = vmatpush1.msra.mxu0 0.0
        %2131 = vmatprep.subr.mxu0 0.0
        %2132 = vmatpush1.msra.mxu0 0.0
        %2133 = vmatprep.subr.mxu0 0.0
        %2134 = vmatpush1.msra.mxu0 0.0
        %2135 = vmatprep.subr.mxu0 0.0
        %2136 = vmatpush1.msra.mxu0 0.0
        %2137 = vmatprep.subr.mxu0 0.0
        %2138 = vmatpush1.msra.mxu0 0.0
        %2139 = vmatprep.subr.mxu0 0.0
        %2140 = vmatpush1.msra.mxu0 0.0
        %2141 = vmatprep.subr.mxu0 0.0
        %2142 = vmatpush1.msra.mxu0 0.0
        %2143 = vmatprep.subr.mxu0 0.0
        %2144 = vmatpush1.msra.mxu0 0.0
        %2145 = vmatprep.subr.mxu0 0.0
        %2146 = vmatpush1.msra.mxu0 0.0
        %2147 = vmatprep.subr.mxu0 0.0
        %2148 = vmatpush1.msra.mxu0 0.0
        %2149 = vmatprep.subr.mxu0 0.0
        %2150 = vmatpush1.msra.mxu0 0.0
        %2151 = vmatprep.subr.mxu0 0.0
        %2152 = vmatpush1.msra.mxu0 0.0
        %2153 = vmatprep.subr.mxu0 0.0
        %2154 = vmatpush1.msra.mxu0 0.0
        %2155 = vmatprep.subr.mxu0 0.0
        %2156 = vmatpush1.msra.mxu0 0.0
        %2157 = vmatprep.subr.mxu0 0.0
        %2158 = vmatpush1.msra.mxu0 0.0
        %2159 = vmatprep.subr.mxu0 0.0
        %2160 = vmatpush1.msra.mxu0 0.0
        %2161 = vmatprep.subr.mxu0 0.0
        %2162 = vmatpush1.msra.mxu0 0.0
        %2163 = vmatprep.mubr.f32.mxu0 0.0
        %2164 = vmatmul.mubr.f32.gmra.mrb[0].mxu0 %v2088
        %v2165 = vpop.f32.mrb[0].mxu0
        %v2166 = vadd.f32 0.0, %v2165
        %v2167 = vpop.f32.mrb[0].mxu0
        %2168 = vmatprep.mubr.f32.mxu0 0.0
        %2169 = vmatmul.mubr.f32.gmra.mrb[0].mxu0 %v2091
        %v2170 = vpop.f32.mrb[0].mxu0
        %v2171 = vadd.f32 0.0, %v2170
        %v2172 = vpop.f32.mrb[0].mxu0
        %2173 = vmatprep.mubr.f32.mxu0 0.0
        %2174 = vmatmul.mubr.f32.gmra.mrb[0].mxu0 %v2094
        %v2175 = vpop.f32.mrb[0].mxu0
        %v2176 = vadd.f32 0.0, %v2175
        %v2177 = vpop.f32.mrb[0].mxu0
        %2178 = vmatprep.mubr.f32.mxu0 0.0
        %2179 = vmatmul.mubr.f32.gmra.mrb[0].mxu0 %v2097
        %v2180 = vpop.f32.mrb[0].mxu0
        %v2181 = vadd.f32 0.0, %v2180
        %v2182 = vpop.f32.mrb[0].mxu0
        %2183 = vdwg.mxu0
        %v2184 = vadd.f32 %v1791, %v2166
        %v2185 = vadd.f32 %v1796, %v2171
        %v2186 = vadd.f32 %v1801, %v2176
        %v2187 = vadd.f32 %v1806, %v2181
        %2188 = vrot.lane.b32.xlu0 %v1044, 104
        %v2189 = vpop.permute.xlu0 %2188
        %2190 = vrot.lane.b32.xlu0 %v1049, 104
        %v2191 = vpop.permute.xlu0 %2190
        %2192 = vrot.lane.b32.xlu0 %v1054, 104
        %v2193 = vpop.permute.xlu0 %2192
        %2194 = vrot.lane.b32.xlu0 %v1059, 104
        %v2195 = vpop.permute.xlu0 %2194
        %2196 = vrot.lane.b32.xlu0 %v1044, 72
        %v2197 = vpop.permute.xlu0 %2196
        %2198 = vrot.lane.b32.xlu0 %v1049, 72
        %v2199 = vpop.permute.xlu0 %2198
        %2200 = vrot.lane.b32.xlu0 %v1054, 72
        %v2201 = vpop.permute.xlu0 %2200
        %2202 = vrot.lane.b32.xlu0 %v1059, 72
        %v2203 = vpop.permute.xlu0 %2202
        %v2204 = vsel %vm1074, %v2189, 0
        %v2206 = vsel %vm1074, %v2191, 0
        %v2208 = vsel %vm1074, %v2193, 0
        %v2210 = vsel %vm1074, %v2195, 0
        %v2212 = vsel %vm1074, %v2197, 0
        %v2214 = vsel %vm1074, %v2199, 0
        %v2216 = vsel %vm1074, %v2201, 0
        %v2218 = vsel %vm1074, %v2203, 0
        %2220 = vmatprep.subr.mxu0 0.0
        %2221 = vmatpush1.xpose.msra.mxu0 %v2212
        %2222 = vmatprep.subr.mxu0 0.0
        %2223 = vmatpush1.xpose.msra.mxu0 %v2214
        %2224 = vmatprep.subr.mxu0 0.0
        %2225 = vmatpush1.xpose.msra.mxu0 %v2216
        %2226 = vmatprep.subr.mxu0 0.0
        %2227 = vmatpush1.xpose.msra.mxu0 %v2218
        %2228 = vmatprep.subr.mxu0 0.0
        %2229 = vmatpush1.xpose.msra.mxu0 0.0
        %2230 = vmatprep.subr.mxu0 0.0
        %2231 = vmatpush1.xpose.msra.mxu0 0.0
        %2232 = vmatprep.subr.mxu0 0.0
        %2233 = vmatpush1.xpose.msra.mxu0 0.0
        %2234 = vmatprep.subr.mxu0 0.0
        %2235 = vmatpush1.xpose.msra.mxu0 0.0
        %2236 = vmatprep.subr.mxu0 0.0
        %2237 = vmatpush1.xpose.msra.mxu0 0.0
        %2238 = vmatprep.subr.mxu0 0.0
        %2239 = vmatpush1.xpose.msra.mxu0 0.0
        %2240 = vmatprep.subr.mxu0 0.0
        %2241 = vmatpush1.xpose.msra.mxu0 0.0
        %2242 = vmatprep.subr.mxu0 0.0
        %2243 = vmatpush1.xpose.msra.mxu0 0.0
        %2244 = vmatprep.subr.mxu0 0.0
        %2245 = vmatpush1.xpose.msra.mxu0 0.0
        %2246 = vmatprep.subr.mxu0 0.0
        %2247 = vmatpush1.xpose.msra.mxu0 0.0
        %2248 = vmatprep.subr.mxu0 0.0
        %2249 = vmatpush1.xpose.msra.mxu0 0.0
        %2250 = vmatprep.subr.mxu0 0.0
        %2251 = vmatpush1.xpose.msra.mxu0 0.0
        %2252 = vmatprep.subr.mxu0 0.0
        %2253 = vmatpush1.xpose.msra.mxu0 0.0
        %2254 = vmatprep.subr.mxu0 0.0
        %2255 = vmatpush1.xpose.msra.mxu0 0.0
        %2256 = vmatprep.subr.mxu0 0.0
        %2257 = vmatpush1.xpose.msra.mxu0 0.0
        %2258 = vmatprep.subr.mxu0 0.0
        %2259 = vmatpush1.xpose.msra.mxu0 0.0
        %2260 = vmatprep.subr.mxu0 0.0
        %2261 = vmatpush1.xpose.msra.mxu0 0.0
        %2262 = vmatprep.subr.mxu0 0.0
        %2263 = vmatpush1.xpose.msra.mxu0 0.0
        %2264 = vmatprep.subr.mxu0 0.0
        %2265 = vmatpush1.xpose.msra.mxu0 0.0
        %2266 = vmatprep.subr.mxu0 0.0
        %2267 = vmatpush1.xpose.msra.mxu0 0.0
        %2268 = vmatprep.subr.mxu0 0.0
        %2269 = vmatpush1.xpose.msra.mxu0 0.0
        %2270 = vmatprep.subr.mxu0 0.0
        %2271 = vmatpush1.xpose.msra.mxu0 0.0
        %2272 = vmatprep.subr.mxu0 0.0
        %2273 = vmatpush1.xpose.msra.mxu0 0.0
        %2274 = vmatprep.subr.mxu0 0.0
        %2275 = vmatpush1.xpose.msra.mxu0 0.0
        %2276 = vmatprep.subr.mxu0 0.0
        %2277 = vmatpush1.xpose.msra.mxu0 0.0
        %2278 = vmatprep.subr.mxu0 0.0
        %2279 = vmatpush1.xpose.msra.mxu0 0.0
        %2280 = vmatprep.subr.mxu0 0.0
        %2281 = vmatpush1.xpose.msra.mxu0 0.0
        %2282 = vmatprep.subr.mxu0 0.0
        %2283 = vmatpush1.xpose.msra.mxu0 0.0
        %2284 = vmatprep.mubr.f32.mxu0 0.0
        %2285 = vmatmul.mubr.f32.gmra.mrb[0].mxu0 %v2204
        %v2286 = vpop.f32.mrb[0].mxu0
        %v2287 = vadd.f32 0.0, %v2286
        %v2288 = vpop.f32.mrb[0].mxu0
        %2289 = vmatprep.mubr.f32.mxu0 0.0
        %2290 = vmatmul.mubr.f32.gmra.mrb[0].mxu0 %v2206
        %v2291 = vpop.f32.mrb[0].mxu0
        %v2292 = vadd.f32 0.0, %v2291
        %v2293 = vpop.f32.mrb[0].mxu0
        %2294 = vmatprep.mubr.f32.mxu0 0.0
        %2295 = vmatmul.mubr.f32.gmra.mrb[0].mxu0 %v2208
        %v2296 = vpop.f32.mrb[0].mxu0
        %v2297 = vadd.f32 0.0, %v2296
        %v2298 = vpop.f32.mrb[0].mxu0
        %2299 = vmatprep.mubr.f32.mxu0 0.0
        %2300 = vmatmul.mubr.f32.gmra.mrb[0].mxu0 %v2210
        %v2301 = vpop.f32.mrb[0].mxu0
        %v2302 = vadd.f32 0.0, %v2301
        %v2303 = vpop.f32.mrb[0].mxu0
        %2304 = vdwg.mxu0
        %v2305 = vmul.f32 %v2287, 0.35355338
        %v2306 = vmul.f32 %v2292, 0.35355338
        %v2307 = vmul.f32 %v2297, 0.35355338
        %v2308 = vmul.f32 %v2302, 0.35355338
        %v2309 = vadd.f32 %v2305, %v954
        %v2310 = vadd.f32 %v2306, %v955
        %v2311 = vadd.f32 %v2307, %v956
        %v2312 = vadd.f32 %v2308, %v957
        %v2313 = vsel %vm964, %v2309, -inf
        %2314 = vmax.xlane.f32.xlu0 %v2313
        %v2315 = vpop.xlane.xlu0 %2314
        %v2316 = vsel %vm964, %v2310, -inf
        %2317 = vmax.xlane.f32.xlu0 %v2316
        %v2318 = vpop.xlane.xlu0 %2317
        %v2319 = vsel %vm964, %v2311, -inf
        %2320 = vmax.xlane.f32.xlu0 %v2319
        %v2321 = vpop.xlane.xlu0 %2320
        %v2322 = vsel %vm964, %v2312, -inf
        %2323 = vmax.xlane.f32.xlu0 %v2322
        %v2324 = vpop.xlane.xlu0 %2323
        %v2325 = vsub.f32 %v2309, %v2315
        %v2326 = vsub.f32 %v2310, %v2318
        %v2327 = vsub.f32 %v2311, %v2321
        %v2328 = vsub.f32 %v2312, %v2324
        %v2329 = vmul.f32 %v2325, 1.442695
        %v2330 = vpow.pop %v2329
        %v2331 = vmul.f32 %v2326, 1.442695
        %v2332 = vpow.pop %v2331
        %v2333 = vmul.f32 %v2327, 1.442695
        %v2334 = vpow.pop %v2333
        %v2335 = vmul.f32 %v2328, 1.442695
        %v2336 = vpow.pop %v2335
        %v2337 = vsel %vm964, %v2330, 0.0
        %2338 = vadd.xlane.f32.xlu0 %v2337
        %v2339 = vpop.xlane.xlu0 %2338
        %v2340 = vsel %vm964, %v2332, 0.0
        %2341 = vadd.xlane.f32.xlu0 %v2340
        %v2342 = vpop.xlane.xlu0 %2341
        %v2343 = vsel %vm964, %v2334, 0.0
        %2344 = vadd.xlane.f32.xlu0 %v2343
        %v2345 = vpop.xlane.xlu0 %2344
        %v2346 = vsel %vm964, %v2336, 0.0
        %2347 = vadd.xlane.f32.xlu0 %v2346
        %v2348 = vpop.xlane.xlu0 %2347
        %v2349 = vrcp.pop %v2339
        %v2350 = vrcp.pop %v2342
        %v2351 = vrcp.pop %v2345
        %v2352 = vrcp.pop %v2348
        %v2353 = vmul.f32 %v2330, %v2349
        %v2354 = vmul.f32 %v2332, %v2350
        %v2355 = vmul.f32 %v2334, %v2351
        %v2356 = vmul.f32 %v2336, %v2352
        %2357 = vrot.lane.b32.xlu0 %v1044, 40
        %v2358 = vpop.permute.xlu0 %2357
        %2359 = vrot.lane.b32.xlu0 %v1049, 40
        %v2360 = vpop.permute.xlu0 %2359
        %2361 = vrot.lane.b32.xlu0 %v1054, 40
        %v2362 = vpop.permute.xlu0 %2361
        %2363 = vrot.lane.b32.xlu0 %v1059, 40
        %v2364 = vpop.permute.xlu0 %2363
        %v2370 = vsel %vm964, %v2353, 0
        %v2373 = vsel %vm964, %v2354, 0
        %v2376 = vsel %vm964, %v2355, 0
        %v2379 = vsel %vm964, %v2356, 0
        %2381 = vmatprep.subr.mxu0 0.0
        %2382 = vmatpush1.msra.mxu0 %v2358
        %2383 = vmatprep.subr.mxu0 0.0
        %2384 = vmatpush1.msra.mxu0 %v2360
        %2385 = vmatprep.subr.mxu0 0.0
        %2386 = vmatpush1.msra.mxu0 %v2362
        %2387 = vmatprep.subr.mxu0 0.0
        %2388 = vmatpush1.msra.mxu0 %v2364
        %2389 = vmatprep.subr.mxu0 0.0
        %2390 = vmatpush1.msra.mxu0 0.0
        %2391 = vmatprep.subr.mxu0 0.0
        %2392 = vmatpush1.msra.mxu0 0.0
        %2393 = vmatprep.subr.mxu0 0.0
        %2394 = vmatpush1.msra.mxu0 0.0
        %2395 = vmatprep.subr.mxu0 0.0
        %2396 = vmatpush1.msra.mxu0 0.0
        %2397 = vmatprep.subr.mxu0 0.0
        %2398 = vmatpush1.msra.mxu0 0.0
        %2399 = vmatprep.subr.mxu0 0.0
        %2400 = vmatpush1.msra.mxu0 0.0
        %2401 = vmatprep.subr.mxu0 0.0
        %2402 = vmatpush1.msra.mxu0 0.0
        %2403 = vmatprep.subr.mxu0 0.0
        %2404 = vmatpush1.msra.mxu0 0.0
        %2405 = vmatprep.subr.mxu0 0.0
        %2406 = vmatpush1.msra.mxu0 0.0
        %2407 = vmatprep.subr.mxu0 0.0
        %2408 = vmatpush1.msra.mxu0 0.0
        %2409 = vmatprep.subr.mxu0 0.0
        %2410 = vmatpush1.msra.mxu0 0.0
        %2411 = vmatprep.subr.mxu0 0.0
        %2412 = vmatpush1.msra.mxu0 0.0
        %2413 = vmatprep.subr.mxu0 0.0
        %2414 = vmatpush1.msra.mxu0 0.0
        %2415 = vmatprep.subr.mxu0 0.0
        %2416 = vmatpush1.msra.mxu0 0.0
        %2417 = vmatprep.subr.mxu0 0.0
        %2418 = vmatpush1.msra.mxu0 0.0
        %2419 = vmatprep.subr.mxu0 0.0
        %2420 = vmatpush1.msra.mxu0 0.0
        %2421 = vmatprep.subr.mxu0 0.0
        %2422 = vmatpush1.msra.mxu0 0.0
        %2423 = vmatprep.subr.mxu0 0.0
        %2424 = vmatpush1.msra.mxu0 0.0
        %2425 = vmatprep.subr.mxu0 0.0
        %2426 = vmatpush1.msra.mxu0 0.0
        %2427 = vmatprep.subr.mxu0 0.0
        %2428 = vmatpush1.msra.mxu0 0.0
        %2429 = vmatprep.subr.mxu0 0.0
        %2430 = vmatpush1.msra.mxu0 0.0
        %2431 = vmatprep.subr.mxu0 0.0
        %2432 = vmatpush1.msra.mxu0 0.0
        %2433 = vmatprep.subr.mxu0 0.0
        %2434 = vmatpush1.msra.mxu0 0.0
        %2435 = vmatprep.subr.mxu0 0.0
        %2436 = vmatpush1.msra.mxu0 0.0
        %2437 = vmatprep.subr.mxu0 0.0
        %2438 = vmatpush1.msra.mxu0 0.0
        %2439 = vmatprep.subr.mxu0 0.0
        %2440 = vmatpush1.msra.mxu0 0.0
        %2441 = vmatprep.subr.mxu0 0.0
        %2442 = vmatpush1.msra.mxu0 0.0
        %2443 = vmatprep.subr.mxu0 0.0
        %2444 = vmatpush1.msra.mxu0 0.0
        %2445 = vmatprep.mubr.f32.mxu0 0.0
        %2446 = vmatmul.mubr.f32.gmra.mrb[0].mxu0 %v2370
        %v2447 = vpop.f32.mrb[0].mxu0
        %v2448 = vadd.f32 0.0, %v2447
        %v2449 = vpop.f32.mrb[0].mxu0
        %2450 = vmatprep.mubr.f32.mxu0 0.0
        %2451 = vmatmul.mubr.f32.gmra.mrb[0].mxu0 %v2373
        %v2452 = vpop.f32.mrb[0].mxu0
        %v2453 = vadd.f32 0.0, %v2452
        %v2454 = vpop.f32.mrb[0].mxu0
        %2455 = vmatprep.mubr.f32.mxu0 0.0
        %2456 = vmatmul.mubr.f32.gmra.mrb[0].mxu0 %v2376
        %v2457 = vpop.f32.mrb[0].mxu0
        %v2458 = vadd.f32 0.0, %v2457
        %v2459 = vpop.f32.mrb[0].mxu0
        %2460 = vmatprep.mubr.f32.mxu0 0.0
        %2461 = vmatmul.mubr.f32.gmra.mrb[0].mxu0 %v2379
        %v2462 = vpop.f32.mrb[0].mxu0
        %v2463 = vadd.f32 0.0, %v2462
        %v2464 = vpop.f32.mrb[0].mxu0
        %2465 = vdwg.mxu0
        %v2467 = vsel %vm1074, %v2448, 0
        %v2470 = vsel %vm1074, %v2453, 0
        %v2473 = vsel %vm1074, %v2458, 0
        %v2476 = vsel %vm1074, %v2463, 0
        %2478 = vmatprep.subr.mxu0 0.0
        %2479 = vmatpush1.msra.mxu0 %v952
        %2480 = vmatprep.subr.mxu0 0.0
        %2481 = vmatpush1.msra.mxu0 0.0
        %2482 = vmatprep.subr.mxu0 0.0
        %2483 = vmatpush1.msra.mxu0 0.0
        %2484 = vmatprep.subr.mxu0 0.0
        %2485 = vmatpush1.msra.mxu0 0.0
        %2486 = vmatprep.subr.mxu0 0.0
        %2487 = vmatpush1.msra.mxu0 0.0
        %2488 = vmatprep.subr.mxu0 0.0
        %2489 = vmatpush1.msra.mxu0 0.0
        %2490 = vmatprep.subr.mxu0 0.0
        %2491 = vmatpush1.msra.mxu0 0.0
        %2492 = vmatprep.subr.mxu0 0.0
        %2493 = vmatpush1.msra.mxu0 0.0
        %2494 = vmatprep.subr.mxu0 0.0
        %2495 = vmatpush1.msra.mxu0 0.0
        %2496 = vmatprep.subr.mxu0 0.0
        %2497 = vmatpush1.msra.mxu0 0.0
        %2498 = vmatprep.subr.mxu0 0.0
        %2499 = vmatpush1.msra.mxu0 0.0
        %2500 = vmatprep.subr.mxu0 0.0
        %2501 = vmatpush1.msra.mxu0 0.0
        %2502 = vmatprep.subr.mxu0 0.0
        %2503 = vmatpush1.msra.mxu0 0.0
        %2504 = vmatprep.subr.mxu0 0.0
        %2505 = vmatpush1.msra.mxu0 0.0
        %2506 = vmatprep.subr.mxu0 0.0
        %2507 = vmatpush1.msra.mxu0 0.0
        %2508 = vmatprep.subr.mxu0 0.0
        %2509 = vmatpush1.msra.mxu0 0.0
        %2510 = vmatprep.subr.mxu0 0.0
        %2511 = vmatpush1.msra.mxu0 0.0
        %2512 = vmatprep.subr.mxu0 0.0
        %2513 = vmatpush1.msra.mxu0 0.0
        %2514 = vmatprep.subr.mxu0 0.0
        %2515 = vmatpush1.msra.mxu0 0.0
        %2516 = vmatprep.subr.mxu0 0.0
        %2517 = vmatpush1.msra.mxu0 0.0
        %2518 = vmatprep.subr.mxu0 0.0
        %2519 = vmatpush1.msra.mxu0 0.0
        %2520 = vmatprep.subr.mxu0 0.0
        %2521 = vmatpush1.msra.mxu0 0.0
        %2522 = vmatprep.subr.mxu0 0.0
        %2523 = vmatpush1.msra.mxu0 0.0
        %2524 = vmatprep.subr.mxu0 0.0
        %2525 = vmatpush1.msra.mxu0 0.0
        %2526 = vmatprep.subr.mxu0 0.0
        %2527 = vmatpush1.msra.mxu0 0.0
        %2528 = vmatprep.subr.mxu0 0.0
        %2529 = vmatpush1.msra.mxu0 0.0
        %2530 = vmatprep.subr.mxu0 0.0
        %2531 = vmatpush1.msra.mxu0 0.0
        %2532 = vmatprep.subr.mxu0 0.0
        %2533 = vmatpush1.msra.mxu0 0.0
        %2534 = vmatprep.subr.mxu0 0.0
        %2535 = vmatpush1.msra.mxu0 0.0
        %2536 = vmatprep.subr.mxu0 0.0
        %2537 = vmatpush1.msra.mxu0 0.0
        %2538 = vmatprep.subr.mxu0 0.0
        %2539 = vmatpush1.msra.mxu0 0.0
        %2540 = vmatprep.subr.mxu0 0.0
        %2541 = vmatpush1.msra.mxu0 0.0
        %2542 = vmatprep.mubr.f32.mxu0 0.0
        %2543 = vmatmul.mubr.f32.gmra.mrb[0].mxu0 %v2467
        %v2544 = vpop.f32.mrb[0].mxu0
        %v2545 = vadd.f32 0.0, %v2544
        %v2546 = vpop.f32.mrb[0].mxu0
        %2547 = vmatprep.mubr.f32.mxu0 0.0
        %2548 = vmatmul.mubr.f32.gmra.mrb[0].mxu0 %v2470
        %v2549 = vpop.f32.mrb[0].mxu0
        %v2550 = vadd.f32 0.0, %v2549
        %v2551 = vpop.f32.mrb[0].mxu0
        %2552 = vmatprep.mubr.f32.mxu0 0.0
        %2553 = vmatmul.mubr.f32.gmra.mrb[0].mxu0 %v2473
        %v2554 = vpop.f32.mrb[0].mxu0
        %v2555 = vadd.f32 0.0, %v2554
        %v2556 = vpop.f32.mrb[0].mxu0
        %2557 = vmatprep.mubr.f32.mxu0 0.0
        %2558 = vmatmul.mubr.f32.gmra.mrb[0].mxu0 %v2476
        %v2559 = vpop.f32.mrb[0].mxu0
        %v2560 = vadd.f32 0.0, %v2559
        %v2561 = vpop.f32.mrb[0].mxu0
        %2562 = vdwg.mxu0
        %v2563 = vadd.f32 %v2184, %v2545
        %v2564 = vadd.f32 %v2185, %v2550
        %v2565 = vadd.f32 %v2186, %v2555
        %v2566 = vadd.f32 %v2187, %v2560
        %v2567 = vadd.f32 %v940, %v2563
        %v2568 = vadd.f32 %v941, %v2564
        %v2569 = vadd.f32 %v942, %v2565
        %v2570 = vadd.f32 %v943, %v2566
        %v2572 = vlaneseq
        %v2573 = vshrl.u32 %v2572, 7
        %v2574 = vsub.s32 0, %v2573
        %v2575 = vrot.slane %v953, %v2574
        %v2577 = vadd.f32 %v2567, %v2575
        %v2578 = vadd.f32 %v2568, %v2575
        %v2579 = vadd.f32 %v2569, %v2575
        %v2580 = vadd.f32 %v2570, %v2575
        %v2581 = vld [vmem:[%s13] sm:$0xff]
        %v2582 = vld [vmem:[%s13 + $0x8] sm:$0xff]
        %v2583 = vld [vmem:[%s13 + $0x10] sm:$0xff]
        %v2584 = vld [vmem:[%s13 + $0x18] sm:$0xff]
        %v2586 = vsel %vm964, %v2581, 0
        %v2589 = vsel %vm964, %v2582, 0
        %v2592 = vsel %vm964, %v2583, 0
        %v2595 = vsel %vm964, %v2584, 0
        %2597 = vmatprep.subr.mxu0 0.0
        %2598 = vmatpush1.msra.mxu0 %v2577
        %2599 = vmatprep.subr.mxu0 0.0
        %2600 = vmatpush1.msra.mxu0 %v2578
        %2601 = vmatprep.subr.mxu0 0.0
        %2602 = vmatpush1.msra.mxu0 %v2579
        %2603 = vmatprep.subr.mxu0 0.0
        %2604 = vmatpush1.msra.mxu0 %v2580
        %2605 = vmatprep.subr.mxu0 0.0
        %2606 = vmatpush1.msra.mxu0 0.0
        %2607 = vmatprep.subr.mxu0 0.0
        %2608 = vmatpush1.msra.mxu0 0.0
        %2609 = vmatprep.subr.mxu0 0.0
        %2610 = vmatpush1.msra.mxu0 0.0
        %2611 = vmatprep.subr.mxu0 0.0
        %2612 = vmatpush1.msra.mxu0 0.0
        %2613 = vmatprep.subr.mxu0 0.0
        %2614 = vmatpush1.msra.mxu0 0.0
        %2615 = vmatprep.subr.mxu0 0.0
        %2616 = vmatpush1.msra.mxu0 0.0
        %2617 = vmatprep.subr.mxu0 0.0
        %2618 = vmatpush1.msra.mxu0 0.0
        %2619 = vmatprep.subr.mxu0 0.0
        %2620 = vmatpush1.msra.mxu0 0.0
        %2621 = vmatprep.subr.mxu0 0.0
        %2622 = vmatpush1.msra.mxu0 0.0
        %2623 = vmatprep.subr.mxu0 0.0
        %2624 = vmatpush1.msra.mxu0 0.0
        %2625 = vmatprep.subr.mxu0 0.0
        %2626 = vmatpush1.msra.mxu0 0.0
        %2627 = vmatprep.subr.mxu0 0.0
        %2628 = vmatpush1.msra.mxu0 0.0
        %2629 = vmatprep.subr.mxu0 0.0
        %2630 = vmatpush1.msra.mxu0 0.0
        %2631 = vmatprep.subr.mxu0 0.0
        %2632 = vmatpush1.msra.mxu0 0.0
        %2633 = vmatprep.subr.mxu0 0.0
        %2634 = vmatpush1.msra.mxu0 0.0
        %2635 = vmatprep.subr.mxu0 0.0
        %2636 = vmatpush1.msra.mxu0 0.0
        %2637 = vmatprep.subr.mxu0 0.0
        %2638 = vmatpush1.msra.mxu0 0.0
        %2639 = vmatprep.subr.mxu0 0.0
        %2640 = vmatpush1.msra.mxu0 0.0
        %2641 = vmatprep.subr.mxu0 0.0
        %2642 = vmatpush1.msra.mxu0 0.0
        %2643 = vmatprep.subr.mxu0 0.0
        %2644 = vmatpush1.msra.mxu0 0.0
        %2645 = vmatprep.subr.mxu0 0.0
        %2646 = vmatpush1.msra.mxu0 0.0
        %2647 = vmatprep.subr.mxu0 0.0
        %2648 = vmatpush1.msra.mxu0 0.0
        %2649 = vmatprep.subr.mxu0 0.0
        %2650 = vmatpush1.msra.mxu0 0.0
        %2651 = vmatprep.subr.mxu0 0.0
        %2652 = vmatpush1.msra.mxu0 0.0
        %2653 = vmatprep.subr.mxu0 0.0
        %2654 = vmatpush1.msra.mxu0 0.0
        %2655 = vmatprep.subr.mxu0 0.0
        %2656 = vmatpush1.msra.mxu0 0.0
        %2657 = vmatprep.subr.mxu0 0.0
        %2658 = vmatpush1.msra.mxu0 0.0
        %2659 = vmatprep.subr.mxu0 0.0
        %2660 = vmatpush1.msra.mxu0 0.0
        %2661 = vmatprep.mubr.f32.mxu0 0.0
        %2662 = vmatmul.mubr.f32.gmra.mrb[0].mxu0 %v2586
        %v2663 = vpop.f32.mrb[0].mxu0
        %v2664 = vadd.f32 0.0, %v2663
        %v2665 = vpop.f32.mrb[0].mxu0
        %2666 = vmatprep.mubr.f32.mxu0 0.0
        %2667 = vmatmul.mubr.f32.gmra.mrb[0].mxu0 %v2589
        %v2668 = vpop.f32.mrb[0].mxu0
        %v2669 = vadd.f32 0.0, %v2668
        %v2670 = vpop.f32.mrb[0].mxu0
        %2671 = vmatprep.mubr.f32.mxu0 0.0
        %2672 = vmatmul.mubr.f32.gmra.mrb[0].mxu0 %v2592
        %v2673 = vpop.f32.mrb[0].mxu0
        %v2674 = vadd.f32 0.0, %v2673
        %v2675 = vpop.f32.mrb[0].mxu0
        %2676 = vmatprep.mubr.f32.mxu0 0.0
        %2677 = vmatmul.mubr.f32.gmra.mrb[0].mxu0 %v2595
        %v2678 = vpop.f32.mrb[0].mxu0
        %v2679 = vadd.f32 0.0, %v2678
        %v2680 = vpop.f32.mrb[0].mxu0
        %2681 = vdwg.mxu0
        %v2682 = vld [vmem:[#allocation16] sm:$0xff]
        %v2683 = vld [vmem:[#allocation16 + $0x8] sm:$0xff]
        %v2684 = vld [vmem:[#allocation16 + $0x10] sm:$0xff]
        %v2685 = vld [vmem:[#allocation16 + $0x18] sm:$0xff]
        %v2687 = vsel %vm964, %v2682, 0
        %v2690 = vsel %vm964, %v2683, 0
        %v2693 = vsel %vm964, %v2684, 0
        %v2696 = vsel %vm964, %v2685, 0
        %2698 = vmatprep.subr.mxu0 0.0
        %2699 = vmatpush1.msra.mxu0 %v2577
        %2700 = vmatprep.subr.mxu0 0.0
        %2701 = vmatpush1.msra.mxu0 %v2578
        %2702 = vmatprep.subr.mxu0 0.0
        %2703 = vmatpush1.msra.mxu0 %v2579
        %2704 = vmatprep.subr.mxu0 0.0
        %2705 = vmatpush1.msra.mxu0 %v2580
        %2706 = vmatprep.subr.mxu0 0.0
        %2707 = vmatpush1.msra.mxu0 0.0
        %2708 = vmatprep.subr.mxu0 0.0
        %2709 = vmatpush1.msra.mxu0 0.0
        %2710 = vmatprep.subr.mxu0 0.0
        %2711 = vmatpush1.msra.mxu0 0.0
        %2712 = vmatprep.subr.mxu0 0.0
        %2713 = vmatpush1.msra.mxu0 0.0
        %2714 = vmatprep.subr.mxu0 0.0
        %2715 = vmatpush1.msra.mxu0 0.0
        %2716 = vmatprep.subr.mxu0 0.0
        %2717 = vmatpush1.msra.mxu0 0.0
        %2718 = vmatprep.subr.mxu0 0.0
        %2719 = vmatpush1.msra.mxu0 0.0
        %2720 = vmatprep.subr.mxu0 0.0
        %2721 = vmatpush1.msra.mxu0 0.0
        %2722 = vmatprep.subr.mxu0 0.0
        %2723 = vmatpush1.msra.mxu0 0.0
        %2724 = vmatprep.subr.mxu0 0.0
        %2725 = vmatpush1.msra.mxu0 0.0
        %2726 = vmatprep.subr.mxu0 0.0
        %2727 = vmatpush1.msra.mxu0 0.0
        %2728 = vmatprep.subr.mxu0 0.0
        %2729 = vmatpush1.msra.mxu0 0.0
        %2730 = vmatprep.subr.mxu0 0.0
        %2731 = vmatpush1.msra.mxu0 0.0
        %2732 = vmatprep.subr.mxu0 0.0
        %2733 = vmatpush1.msra.mxu0 0.0
        %2734 = vmatprep.subr.mxu0 0.0
        %2735 = vmatpush1.msra.mxu0 0.0
        %2736 = vmatprep.subr.mxu0 0.0
        %2737 = vmatpush1.msra.mxu0 0.0
        %2738 = vmatprep.subr.mxu0 0.0
        %2739 = vmatpush1.msra.mxu0 0.0
        %2740 = vmatprep.subr.mxu0 0.0
        %2741 = vmatpush1.msra.mxu0 0.0
        %2742 = vmatprep.subr.mxu0 0.0
        %2743 = vmatpush1.msra.mxu0 0.0
        %2744 = vmatprep.subr.mxu0 0.0
        %2745 = vmatpush1.msra.mxu0 0.0
        %2746 = vmatprep.subr.mxu0 0.0
        %2747 = vmatpush1.msra.mxu0 0.0
        %2748 = vmatprep.subr.mxu0 0.0
        %2749 = vmatpush1.msra.mxu0 0.0
        %2750 = vmatprep.subr.mxu0 0.0
        %2751 = vmatpush1.msra.mxu0 0.0
        %2752 = vmatprep.subr.mxu0 0.0
        %2753 = vmatpush1.msra.mxu0 0.0
        %2754 = vmatprep.subr.mxu0 0.0
        %2755 = vmatpush1.msra.mxu0 0.0
        %2756 = vmatprep.subr.mxu0 0.0
        %2757 = vmatpush1.msra.mxu0 0.0
        %2758 = vmatprep.subr.mxu0 0.0
        %2759 = vmatpush1.msra.mxu0 0.0
        %2760 = vmatprep.subr.mxu0 0.0
        %2761 = vmatpush1.msra.mxu0 0.0
        %2762 = vmatprep.mubr.f32.mxu0 0.0
        %2763 = vmatmul.mubr.f32.gmra.mrb[0].mxu0 %v2687
        %v2764 = vpop.f32.mrb[0].mxu0
        %v2765 = vadd.f32 0.0, %v2764
        %v2766 = vpop.f32.mrb[0].mxu0
        %2767 = vmatprep.mubr.f32.mxu0 0.0
        %2768 = vmatmul.mubr.f32.gmra.mrb[0].mxu0 %v2690
        %v2769 = vpop.f32.mrb[0].mxu0
        %v2770 = vadd.f32 0.0, %v2769
        %v2771 = vpop.f32.mrb[0].mxu0
        %2772 = vmatprep.mubr.f32.mxu0 0.0
        %2773 = vmatmul.mubr.f32.gmra.mrb[0].mxu0 %v2693
        %v2774 = vpop.f32.mrb[0].mxu0
        %v2775 = vadd.f32 0.0, %v2774
        %v2776 = vpop.f32.mrb[0].mxu0
        %2777 = vmatprep.mubr.f32.mxu0 0.0
        %2778 = vmatmul.mubr.f32.gmra.mrb[0].mxu0 %v2696
        %v2779 = vpop.f32.mrb[0].mxu0
        %v2780 = vadd.f32 0.0, %v2779
        %v2781 = vpop.f32.mrb[0].mxu0
        %2782 = vdwg.mxu0
        %2787 = vrot.lane.b32.xlu0 %v2577, 32
        %v2788 = vpop.permute.xlu0 %2787
        %2789 = vrot.lane.b32.xlu0 %v2578, 32
        %v2790 = vpop.permute.xlu0 %2789
        %2791 = vrot.lane.b32.xlu0 %v2579, 32
        %v2792 = vpop.permute.xlu0 %2791
        %2793 = vrot.lane.b32.xlu0 %v2580, 32
        %v2794 = vpop.permute.xlu0 %2793
        %2803 = vrot.lane.b32.xlu0 %v2765, 64
        %v2804 = vpop.permute.xlu0 %2803
        %2805 = vrot.lane.b32.xlu0 %v2770, 64
        %v2806 = vpop.permute.xlu0 %2805
        %2807 = vrot.lane.b32.xlu0 %v2775, 64
        %v2808 = vpop.permute.xlu0 %2807
        %2809 = vrot.lane.b32.xlu0 %v2780, 64
        %v2810 = vpop.permute.xlu0 %2809
        %v2815 = vsel %vm964, %v2664, %v2788
        %v2816 = vsel %vm964, %v2669, %v2790
        %v2817 = vsel %vm964, %v2674, %v2792
        %v2818 = vsel %vm964, %v2679, %v2794
        %vm2819 = vcmask 523264
        %v2820 = vsel %vm2819, %v2815, %v2804
        %v2821 = vsel %vm2819, %v2816, %v2806
        %v2822 = vsel %vm2819, %v2817, %v2808
        %v2823 = vsel %vm2819, %v2818, %v2810
        %v2824 = vld [vmem:[%s5] sm:$0xff]
        %v2825 = vld [vmem:[%s5 + $0x8] sm:$0xff]
        %v2826 = vld [vmem:[%s5 + $0x10] sm:$0xff]
        %v2827 = vld [vmem:[%s5 + $0x18] sm:$0xff]
        %v2828 = vld [vmem:[%s5 + $0x20] sm:$0xff]
        %v2829 = vld [vmem:[%s5 + $0x28] sm:$0xff]
        %v2830 = vld [vmem:[%s5 + $0x30] sm:$0xff]
        %v2831 = vld [vmem:[%s5 + $0x38] sm:$0xff]
        %v2832 = vld [vmem:[%s5 + $0x40] sm:$0xff]
        %v2833 = vld [vmem:[%s5 + $0x48] sm:$0xff]
        %v2834 = vld [vmem:[%s5 + $0x50] sm:$0xff]
        %v2835 = vld [vmem:[%s5 + $0x58] sm:$0xff]
        %v2836 = vld [vmem:[#allocation7] sm:$0x1]
        %v2838 = vlaneseq
        %v2839 = vshrl.u32 %v2838, 7
        %v2840 = vsub.s32 0, %v2839
        %v2841 = vrot.slane %v2836, %v2840
        %vm2843 = vcmask 785408
        %v2845 = vsel %vm2843, %v2820, 0
        %v2848 = vsel %vm2843, %v2821, 0
        %v2851 = vsel %vm2843, %v2822, 0
        %v2854 = vsel %vm2843, %v2823, 0
        %2856 = vmatprep.subr.mxu0 0.0
        %2857 = vmatpush1.msra.mxu0 %v2824
        %2858 = vmatprep.subr.mxu0 0.0
        %2859 = vmatpush1.msra.mxu0 %v2825
        %2860 = vmatprep.subr.mxu0 0.0
        %2861 = vmatpush1.msra.mxu0 %v2826
        %2862 = vmatprep.subr.mxu0 0.0
        %2863 = vmatpush1.msra.mxu0 %v2827
        %2864 = vmatprep.subr.mxu0 0.0
        %2865 = vmatpush1.msra.mxu0 %v2828
        %2866 = vmatprep.subr.mxu0 0.0
        %2867 = vmatpush1.msra.mxu0 %v2829
        %2868 = vmatprep.subr.mxu0 0.0
        %2869 = vmatpush1.msra.mxu0 %v2830
        %2870 = vmatprep.subr.mxu0 0.0
        %2871 = vmatpush1.msra.mxu0 %v2831
        %2872 = vmatprep.subr.mxu0 0.0
        %2873 = vmatpush1.msra.mxu0 %v2832
        %2874 = vmatprep.subr.mxu0 0.0
        %2875 = vmatpush1.msra.mxu0 %v2833
        %2876 = vmatprep.subr.mxu0 0.0
        %2877 = vmatpush1.msra.mxu0 %v2834
        %2878 = vmatprep.subr.mxu0 0.0
        %2879 = vmatpush1.msra.mxu0 %v2835
        %2880 = vmatprep.subr.mxu0 0.0
        %2881 = vmatpush1.msra.mxu0 0.0
        %2882 = vmatprep.subr.mxu0 0.0
        %2883 = vmatpush1.msra.mxu0 0.0
        %2884 = vmatprep.subr.mxu0 0.0
        %2885 = vmatpush1.msra.mxu0 0.0
        %2886 = vmatprep.subr.mxu0 0.0
        %2887 = vmatpush1.msra.mxu0 0.0
        %2888 = vmatprep.subr.mxu0 0.0
        %2889 = vmatpush1.msra.mxu0 0.0
        %2890 = vmatprep.subr.mxu0 0.0
        %2891 = vmatpush1.msra.mxu0 0.0
        %2892 = vmatprep.subr.mxu0 0.0
        %2893 = vmatpush1.msra.mxu0 0.0
        %2894 = vmatprep.subr.mxu0 0.0
        %2895 = vmatpush1.msra.mxu0 0.0
        %2896 = vmatprep.subr.mxu0 0.0
        %2897 = vmatpush1.msra.mxu0 0.0
        %2898 = vmatprep.subr.mxu0 0.0
        %2899 = vmatpush1.msra.mxu0 0.0
        %2900 = vmatprep.subr.mxu0 0.0
        %2901 = vmatpush1.msra.mxu0 0.0
        %2902 = vmatprep.subr.mxu0 0.0
        %2903 = vmatpush1.msra.mxu0 0.0
        %2904 = vmatprep.subr.mxu0 0.0
        %2905 = vmatpush1.msra.mxu0 0.0
        %2906 = vmatprep.subr.mxu0 0.0
        %2907 = vmatpush1.msra.mxu0 0.0
        %2908 = vmatprep.subr.mxu0 0.0
        %2909 = vmatpush1.msra.mxu0 0.0
        %2910 = vmatprep.subr.mxu0 0.0
        %2911 = vmatpush1.msra.mxu0 0.0
        %2912 = vmatprep.subr.mxu0 0.0
        %2913 = vmatpush1.msra.mxu0 0.0
        %2914 = vmatprep.subr.mxu0 0.0
        %2915 = vmatpush1.msra.mxu0 0.0
        %2916 = vmatprep.subr.mxu0 0.0
        %2917 = vmatpush1.msra.mxu0 0.0
        %2918 = vmatprep.subr.mxu0 0.0
        %2919 = vmatpush1.msra.mxu0 0.0
        %2920 = vmatprep.mubr.f32.mxu0 0.0
        %2921 = vmatmul.mubr.f32.gmra.mrb[0].mxu0 %v2845
        %v2922 = vpop.f32.mrb[0].mxu0
        %v2923 = vadd.f32 %v2841, %v2922
        %v2924 = vpop.f32.mrb[0].mxu0
        %2925 = vmatprep.mubr.f32.mxu0 0.0
        %2926 = vmatmul.mubr.f32.gmra.mrb[0].mxu0 %v2848
        %v2927 = vpop.f32.mrb[0].mxu0
        %v2928 = vadd.f32 %v2841, %v2927
        %v2929 = vpop.f32.mrb[0].mxu0
        %2930 = vmatprep.mubr.f32.mxu0 0.0
        %2931 = vmatmul.mubr.f32.gmra.mrb[0].mxu0 %v2851
        %v2932 = vpop.f32.mrb[0].mxu0
        %v2933 = vadd.f32 %v2841, %v2932
        %v2934 = vpop.f32.mrb[0].mxu0
        %2935 = vmatprep.mubr.f32.mxu0 0.0
        %2936 = vmatmul.mubr.f32.gmra.mrb[0].mxu0 %v2854
        %v2937 = vpop.f32.mrb[0].mxu0
        %v2938 = vadd.f32 %v2841, %v2937
        %v2939 = vpop.f32.mrb[0].mxu0
        %2940 = vdwg.mxu0
        %vm2941 = vcmp.gt.f32.partialorder %v2923, 0.0
        %vm2942 = vcmp.gt.f32.partialorder %v2928, 0.0
        %vm2943 = vcmp.gt.f32.partialorder %v2933, 0.0
        %vm2944 = vcmp.gt.f32.partialorder %v2938, 0.0
        %v2945 = vmul.f32 %v2923, 1.442695
        %v2946 = vpow.pop %v2945
        %v2947 = vmul.f32 %v2928, 1.442695
        %v2948 = vpow.pop %v2947
        %v2949 = vmul.f32 %v2933, 1.442695
        %v2950 = vpow.pop %v2949
        %v2951 = vmul.f32 %v2938, 1.442695
        %v2952 = vpow.pop %v2951
        %v2953 = vsub.f32 %v2946, 1.0
        %v2954 = vsub.f32 %v2948, 1.0
        %v2955 = vsub.f32 %v2950, 1.0
        %v2956 = vsub.f32 %v2952, 1.0
        %v2957 = vsel %vm2941, %v2923, %v2953
        %v2958 = vsel %vm2942, %v2928, %v2954
        %v2959 = vsel %vm2943, %v2933, %v2955
        %v2960 = vsel %vm2944, %v2938, %v2956
        %v2961 = vld [vmem:[#allocation20] sm:$0xff]
        %v2962 = vld [vmem:[#allocation20 + $0x8] sm:$0xff]
        %v2964 = vsel %vm964, %v2961, 0
        %v2967 = vsel %vm964, %v2962, 0
        %2969 = vmatprep.subr.mxu0 0.0
        %2970 = vmatpush1.msra.mxu0 %v2957
        %2971 = vmatprep.subr.mxu0 0.0
        %2972 = vmatpush1.msra.mxu0 %v2958
        %2973 = vmatprep.subr.mxu0 0.0
        %2974 = vmatpush1.msra.mxu0 %v2959
        %2975 = vmatprep.subr.mxu0 0.0
        %2976 = vmatpush1.msra.mxu0 %v2960
        %2977 = vmatprep.subr.mxu0 0.0
        %2978 = vmatpush1.msra.mxu0 0.0
        %2979 = vmatprep.subr.mxu0 0.0
        %2980 = vmatpush1.msra.mxu0 0.0
        %2981 = vmatprep.subr.mxu0 0.0
        %2982 = vmatpush1.msra.mxu0 0.0
        %2983 = vmatprep.subr.mxu0 0.0
        %2984 = vmatpush1.msra.mxu0 0.0
        %2985 = vmatprep.subr.mxu0 0.0
        %2986 = vmatpush1.msra.mxu0 0.0
        %2987 = vmatprep.subr.mxu0 0.0
        %2988 = vmatpush1.msra.mxu0 0.0
        %2989 = vmatprep.subr.mxu0 0.0
        %2990 = vmatpush1.msra.mxu0 0.0
        %2991 = vmatprep.subr.mxu0 0.0
        %2992 = vmatpush1.msra.mxu0 0.0
        %2993 = vmatprep.subr.mxu0 0.0
        %2994 = vmatpush1.msra.mxu0 0.0
        %2995 = vmatprep.subr.mxu0 0.0
        %2996 = vmatpush1.msra.mxu0 0.0
        %2997 = vmatprep.subr.mxu0 0.0
        %2998 = vmatpush1.msra.mxu0 0.0
        %2999 = vmatprep.subr.mxu0 0.0
        %3000 = vmatpush1.msra.mxu0 0.0
        %3001 = vmatprep.subr.mxu0 0.0
        %3002 = vmatpush1.msra.mxu0 0.0
        %3003 = vmatprep.subr.mxu0 0.0
        %3004 = vmatpush1.msra.mxu0 0.0
        %3005 = vmatprep.subr.mxu0 0.0
        %3006 = vmatpush1.msra.mxu0 0.0
        %3007 = vmatprep.subr.mxu0 0.0
        %3008 = vmatpush1.msra.mxu0 0.0
        %3009 = vmatprep.subr.mxu0 0.0
        %3010 = vmatpush1.msra.mxu0 0.0
        %3011 = vmatprep.subr.mxu0 0.0
        %3012 = vmatpush1.msra.mxu0 0.0
        %3013 = vmatprep.subr.mxu0 0.0
        %3014 = vmatpush1.msra.mxu0 0.0
        %3015 = vmatprep.subr.mxu0 0.0
        %3016 = vmatpush1.msra.mxu0 0.0
        %3017 = vmatprep.subr.mxu0 0.0
        %3018 = vmatpush1.msra.mxu0 0.0
        %3019 = vmatprep.subr.mxu0 0.0
        %3020 = vmatpush1.msra.mxu0 0.0
        %3021 = vmatprep.subr.mxu0 0.0
        %3022 = vmatpush1.msra.mxu0 0.0
        %3023 = vmatprep.subr.mxu0 0.0
        %3024 = vmatpush1.msra.mxu0 0.0
        %3025 = vmatprep.subr.mxu0 0.0
        %3026 = vmatpush1.msra.mxu0 0.0
        %3027 = vmatprep.subr.mxu0 0.0
        %3028 = vmatpush1.msra.mxu0 0.0
        %3029 = vmatprep.subr.mxu0 0.0
        %3030 = vmatpush1.msra.mxu0 0.0
        %3031 = vmatprep.subr.mxu0 0.0
        %3032 = vmatpush1.msra.mxu0 0.0
        %3033 = vmatprep.mubr.f32.mxu0 0.0
        %3034 = vmatmul.mubr.f32.gmra.mrb[0].mxu0 %v2964
        %v3035 = vpop.f32.mrb[0].mxu0
        %v3036 = vadd.f32 0.0, %v3035
        %v3037 = vpop.f32.mrb[0].mxu0
        %3038 = vmatprep.mubr.f32.mxu0 0.0
        %3039 = vmatmul.mubr.f32.gmra.mrb[0].mxu0 %v2967
        %v3040 = vpop.f32.mrb[0].mxu0
        %v3041 = vadd.f32 0.0, %v3040
        %v3042 = vpop.f32.mrb[0].mxu0
        %3043 = vdwg.mxu0
        %v3044 = vld [vmem:[#allocation22] sm:$0xff]
        %v3045 = vld [vmem:[#allocation22 + $0x8] sm:$0xff]
        %v3047 = vsel %vm964, %v3044, 0
        %v3050 = vsel %vm964, %v3045, 0
        %3052 = vmatprep.subr.mxu0 0.0
        %3053 = vmatpush1.msra.mxu0 %v2957
        %3054 = vmatprep.subr.mxu0 0.0
        %3055 = vmatpush1.msra.mxu0 %v2958
        %3056 = vmatprep.subr.mxu0 0.0
        %3057 = vmatpush1.msra.mxu0 %v2959
        %3058 = vmatprep.subr.mxu0 0.0
        %3059 = vmatpush1.msra.mxu0 %v2960
        %3060 = vmatprep.subr.mxu0 0.0
        %3061 = vmatpush1.msra.mxu0 0.0
        %3062 = vmatprep.subr.mxu0 0.0
        %3063 = vmatpush1.msra.mxu0 0.0
        %3064 = vmatprep.subr.mxu0 0.0
        %3065 = vmatpush1.msra.mxu0 0.0
        %3066 = vmatprep.subr.mxu0 0.0
        %3067 = vmatpush1.msra.mxu0 0.0
        %3068 = vmatprep.subr.mxu0 0.0
        %3069 = vmatpush1.msra.mxu0 0.0
        %3070 = vmatprep.subr.mxu0 0.0
        %3071 = vmatpush1.msra.mxu0 0.0
        %3072 = vmatprep.subr.mxu0 0.0
        %3073 = vmatpush1.msra.mxu0 0.0
        %3074 = vmatprep.subr.mxu0 0.0
        %3075 = vmatpush1.msra.mxu0 0.0
        %3076 = vmatprep.subr.mxu0 0.0
        %3077 = vmatpush1.msra.mxu0 0.0
        %3078 = vmatprep.subr.mxu0 0.0
        %3079 = vmatpush1.msra.mxu0 0.0
        %3080 = vmatprep.subr.mxu0 0.0
        %3081 = vmatpush1.msra.mxu0 0.0
        %3082 = vmatprep.subr.mxu0 0.0
        %3083 = vmatpush1.msra.mxu0 0.0
        %3084 = vmatprep.subr.mxu0 0.0
        %3085 = vmatpush1.msra.mxu0 0.0
        %3086 = vmatprep.subr.mxu0 0.0
        %3087 = vmatpush1.msra.mxu0 0.0
        %3088 = vmatprep.subr.mxu0 0.0
        %3089 = vmatpush1.msra.mxu0 0.0
        %3090 = vmatprep.subr.mxu0 0.0
        %3091 = vmatpush1.msra.mxu0 0.0
        %3092 = vmatprep.subr.mxu0 0.0
        %3093 = vmatpush1.msra.mxu0 0.0
        %3094 = vmatprep.subr.mxu0 0.0
        %3095 = vmatpush1.msra.mxu0 0.0
        %3096 = vmatprep.subr.mxu0 0.0
        %3097 = vmatpush1.msra.mxu0 0.0
        %3098 = vmatprep.subr.mxu0 0.0
        %3099 = vmatpush1.msra.mxu0 0.0
        %3100 = vmatprep.subr.mxu0 0.0
        %3101 = vmatpush1.msra.mxu0 0.0
        %3102 = vmatprep.subr.mxu0 0.0
        %3103 = vmatpush1.msra.mxu0 0.0
        %3104 = vmatprep.subr.mxu0 0.0
        %3105 = vmatpush1.msra.mxu0 0.0
        %3106 = vmatprep.subr.mxu0 0.0
        %3107 = vmatpush1.msra.mxu0 0.0
        %3108 = vmatprep.subr.mxu0 0.0
        %3109 = vmatpush1.msra.mxu0 0.0
        %3110 = vmatprep.subr.mxu0 0.0
        %3111 = vmatpush1.msra.mxu0 0.0
        %3112 = vmatprep.subr.mxu0 0.0
        %3113 = vmatpush1.msra.mxu0 0.0
        %3114 = vmatprep.subr.mxu0 0.0
        %3115 = vmatpush1.msra.mxu0 0.0
        %3116 = vmatprep.mubr.f32.mxu0 0.0
        %3117 = vmatmul.mubr.f32.gmra.mrb[0].mxu0 %v3047
        %v3118 = vpop.f32.mrb[0].mxu0
        %v3119 = vadd.f32 0.0, %v3118
        %v3120 = vpop.f32.mrb[0].mxu0
        %3121 = vmatprep.mubr.f32.mxu0 0.0
        %3122 = vmatmul.mubr.f32.gmra.mrb[0].mxu0 %v3050
        %v3123 = vpop.f32.mrb[0].mxu0
        %v3124 = vadd.f32 0.0, %v3123
        %v3125 = vpop.f32.mrb[0].mxu0
        %3126 = vdwg.mxu0
        %v3127 = vld [vmem:[#allocation23] sm:$0xff]
        %v3128 = vld [vmem:[#allocation23 + $0x8] sm:$0xff]
        %v3129 = vld [vmem:[%s20] sm:$0xff]
        %v3130 = vld [vmem:[%s20 + $0x8] sm:$0xff]
        %3132 = vset.pattern.permute.xlu0 0
        %3133 = vperm.xlu0 %3132, %v3129
        %v3134 = vpop.permute.xlu0 %3133
        %3137 = vset.pattern.permute.xlu0 0
        %3138 = vperm.xlu0 %3137, %v3130
        %v3139 = vpop.permute.xlu0 %3138
        %v3142 = vsel %vm964, %v3127, 0
        %v3145 = vsel %vm964, %v3128, 0
        %3147 = vmatprep.subr.mxu0 0.0
        %3148 = vmatpush1.msra.mxu0 %v2957
        %3149 = vmatprep.subr.mxu0 0.0
        %3150 = vmatpush1.msra.mxu0 %v2958
        %3151 = vmatprep.subr.mxu0 0.0
        %3152 = vmatpush1.msra.mxu0 %v2959
        %3153 = vmatprep.subr.mxu0 0.0
        %3154 = vmatpush1.msra.mxu0 %v2960
        %3155 = vmatprep.subr.mxu0 0.0
        %3156 = vmatpush1.msra.mxu0 0.0
        %3157 = vmatprep.subr.mxu0 0.0
        %3158 = vmatpush1.msra.mxu0 0.0
        %3159 = vmatprep.subr.mxu0 0.0
        %3160 = vmatpush1.msra.mxu0 0.0
        %3161 = vmatprep.subr.mxu0 0.0
        %3162 = vmatpush1.msra.mxu0 0.0
        %3163 = vmatprep.subr.mxu0 0.0
        %3164 = vmatpush1.msra.mxu0 0.0
        %3165 = vmatprep.subr.mxu0 0.0
        %3166 = vmatpush1.msra.mxu0 0.0
        %3167 = vmatprep.subr.mxu0 0.0
        %3168 = vmatpush1.msra.mxu0 0.0
        %3169 = vmatprep.subr.mxu0 0.0
        %3170 = vmatpush1.msra.mxu0 0.0
        %3171 = vmatprep.subr.mxu0 0.0
        %3172 = vmatpush1.msra.mxu0 0.0
        %3173 = vmatprep.subr.mxu0 0.0
        %3174 = vmatpush1.msra.mxu0 0.0
        %3175 = vmatprep.subr.mxu0 0.0
        %3176 = vmatpush1.msra.mxu0 0.0
        %3177 = vmatprep.subr.mxu0 0.0
        %3178 = vmatpush1.msra.mxu0 0.0
        %3179 = vmatprep.subr.mxu0 0.0
        %3180 = vmatpush1.msra.mxu0 0.0
        %3181 = vmatprep.subr.mxu0 0.0
        %3182 = vmatpush1.msra.mxu0 0.0
        %3183 = vmatprep.subr.mxu0 0.0
        %3184 = vmatpush1.msra.mxu0 0.0
        %3185 = vmatprep.subr.mxu0 0.0
        %3186 = vmatpush1.msra.mxu0 0.0
        %3187 = vmatprep.subr.mxu0 0.0
        %3188 = vmatpush1.msra.mxu0 0.0
        %3189 = vmatprep.subr.mxu0 0.0
        %3190 = vmatpush1.msra.mxu0 0.0
        %3191 = vmatprep.subr.mxu0 0.0
        %3192 = vmatpush1.msra.mxu0 0.0
        %3193 = vmatprep.subr.mxu0 0.0
        %3194 = vmatpush1.msra.mxu0 0.0
        %3195 = vmatprep.subr.mxu0 0.0
        %3196 = vmatpush1.msra.mxu0 0.0
        %3197 = vmatprep.subr.mxu0 0.0
        %3198 = vmatpush1.msra.mxu0 0.0
        %3199 = vmatprep.subr.mxu0 0.0
        %3200 = vmatpush1.msra.mxu0 0.0
        %3201 = vmatprep.subr.mxu0 0.0
        %3202 = vmatpush1.msra.mxu0 0.0
        %3203 = vmatprep.subr.mxu0 0.0
        %3204 = vmatpush1.msra.mxu0 0.0
        %3205 = vmatprep.subr.mxu0 0.0
        %3206 = vmatpush1.msra.mxu0 0.0
        %3207 = vmatprep.subr.mxu0 0.0
        %3208 = vmatpush1.msra.mxu0 0.0
        %3209 = vmatprep.subr.mxu0 0.0
        %3210 = vmatpush1.msra.mxu0 0.0
        %3211 = vmatprep.mubr.f32.mxu0 0.0
        %3212 = vmatmul.mubr.f32.gmra.mrb[0].mxu0 %v3142
        %v3213 = vpop.f32.mrb[0].mxu0
        %v3214 = vadd.f32 %v3134, %v3213
        %v3215 = vpop.f32.mrb[0].mxu0
        %3216 = vmatprep.mubr.f32.mxu0 0.0
        %3217 = vmatmul.mubr.f32.gmra.mrb[0].mxu0 %v3145
        %v3218 = vpop.f32.mrb[0].mxu0
        %v3219 = vadd.f32 %v3139, %v3218
        %v3220 = vpop.f32.mrb[0].mxu0
        %3221 = vdwg.mxu0
        %v3222 = vmax.f32 %v3036, %v3119
        %v3223 = vmax.f32 %v3041, %v3124
        %v3224 = vmax.f32 %v3222, %v3214
        %v3225 = vmax.f32 %v3223, %v3219
        %v3226 = vld [vmem:[%s7] sm:$0xff]
        %v3227 = vld [vmem:[%s7 + $0x8] sm:$0xff]
        %v3228 = vld [vmem:[%s7 + $0x10] sm:$0xff]
        %v3229 = vld [vmem:[%s7 + $0x18] sm:$0xff]
        %v3230 = vld [vmem:[#allocation8] sm:$0x1]
        %v3231 = vld [vmem:[#allocation10] sm:$0xff]
        %v3232 = vld [vmem:[#allocation10 + $0x8] sm:$0xff]
        %v3233 = vld [vmem:[#allocation10 + $0x10] sm:$0xff]
        %v3234 = vld [vmem:[#allocation10 + $0x18] sm:$0xff]
        %v3235 = vld [vmem:[#allocation11] sm:$0x1]
        %v3236 = vld [vmem:[#allocation19] sm:$0xff]
        %v3237 = vld [vmem:[#allocation19 + $0x8] sm:$0xff]
        %v3239 = vlaneseq
        %v3240 = vshrl.u32 %v3239, 7
        %v3241 = vsub.s32 0, %v3240
        %v3242 = vrot.slane %v3230, %v3241
        %v3245 = vsel %vm964, %v3224, 0
        %v3248 = vsel %vm964, %v3225, 0
        %3250 = vmatprep.subr.mxu0 0.0
        %3251 = vmatpush1.msra.mxu0 %v3226
        %3252 = vmatprep.subr.mxu0 0.0
        %3253 = vmatpush1.msra.mxu0 %v3227
        %3254 = vmatprep.subr.mxu0 0.0
        %3255 = vmatpush1.msra.mxu0 %v3228
        %3256 = vmatprep.subr.mxu0 0.0
        %3257 = vmatpush1.msra.mxu0 %v3229
        %3258 = vmatprep.subr.mxu0 0.0
        %3259 = vmatpush1.msra.mxu0 0.0
        %3260 = vmatprep.subr.mxu0 0.0
        %3261 = vmatpush1.msra.mxu0 0.0
        %3262 = vmatprep.subr.mxu0 0.0
        %3263 = vmatpush1.msra.mxu0 0.0
        %3264 = vmatprep.subr.mxu0 0.0
        %3265 = vmatpush1.msra.mxu0 0.0
        %3266 = vmatprep.subr.mxu0 0.0
        %3267 = vmatpush1.msra.mxu0 0.0
        %3268 = vmatprep.subr.mxu0 0.0
        %3269 = vmatpush1.msra.mxu0 0.0
        %3270 = vmatprep.subr.mxu0 0.0
        %3271 = vmatpush1.msra.mxu0 0.0
        %3272 = vmatprep.subr.mxu0 0.0
        %3273 = vmatpush1.msra.mxu0 0.0
        %3274 = vmatprep.subr.mxu0 0.0
        %3275 = vmatpush1.msra.mxu0 0.0
        %3276 = vmatprep.subr.mxu0 0.0
        %3277 = vmatpush1.msra.mxu0 0.0
        %3278 = vmatprep.subr.mxu0 0.0
        %3279 = vmatpush1.msra.mxu0 0.0
        %3280 = vmatprep.subr.mxu0 0.0
        %3281 = vmatpush1.msra.mxu0 0.0
        %3282 = vmatprep.subr.mxu0 0.0
        %3283 = vmatpush1.msra.mxu0 0.0
        %3284 = vmatprep.subr.mxu0 0.0
        %3285 = vmatpush1.msra.mxu0 0.0
        %3286 = vmatprep.subr.mxu0 0.0
        %3287 = vmatpush1.msra.mxu0 0.0
        %3288 = vmatprep.subr.mxu0 0.0
        %3289 = vmatpush1.msra.mxu0 0.0
        %3290 = vmatprep.subr.mxu0 0.0
        %3291 = vmatpush1.msra.mxu0 0.0
        %3292 = vmatprep.subr.mxu0 0.0
        %3293 = vmatpush1.msra.mxu0 0.0
        %3294 = vmatprep.subr.mxu0 0.0
        %3295 = vmatpush1.msra.mxu0 0.0
        %3296 = vmatprep.subr.mxu0 0.0
        %3297 = vmatpush1.msra.mxu0 0.0
        %3298 = vmatprep.subr.mxu0 0.0
        %3299 = vmatpush1.msra.mxu0 0.0
        %3300 = vmatprep.subr.mxu0 0.0
        %3301 = vmatpush1.msra.mxu0 0.0
        %3302 = vmatprep.subr.mxu0 0.0
        %3303 = vmatpush1.msra.mxu0 0.0
        %3304 = vmatprep.subr.mxu0 0.0
        %3305 = vmatpush1.msra.mxu0 0.0
        %3306 = vmatprep.subr.mxu0 0.0
        %3307 = vmatpush1.msra.mxu0 0.0
        %3308 = vmatprep.subr.mxu0 0.0
        %3309 = vmatpush1.msra.mxu0 0.0
        %3310 = vmatprep.subr.mxu0 0.0
        %3311 = vmatpush1.msra.mxu0 0.0
        %3312 = vmatprep.subr.mxu0 0.0
        %3313 = vmatpush1.msra.mxu0 0.0
        %3314 = vmatprep.mubr.f32.mxu0 0.0
        %3315 = vmatmul.mubr.f32.gmra.mrb[0].mxu0 %v3245
        %v3316 = vpop.f32.mrb[0].mxu0
        %v3317 = vadd.f32 %v3242, %v3316
        %v3318 = vpop.f32.mrb[0].mxu0
        %3319 = vmatprep.mubr.f32.mxu0 0.0
        %3320 = vmatmul.mubr.f32.gmra.mrb[0].mxu0 %v3248
        %v3321 = vpop.f32.mrb[0].mxu0
        %v3322 = vadd.f32 %v3242, %v3321
        %v3323 = vpop.f32.mrb[0].mxu0
        %3324 = vdwg.mxu0
        %3327 = vrot.lane.b32.xlu0 %v3317, 96
        %v3328 = vpop.permute.xlu0 %3327
        %3329 = vrot.lane.b32.xlu0 %v3322, 96
        %v3330 = vpop.permute.xlu0 %3329
        %v3331 = vsel %vm1074, %v3317, 0
        %v3333 = vsel %vm1074, %v3322, 0
        %v3335 = vsel %vm1074, %v3328, 0
        %v3337 = vsel %vm1074, %v3330, 0
        %3339 = vmatprep.subr.mxu0 0.0
        %3340 = vmatpush1.xpose.msra.mxu0 %v3335
        %3341 = vmatprep.subr.mxu0 0.0
        %3342 = vmatpush1.xpose.msra.mxu0 %v3337
        %3343 = vmatprep.subr.mxu0 0.0
        %3344 = vmatpush1.xpose.msra.mxu0 0.0
        %3345 = vmatprep.subr.mxu0 0.0
        %3346 = vmatpush1.xpose.msra.mxu0 0.0
        %3347 = vmatprep.subr.mxu0 0.0
        %3348 = vmatpush1.xpose.msra.mxu0 0.0
        %3349 = vmatprep.subr.mxu0 0.0
        %3350 = vmatpush1.xpose.msra.mxu0 0.0
        %3351 = vmatprep.subr.mxu0 0.0
        %3352 = vmatpush1.xpose.msra.mxu0 0.0
        %3353 = vmatprep.subr.mxu0 0.0
        %3354 = vmatpush1.xpose.msra.mxu0 0.0
        %3355 = vmatprep.subr.mxu0 0.0
        %3356 = vmatpush1.xpose.msra.mxu0 0.0
        %3357 = vmatprep.subr.mxu0 0.0
        %3358 = vmatpush1.xpose.msra.mxu0 0.0
        %3359 = vmatprep.subr.mxu0 0.0
        %3360 = vmatpush1.xpose.msra.mxu0 0.0
        %3361 = vmatprep.subr.mxu0 0.0
        %3362 = vmatpush1.xpose.msra.mxu0 0.0
        %3363 = vmatprep.subr.mxu0 0.0
        %3364 = vmatpush1.xpose.msra.mxu0 0.0
        %3365 = vmatprep.subr.mxu0 0.0
        %3366 = vmatpush1.xpose.msra.mxu0 0.0
        %3367 = vmatprep.subr.mxu0 0.0
        %3368 = vmatpush1.xpose.msra.mxu0 0.0
        %3369 = vmatprep.subr.mxu0 0.0
        %3370 = vmatpush1.xpose.msra.mxu0 0.0
        %3371 = vmatprep.subr.mxu0 0.0
        %3372 = vmatpush1.xpose.msra.mxu0 0.0
        %3373 = vmatprep.subr.mxu0 0.0
        %3374 = vmatpush1.xpose.msra.mxu0 0.0
        %3375 = vmatprep.subr.mxu0 0.0
        %3376 = vmatpush1.xpose.msra.mxu0 0.0
        %3377 = vmatprep.subr.mxu0 0.0
        %3378 = vmatpush1.xpose.msra.mxu0 0.0
        %3379 = vmatprep.subr.mxu0 0.0
        %3380 = vmatpush1.xpose.msra.mxu0 0.0
        %3381 = vmatprep.subr.mxu0 0.0
        %3382 = vmatpush1.xpose.msra.mxu0 0.0
        %3383 = vmatprep.subr.mxu0 0.0
        %3384 = vmatpush1.xpose.msra.mxu0 0.0
        %3385 = vmatprep.subr.mxu0 0.0
        %3386 = vmatpush1.xpose.msra.mxu0 0.0
        %3387 = vmatprep.subr.mxu0 0.0
        %3388 = vmatpush1.xpose.msra.mxu0 0.0
        %3389 = vmatprep.subr.mxu0 0.0
        %3390 = vmatpush1.xpose.msra.mxu0 0.0
        %3391 = vmatprep.subr.mxu0 0.0
        %3392 = vmatpush1.xpose.msra.mxu0 0.0
        %3393 = vmatprep.subr.mxu0 0.0
        %3394 = vmatpush1.xpose.msra.mxu0 0.0
        %3395 = vmatprep.subr.mxu0 0.0
        %3396 = vmatpush1.xpose.msra.mxu0 0.0
        %3397 = vmatprep.subr.mxu0 0.0
        %3398 = vmatpush1.xpose.msra.mxu0 0.0
        %3399 = vmatprep.subr.mxu0 0.0
        %3400 = vmatpush1.xpose.msra.mxu0 0.0
        %3401 = vmatprep.subr.mxu0 0.0
        %3402 = vmatpush1.xpose.msra.mxu0 0.0
        %3403 = vmatprep.mubr.f32.mxu0 0.0
        %3404 = vmatmul.mubr.f32.gmra.mrb[0].mxu0 %v3331
        %v3405 = vpop.f32.mrb[0].mxu0
        %v3406 = vadd.f32 0.0, %v3405
        %v3407 = vpop.f32.mrb[0].mxu0
        %3408 = vmatprep.mubr.f32.mxu0 0.0
        %3409 = vmatmul.mubr.f32.gmra.mrb[0].mxu0 %v3333
        %v3410 = vpop.f32.mrb[0].mxu0
        %v3411 = vadd.f32 0.0, %v3410
        %v3412 = vpop.f32.mrb[0].mxu0
        %3413 = vdwg.mxu0
        %v3414 = vmul.f32 %v3406, 0.35355338
        %v3415 = vmul.f32 %v3411, 0.35355338
        %v3416 = vadd.f32 %v3414, %v3236
        %v3417 = vadd.f32 %v3415, %v3237
        %vm3418 = vcmask 130048
        %v3419 = vsel %vm3418, %v3416, -inf
        %3420 = vmax.xlane.f32.xlu0 %v3419
        %v3421 = vpop.xlane.xlu0 %3420
        %v3422 = vsel %vm3418, %v3417, -inf
        %3423 = vmax.xlane.f32.xlu0 %v3422
        %v3424 = vpop.xlane.xlu0 %3423
        %v3425 = vsub.f32 %v3416, %v3421
        %v3426 = vsub.f32 %v3417, %v3424
        %v3427 = vmul.f32 %v3425, 1.442695
        %v3428 = vpow.pop %v3427
        %v3429 = vmul.f32 %v3426, 1.442695
        %v3430 = vpow.pop %v3429
        %v3431 = vsel %vm3418, %v3428, 0.0
        %3432 = vadd.xlane.f32.xlu0 %v3431
        %v3433 = vpop.xlane.xlu0 %3432
        %v3434 = vsel %vm3418, %v3430, 0.0
        %3435 = vadd.xlane.f32.xlu0 %v3434
        %v3436 = vpop.xlane.xlu0 %3435
        %v3437 = vrcp.pop %v3433
        %v3438 = vrcp.pop %v3436
        %v3439 = vmul.f32 %v3428, %v3437
        %v3440 = vmul.f32 %v3430, %v3438
        %3441 = vrot.lane.b32.xlu0 %v3317, 64
        %v3442 = vpop.permute.xlu0 %3441
        %3443 = vrot.lane.b32.xlu0 %v3322, 64
        %v3444 = vpop.permute.xlu0 %3443
        %v3448 = vsel %vm3418, %v3439, 0
        %v3451 = vsel %vm3418, %v3440, 0
        %3453 = vmatprep.subr.mxu0 0.0
        %3454 = vmatpush1.msra.mxu0 %v3442
        %3455 = vmatprep.subr.mxu0 0.0
        %3456 = vmatpush1.msra.mxu0 %v3444
        %3457 = vmatprep.subr.mxu0 0.0
        %3458 = vmatpush1.msra.mxu0 0.0
        %3459 = vmatprep.subr.mxu0 0.0
        %3460 = vmatpush1.msra.mxu0 0.0
        %3461 = vmatprep.subr.mxu0 0.0
        %3462 = vmatpush1.msra.mxu0 0.0
        %3463 = vmatprep.subr.mxu0 0.0
        %3464 = vmatpush1.msra.mxu0 0.0
        %3465 = vmatprep.subr.mxu0 0.0
        %3466 = vmatpush1.msra.mxu0 0.0
        %3467 = vmatprep.subr.mxu0 0.0
        %3468 = vmatpush1.msra.mxu0 0.0
        %3469 = vmatprep.subr.mxu0 0.0
        %3470 = vmatpush1.msra.mxu0 0.0
        %3471 = vmatprep.subr.mxu0 0.0
        %3472 = vmatpush1.msra.mxu0 0.0
        %3473 = vmatprep.subr.mxu0 0.0
        %3474 = vmatpush1.msra.mxu0 0.0
        %3475 = vmatprep.subr.mxu0 0.0
        %3476 = vmatpush1.msra.mxu0 0.0
        %3477 = vmatprep.subr.mxu0 0.0
        %3478 = vmatpush1.msra.mxu0 0.0
        %3479 = vmatprep.subr.mxu0 0.0
        %3480 = vmatpush1.msra.mxu0 0.0
        %3481 = vmatprep.subr.mxu0 0.0
        %3482 = vmatpush1.msra.mxu0 0.0
        %3483 = vmatprep.subr.mxu0 0.0
        %3484 = vmatpush1.msra.mxu0 0.0
        %3485 = vmatprep.subr.mxu0 0.0
        %3486 = vmatpush1.msra.mxu0 0.0
        %3487 = vmatprep.subr.mxu0 0.0
        %3488 = vmatpush1.msra.mxu0 0.0
        %3489 = vmatprep.subr.mxu0 0.0
        %3490 = vmatpush1.msra.mxu0 0.0
        %3491 = vmatprep.subr.mxu0 0.0
        %3492 = vmatpush1.msra.mxu0 0.0
        %3493 = vmatprep.subr.mxu0 0.0
        %3494 = vmatpush1.msra.mxu0 0.0
        %3495 = vmatprep.subr.mxu0 0.0
        %3496 = vmatpush1.msra.mxu0 0.0
        %3497 = vmatprep.subr.mxu0 0.0
        %3498 = vmatpush1.msra.mxu0 0.0
        %3499 = vmatprep.subr.mxu0 0.0
        %3500 = vmatpush1.msra.mxu0 0.0
        %3501 = vmatprep.subr.mxu0 0.0
        %3502 = vmatpush1.msra.mxu0 0.0
        %3503 = vmatprep.subr.mxu0 0.0
        %3504 = vmatpush1.msra.mxu0 0.0
        %3505 = vmatprep.subr.mxu0 0.0
        %3506 = vmatpush1.msra.mxu0 0.0
        %3507 = vmatprep.subr.mxu0 0.0
        %3508 = vmatpush1.msra.mxu0 0.0
        %3509 = vmatprep.subr.mxu0 0.0
        %3510 = vmatpush1.msra.mxu0 0.0
        %3511 = vmatprep.subr.mxu0 0.0
        %3512 = vmatpush1.msra.mxu0 0.0
        %3513 = vmatprep.subr.mxu0 0.0
        %3514 = vmatpush1.msra.mxu0 0.0
        %3515 = vmatprep.subr.mxu0 0.0
        %3516 = vmatpush1.msra.mxu0 0.0
        %3517 = vmatprep.mubr.f32.mxu0 0.0
        %3518 = vmatmul.mubr.f32.gmra.mrb[0].mxu0 %v3448
        %v3519 = vpop.f32.mrb[0].mxu0
        %v3520 = vadd.f32 0.0, %v3519
        %v3521 = vpop.f32.mrb[0].mxu0
        %3522 = vmatprep.mubr.f32.mxu0 0.0
        %3523 = vmatmul.mubr.f32.gmra.mrb[0].mxu0 %v3451
        %v3524 = vpop.f32.mrb[0].mxu0
        %v3525 = vadd.f32 0.0, %v3524
        %v3526 = vpop.f32.mrb[0].mxu0
        %3527 = vdwg.mxu0
        %3528 = vrot.lane.b32.xlu0 %v3317, 120
        %v3529 = vpop.permute.xlu0 %3528
        %3530 = vrot.lane.b32.xlu0 %v3322, 120
        %v3531 = vpop.permute.xlu0 %3530
        %3532 = vrot.lane.b32.xlu0 %v3317, 88
        %v3533 = vpop.permute.xlu0 %3532
        %3534 = vrot.lane.b32.xlu0 %v3322, 88
        %v3535 = vpop.permute.xlu0 %3534
        %v3536 = vsel %vm1074, %v3529, 0
        %v3538 = vsel %vm1074, %v3531, 0
        %v3540 = vsel %vm1074, %v3533, 0
        %v3542 = vsel %vm1074, %v3535, 0
        %3544 = vmatprep.subr.mxu0 0.0
        %3545 = vmatpush1.xpose.msra.mxu0 %v3540
        %3546 = vmatprep.subr.mxu0 0.0
        %3547 = vmatpush1.xpose.msra.mxu0 %v3542
        %3548 = vmatprep.subr.mxu0 0.0
        %3549 = vmatpush1.xpose.msra.mxu0 0.0
        %3550 = vmatprep.subr.mxu0 0.0
        %3551 = vmatpush1.xpose.msra.mxu0 0.0
        %3552 = vmatprep.subr.mxu0 0.0
        %3553 = vmatpush1.xpose.msra.mxu0 0.0
        %3554 = vmatprep.subr.mxu0 0.0
        %3555 = vmatpush1.xpose.msra.mxu0 0.0
        %3556 = vmatprep.subr.mxu0 0.0
        %3557 = vmatpush1.xpose.msra.mxu0 0.0
        %3558 = vmatprep.subr.mxu0 0.0
        %3559 = vmatpush1.xpose.msra.mxu0 0.0
        %3560 = vmatprep.subr.mxu0 0.0
        %3561 = vmatpush1.xpose.msra.mxu0 0.0
        %3562 = vmatprep.subr.mxu0 0.0
        %3563 = vmatpush1.xpose.msra.mxu0 0.0
        %3564 = vmatprep.subr.mxu0 0.0
        %3565 = vmatpush1.xpose.msra.mxu0 0.0
        %3566 = vmatprep.subr.mxu0 0.0
        %3567 = vmatpush1.xpose.msra.mxu0 0.0
        %3568 = vmatprep.subr.mxu0 0.0
        %3569 = vmatpush1.xpose.msra.mxu0 0.0
        %3570 = vmatprep.subr.mxu0 0.0
        %3571 = vmatpush1.xpose.msra.mxu0 0.0
        %3572 = vmatprep.subr.mxu0 0.0
        %3573 = vmatpush1.xpose.msra.mxu0 0.0
        %3574 = vmatprep.subr.mxu0 0.0
        %3575 = vmatpush1.xpose.msra.mxu0 0.0
        %3576 = vmatprep.subr.mxu0 0.0
        %3577 = vmatpush1.xpose.msra.mxu0 0.0
        %3578 = vmatprep.subr.mxu0 0.0
        %3579 = vmatpush1.xpose.msra.mxu0 0.0
        %3580 = vmatprep.subr.mxu0 0.0
        %3581 = vmatpush1.xpose.msra.mxu0 0.0
        %3582 = vmatprep.subr.mxu0 0.0
        %3583 = vmatpush1.xpose.msra.mxu0 0.0
        %3584 = vmatprep.subr.mxu0 0.0
        %3585 = vmatpush1.xpose.msra.mxu0 0.0
        %3586 = vmatprep.subr.mxu0 0.0
        %3587 = vmatpush1.xpose.msra.mxu0 0.0
        %3588 = vmatprep.subr.mxu0 0.0
        %3589 = vmatpush1.xpose.msra.mxu0 0.0
        %3590 = vmatprep.subr.mxu0 0.0
        %3591 = vmatpush1.xpose.msra.mxu0 0.0
        %3592 = vmatprep.subr.mxu0 0.0
        %3593 = vmatpush1.xpose.msra.mxu0 0.0
        %3594 = vmatprep.subr.mxu0 0.0
        %3595 = vmatpush1.xpose.msra.mxu0 0.0
        %3596 = vmatprep.subr.mxu0 0.0
        %3597 = vmatpush1.xpose.msra.mxu0 0.0
        %3598 = vmatprep.subr.mxu0 0.0
        %3599 = vmatpush1.xpose.msra.mxu0 0.0
        %3600 = vmatprep.subr.mxu0 0.0
        %3601 = vmatpush1.xpose.msra.mxu0 0.0
        %3602 = vmatprep.subr.mxu0 0.0
        %3603 = vmatpush1.xpose.msra.mxu0 0.0
        %3604 = vmatprep.subr.mxu0 0.0
        %3605 = vmatpush1.xpose.msra.mxu0 0.0
        %3606 = vmatprep.subr.mxu0 0.0
        %3607 = vmatpush1.xpose.msra.mxu0 0.0
        %3608 = vmatprep.mubr.f32.mxu0 0.0
        %3609 = vmatmul.mubr.f32.gmra.mrb[0].mxu0 %v3536
        %v3610 = vpop.f32.mrb[0].mxu0
        %v3611 = vadd.f32 0.0, %v3610
        %v3612 = vpop.f32.mrb[0].mxu0
        %3613 = vmatprep.mubr.f32.mxu0 0.0
        %3614 = vmatmul.mubr.f32.gmra.mrb[0].mxu0 %v3538
        %v3615 = vpop.f32.mrb[0].mxu0
        %v3616 = vadd.f32 0.0, %v3615
        %v3617 = vpop.f32.mrb[0].mxu0
        %3618 = vdwg.mxu0
        %v3619 = vmul.f32 %v3611, 0.35355338
        %v3620 = vmul.f32 %v3616, 0.35355338
        %v3621 = vadd.f32 %v3619, %v3236
        %v3622 = vadd.f32 %v3620, %v3237
        %v3623 = vsel %vm3418, %v3621, -inf
        %3624 = vmax.xlane.f32.xlu0 %v3623
        %v3625 = vpop.xlane.xlu0 %3624
        %v3626 = vsel %vm3418, %v3622, -inf
        %3627 = vmax.xlane.f32.xlu0 %v3626
        %v3628 = vpop.xlane.xlu0 %3627
        %v3629 = vsub.f32 %v3621, %v3625
        %v3630 = vsub.f32 %v3622, %v3628
        %v3631 = vmul.f32 %v3629, 1.442695
        %v3632 = vpow.pop %v3631
        %v3633 = vmul.f32 %v3630, 1.442695
        %v3634 = vpow.pop %v3633
        %v3635 = vsel %vm3418, %v3632, 0.0
        %3636 = vadd.xlane.f32.xlu0 %v3635
        %v3637 = vpop.xlane.xlu0 %3636
        %v3638 = vsel %vm3418, %v3634, 0.0
        %3639 = vadd.xlane.f32.xlu0 %v3638
        %v3640 = vpop.xlane.xlu0 %3639
        %v3641 = vrcp.pop %v3637
        %v3642 = vrcp.pop %v3640
        %v3643 = vmul.f32 %v3632, %v3641
        %v3644 = vmul.f32 %v3634, %v3642
        %3645 = vrot.lane.b32.xlu0 %v3317, 56
        %v3646 = vpop.permute.xlu0 %3645
        %3647 = vrot.lane.b32.xlu0 %v3322, 56
        %v3648 = vpop.permute.xlu0 %3647
        %v3652 = vsel %vm3418, %v3643, 0
        %v3655 = vsel %vm3418, %v3644, 0
        %3657 = vmatprep.subr.mxu0 0.0
        %3658 = vmatpush1.msra.mxu0 %v3646
        %3659 = vmatprep.subr.mxu0 0.0
        %3660 = vmatpush1.msra.mxu0 %v3648
        %3661 = vmatprep.subr.mxu0 0.0
        %3662 = vmatpush1.msra.mxu0 0.0
        %3663 = vmatprep.subr.mxu0 0.0
        %3664 = vmatpush1.msra.mxu0 0.0
        %3665 = vmatprep.subr.mxu0 0.0
        %3666 = vmatpush1.msra.mxu0 0.0
        %3667 = vmatprep.subr.mxu0 0.0
        %3668 = vmatpush1.msra.mxu0 0.0
        %3669 = vmatprep.subr.mxu0 0.0
        %3670 = vmatpush1.msra.mxu0 0.0
        %3671 = vmatprep.subr.mxu0 0.0
        %3672 = vmatpush1.msra.mxu0 0.0
        %3673 = vmatprep.subr.mxu0 0.0
        %3674 = vmatpush1.msra.mxu0 0.0
        %3675 = vmatprep.subr.mxu0 0.0
        %3676 = vmatpush1.msra.mxu0 0.0
        %3677 = vmatprep.subr.mxu0 0.0
        %3678 = vmatpush1.msra.mxu0 0.0
        %3679 = vmatprep.subr.mxu0 0.0
        %3680 = vmatpush1.msra.mxu0 0.0
        %3681 = vmatprep.subr.mxu0 0.0
        %3682 = vmatpush1.msra.mxu0 0.0
        %3683 = vmatprep.subr.mxu0 0.0
        %3684 = vmatpush1.msra.mxu0 0.0
        %3685 = vmatprep.subr.mxu0 0.0
        %3686 = vmatpush1.msra.mxu0 0.0
        %3687 = vmatprep.subr.mxu0 0.0
        %3688 = vmatpush1.msra.mxu0 0.0
        %3689 = vmatprep.subr.mxu0 0.0
        %3690 = vmatpush1.msra.mxu0 0.0
        %3691 = vmatprep.subr.mxu0 0.0
        %3692 = vmatpush1.msra.mxu0 0.0
        %3693 = vmatprep.subr.mxu0 0.0
        %3694 = vmatpush1.msra.mxu0 0.0
        %3695 = vmatprep.subr.mxu0 0.0
        %3696 = vmatpush1.msra.mxu0 0.0
        %3697 = vmatprep.subr.mxu0 0.0
        %3698 = vmatpush1.msra.mxu0 0.0
        %3699 = vmatprep.subr.mxu0 0.0
        %3700 = vmatpush1.msra.mxu0 0.0
        %3701 = vmatprep.subr.mxu0 0.0
        %3702 = vmatpush1.msra.mxu0 0.0
        %3703 = vmatprep.subr.mxu0 0.0
        %3704 = vmatpush1.msra.mxu0 0.0
        %3705 = vmatprep.subr.mxu0 0.0
        %3706 = vmatpush1.msra.mxu0 0.0
        %3707 = vmatprep.subr.mxu0 0.0
        %3708 = vmatpush1.msra.mxu0 0.0
        %3709 = vmatprep.subr.mxu0 0.0
        %3710 = vmatpush1.msra.mxu0 0.0
        %3711 = vmatprep.subr.mxu0 0.0
        %3712 = vmatpush1.msra.mxu0 0.0
        %3713 = vmatprep.subr.mxu0 0.0
        %3714 = vmatpush1.msra.mxu0 0.0
        %3715 = vmatprep.subr.mxu0 0.0
        %3716 = vmatpush1.msra.mxu0 0.0
        %3717 = vmatprep.subr.mxu0 0.0
        %3718 = vmatpush1.msra.mxu0 0.0
        %3719 = vmatprep.subr.mxu0 0.0
        %3720 = vmatpush1.msra.mxu0 0.0
        %3721 = vmatprep.mubr.f32.mxu0 0.0
        %3722 = vmatmul.mubr.f32.gmra.mrb[0].mxu0 %v3652
        %v3723 = vpop.f32.mrb[0].mxu0
        %v3724 = vadd.f32 0.0, %v3723
        %v3725 = vpop.f32.mrb[0].mxu0
        %3726 = vmatprep.mubr.f32.mxu0 0.0
        %3727 = vmatmul.mubr.f32.gmra.mrb[0].mxu0 %v3655
        %v3728 = vpop.f32.mrb[0].mxu0
        %v3729 = vadd.f32 0.0, %v3728
        %v3730 = vpop.f32.mrb[0].mxu0
        %3731 = vdwg.mxu0
        %v3733 = vsel %vm1074, %v3724, 0
        %v3736 = vsel %vm1074, %v3729, 0
        %3738 = vmatprep.subr.mxu0 0.0
        %3739 = vmatpush1.msra.mxu0 %v3232
        %3740 = vmatprep.subr.mxu0 0.0
        %3741 = vmatpush1.msra.mxu0 0.0
        %3742 = vmatprep.subr.mxu0 0.0
        %3743 = vmatpush1.msra.mxu0 0.0
        %3744 = vmatprep.subr.mxu0 0.0
        %3745 = vmatpush1.msra.mxu0 0.0
        %3746 = vmatprep.subr.mxu0 0.0
        %3747 = vmatpush1.msra.mxu0 0.0
        %3748 = vmatprep.subr.mxu0 0.0
        %3749 = vmatpush1.msra.mxu0 0.0
        %3750 = vmatprep.subr.mxu0 0.0
        %3751 = vmatpush1.msra.mxu0 0.0
        %3752 = vmatprep.subr.mxu0 0.0
        %3753 = vmatpush1.msra.mxu0 0.0
        %3754 = vmatprep.subr.mxu0 0.0
        %3755 = vmatpush1.msra.mxu0 0.0
        %3756 = vmatprep.subr.mxu0 0.0
        %3757 = vmatpush1.msra.mxu0 0.0
        %3758 = vmatprep.subr.mxu0 0.0
        %3759 = vmatpush1.msra.mxu0 0.0
        %3760 = vmatprep.subr.mxu0 0.0
        %3761 = vmatpush1.msra.mxu0 0.0
        %3762 = vmatprep.subr.mxu0 0.0
        %3763 = vmatpush1.msra.mxu0 0.0
        %3764 = vmatprep.subr.mxu0 0.0
        %3765 = vmatpush1.msra.mxu0 0.0
        %3766 = vmatprep.subr.mxu0 0.0
        %3767 = vmatpush1.msra.mxu0 0.0
        %3768 = vmatprep.subr.mxu0 0.0
        %3769 = vmatpush1.msra.mxu0 0.0
        %3770 = vmatprep.subr.mxu0 0.0
        %3771 = vmatpush1.msra.mxu0 0.0
        %3772 = vmatprep.subr.mxu0 0.0
        %3773 = vmatpush1.msra.mxu0 0.0
        %3774 = vmatprep.subr.mxu0 0.0
        %3775 = vmatpush1.msra.mxu0 0.0
        %3776 = vmatprep.subr.mxu0 0.0
        %3777 = vmatpush1.msra.mxu0 0.0
        %3778 = vmatprep.subr.mxu0 0.0
        %3779 = vmatpush1.msra.mxu0 0.0
        %3780 = vmatprep.subr.mxu0 0.0
        %3781 = vmatpush1.msra.mxu0 0.0
        %3782 = vmatprep.subr.mxu0 0.0
        %3783 = vmatpush1.msra.mxu0 0.0
        %3784 = vmatprep.subr.mxu0 0.0
        %3785 = vmatpush1.msra.mxu0 0.0
        %3786 = vmatprep.subr.mxu0 0.0
        %3787 = vmatpush1.msra.mxu0 0.0
        %3788 = vmatprep.subr.mxu0 0.0
        %3789 = vmatpush1.msra.mxu0 0.0
        %3790 = vmatprep.subr.mxu0 0.0
        %3791 = vmatpush1.msra.mxu0 0.0
        %3792 = vmatprep.subr.mxu0 0.0
        %3793 = vmatpush1.msra.mxu0 0.0
        %3794 = vmatprep.subr.mxu0 0.0
        %3795 = vmatpush1.msra.mxu0 0.0
        %3796 = vmatprep.subr.mxu0 0.0
        %3797 = vmatpush1.msra.mxu0 0.0
        %3798 = vmatprep.subr.mxu0 0.0
        %3799 = vmatpush1.msra.mxu0 0.0
        %3800 = vmatprep.subr.mxu0 0.0
        %3801 = vmatpush1.msra.mxu0 0.0
        %3802 = vmatprep.mubr.f32.mxu0 0.0
        %3803 = vmatmul.mubr.f32.gmra.mrb[0].mxu0 %v3733
        %v3804 = vpop.f32.mrb[0].mxu0
        %v3805 = vadd.f32 0.0, %v3804
        %v3806 = vpop.f32.mrb[0].mxu0
        %3807 = vmatprep.mubr.f32.mxu0 0.0
        %3808 = vmatmul.mubr.f32.gmra.mrb[0].mxu0 %v3736
        %v3809 = vpop.f32.mrb[0].mxu0
        %v3810 = vadd.f32 0.0, %v3809
        %v3811 = vpop.f32.mrb[0].mxu0
        %3812 = vdwg.mxu0
        %v3814 = vsel %vm1074, %v3520, 0
        %v3817 = vsel %vm1074, %v3525, 0
        %3819 = vmatprep.subr.mxu0 0.0
        %3820 = vmatpush1.msra.mxu0 %v3231
        %3821 = vmatprep.subr.mxu0 0.0
        %3822 = vmatpush1.msra.mxu0 0.0
        %3823 = vmatprep.subr.mxu0 0.0
        %3824 = vmatpush1.msra.mxu0 0.0
        %3825 = vmatprep.subr.mxu0 0.0
        %3826 = vmatpush1.msra.mxu0 0.0
        %3827 = vmatprep.subr.mxu0 0.0
        %3828 = vmatpush1.msra.mxu0 0.0
        %3829 = vmatprep.subr.mxu0 0.0
        %3830 = vmatpush1.msra.mxu0 0.0
        %3831 = vmatprep.subr.mxu0 0.0
        %3832 = vmatpush1.msra.mxu0 0.0
        %3833 = vmatprep.subr.mxu0 0.0
        %3834 = vmatpush1.msra.mxu0 0.0
        %3835 = vmatprep.subr.mxu0 0.0
        %3836 = vmatpush1.msra.mxu0 0.0
        %3837 = vmatprep.subr.mxu0 0.0
        %3838 = vmatpush1.msra.mxu0 0.0
        %3839 = vmatprep.subr.mxu0 0.0
        %3840 = vmatpush1.msra.mxu0 0.0
        %3841 = vmatprep.subr.mxu0 0.0
        %3842 = vmatpush1.msra.mxu0 0.0
        %3843 = vmatprep.subr.mxu0 0.0
        %3844 = vmatpush1.msra.mxu0 0.0
        %3845 = vmatprep.subr.mxu0 0.0
        %3846 = vmatpush1.msra.mxu0 0.0
        %3847 = vmatprep.subr.mxu0 0.0
        %3848 = vmatpush1.msra.mxu0 0.0
        %3849 = vmatprep.subr.mxu0 0.0
        %3850 = vmatpush1.msra.mxu0 0.0
        %3851 = vmatprep.subr.mxu0 0.0
        %3852 = vmatpush1.msra.mxu0 0.0
        %3853 = vmatprep.subr.mxu0 0.0
        %3854 = vmatpush1.msra.mxu0 0.0
        %3855 = vmatprep.subr.mxu0 0.0
        %3856 = vmatpush1.msra.mxu0 0.0
        %3857 = vmatprep.subr.mxu0 0.0
        %3858 = vmatpush1.msra.mxu0 0.0
        %3859 = vmatprep.subr.mxu0 0.0
        %3860 = vmatpush1.msra.mxu0 0.0
        %3861 = vmatprep.subr.mxu0 0.0
        %3862 = vmatpush1.msra.mxu0 0.0
        %3863 = vmatprep.subr.mxu0 0.0
        %3864 = vmatpush1.msra.mxu0 0.0
        %3865 = vmatprep.subr.mxu0 0.0
        %3866 = vmatpush1.msra.mxu0 0.0
        %3867 = vmatprep.subr.mxu0 0.0
        %3868 = vmatpush1.msra.mxu0 0.0
        %3869 = vmatprep.subr.mxu0 0.0
        %3870 = vmatpush1.msra.mxu0 0.0
        %3871 = vmatprep.subr.mxu0 0.0
        %3872 = vmatpush1.msra.mxu0 0.0
        %3873 = vmatprep.subr.mxu0 0.0
        %3874 = vmatpush1.msra.mxu0 0.0
        %3875 = vmatprep.subr.mxu0 0.0
        %3876 = vmatpush1.msra.mxu0 0.0
        %3877 = vmatprep.subr.mxu0 0.0
        %3878 = vmatpush1.msra.mxu0 0.0
        %3879 = vmatprep.subr.mxu0 0.0
        %3880 = vmatpush1.msra.mxu0 0.0
        %3881 = vmatprep.subr.mxu0 0.0
        %3882 = vmatpush1.msra.mxu0 0.0
        %3883 = vmatprep.mubr.f32.mxu0 0.0
        %3884 = vmatmul.mubr.f32.gmra.mrb[0].mxu0 %v3814
        %v3885 = vpop.f32.mrb[0].mxu0
        %v3886 = vadd.f32 %v3805, %v3885
        %v3887 = vpop.f32.mrb[0].mxu0
        %3888 = vmatprep.mubr.f32.mxu0 0.0
        %3889 = vmatmul.mubr.f32.gmra.mrb[0].mxu0 %v3817
        %v3890 = vpop.f32.mrb[0].mxu0
        %v3891 = vadd.f32 %v3810, %v3890
        %v3892 = vpop.f32.mrb[0].mxu0
        %3893 = vdwg.mxu0
        %3894 = vrot.lane.b32.xlu0 %v3317, 112
        %v3895 = vpop.permute.xlu0 %3894
        %3896 = vrot.lane.b32.xlu0 %v3322, 112
        %v3897 = vpop.permute.xlu0 %3896
        %3898 = vrot.lane.b32.xlu0 %v3317, 80
        %v3899 = vpop.permute.xlu0 %3898
        %3900 = vrot.lane.b32.xlu0 %v3322, 80
        %v3901 = vpop.permute.xlu0 %3900
        %v3902 = vsel %vm1074, %v3895, 0
        %v3904 = vsel %vm1074, %v3897, 0
        %v3906 = vsel %vm1074, %v3899, 0
        %v3908 = vsel %vm1074, %v3901, 0
        %3910 = vmatprep.subr.mxu0 0.0
        %3911 = vmatpush1.xpose.msra.mxu0 %v3906
        %3912 = vmatprep.subr.mxu0 0.0
        %3913 = vmatpush1.xpose.msra.mxu0 %v3908
        %3914 = vmatprep.subr.mxu0 0.0
        %3915 = vmatpush1.xpose.msra.mxu0 0.0
        %3916 = vmatprep.subr.mxu0 0.0
        %3917 = vmatpush1.xpose.msra.mxu0 0.0
        %3918 = vmatprep.subr.mxu0 0.0
        %3919 = vmatpush1.xpose.msra.mxu0 0.0
        %3920 = vmatprep.subr.mxu0 0.0
        %3921 = vmatpush1.xpose.msra.mxu0 0.0
        %3922 = vmatprep.subr.mxu0 0.0
        %3923 = vmatpush1.xpose.msra.mxu0 0.0
        %3924 = vmatprep.subr.mxu0 0.0
        %3925 = vmatpush1.xpose.msra.mxu0 0.0
        %3926 = vmatprep.subr.mxu0 0.0
        %3927 = vmatpush1.xpose.msra.mxu0 0.0
        %3928 = vmatprep.subr.mxu0 0.0
        %3929 = vmatpush1.xpose.msra.mxu0 0.0
        %3930 = vmatprep.subr.mxu0 0.0
        %3931 = vmatpush1.xpose.msra.mxu0 0.0
        %3932 = vmatprep.subr.mxu0 0.0
        %3933 = vmatpush1.xpose.msra.mxu0 0.0
        %3934 = vmatprep.subr.mxu0 0.0
        %3935 = vmatpush1.xpose.msra.mxu0 0.0
        %3936 = vmatprep.subr.mxu0 0.0
        %3937 = vmatpush1.xpose.msra.mxu0 0.0
        %3938 = vmatprep.subr.mxu0 0.0
        %3939 = vmatpush1.xpose.msra.mxu0 0.0
        %3940 = vmatprep.subr.mxu0 0.0
        %3941 = vmatpush1.xpose.msra.mxu0 0.0
        %3942 = vmatprep.subr.mxu0 0.0
        %3943 = vmatpush1.xpose.msra.mxu0 0.0
        %3944 = vmatprep.subr.mxu0 0.0
        %3945 = vmatpush1.xpose.msra.mxu0 0.0
        %3946 = vmatprep.subr.mxu0 0.0
        %3947 = vmatpush1.xpose.msra.mxu0 0.0
        %3948 = vmatprep.subr.mxu0 0.0
        %3949 = vmatpush1.xpose.msra.mxu0 0.0
        %3950 = vmatprep.subr.mxu0 0.0
        %3951 = vmatpush1.xpose.msra.mxu0 0.0
        %3952 = vmatprep.subr.mxu0 0.0
        %3953 = vmatpush1.xpose.msra.mxu0 0.0
        %3954 = vmatprep.subr.mxu0 0.0
        %3955 = vmatpush1.xpose.msra.mxu0 0.0
        %3956 = vmatprep.subr.mxu0 0.0
        %3957 = vmatpush1.xpose.msra.mxu0 0.0
        %3958 = vmatprep.subr.mxu0 0.0
        %3959 = vmatpush1.xpose.msra.mxu0 0.0
        %3960 = vmatprep.subr.mxu0 0.0
        %3961 = vmatpush1.xpose.msra.mxu0 0.0
        %3962 = vmatprep.subr.mxu0 0.0
        %3963 = vmatpush1.xpose.msra.mxu0 0.0
        %3964 = vmatprep.subr.mxu0 0.0
        %3965 = vmatpush1.xpose.msra.mxu0 0.0
        %3966 = vmatprep.subr.mxu0 0.0
        %3967 = vmatpush1.xpose.msra.mxu0 0.0
        %3968 = vmatprep.subr.mxu0 0.0
        %3969 = vmatpush1.xpose.msra.mxu0 0.0
        %3970 = vmatprep.subr.mxu0 0.0
        %3971 = vmatpush1.xpose.msra.mxu0 0.0
        %3972 = vmatprep.subr.mxu0 0.0
        %3973 = vmatpush1.xpose.msra.mxu0 0.0
        %3974 = vmatprep.mubr.f32.mxu0 0.0
        %3975 = vmatmul.mubr.f32.gmra.mrb[0].mxu0 %v3902
        %v3976 = vpop.f32.mrb[0].mxu0
        %v3977 = vadd.f32 0.0, %v3976
        %v3978 = vpop.f32.mrb[0].mxu0
        %3979 = vmatprep.mubr.f32.mxu0 0.0
        %3980 = vmatmul.mubr.f32.gmra.mrb[0].mxu0 %v3904
        %v3981 = vpop.f32.mrb[0].mxu0
        %v3982 = vadd.f32 0.0, %v3981
        %v3983 = vpop.f32.mrb[0].mxu0
        %3984 = vdwg.mxu0
        %v3985 = vmul.f32 %v3977, 0.35355338
        %v3986 = vmul.f32 %v3982, 0.35355338
        %v3987 = vadd.f32 %v3985, %v3236
        %v3988 = vadd.f32 %v3986, %v3237
        %v3989 = vsel %vm3418, %v3987, -inf
        %3990 = vmax.xlane.f32.xlu0 %v3989
        %v3991 = vpop.xlane.xlu0 %3990
        %v3992 = vsel %vm3418, %v3988, -inf
        %3993 = vmax.xlane.f32.xlu0 %v3992
        %v3994 = vpop.xlane.xlu0 %3993
        %v3995 = vsub.f32 %v3987, %v3991
        %v3996 = vsub.f32 %v3988, %v3994
        %v3997 = vmul.f32 %v3995, 1.442695
        %v3998 = vpow.pop %v3997
        %v3999 = vmul.f32 %v3996, 1.442695
        %v4000 = vpow.pop %v3999
        %v4001 = vsel %vm3418, %v3998, 0.0
        %4002 = vadd.xlane.f32.xlu0 %v4001
        %v4003 = vpop.xlane.xlu0 %4002
        %v4004 = vsel %vm3418, %v4000, 0.0
        %4005 = vadd.xlane.f32.xlu0 %v4004
        %v4006 = vpop.xlane.xlu0 %4005
        %v4007 = vrcp.pop %v4003
        %v4008 = vrcp.pop %v4006
        %v4009 = vmul.f32 %v3998, %v4007
        %v4010 = vmul.f32 %v4000, %v4008
        %4011 = vrot.lane.b32.xlu0 %v3317, 48
        %v4012 = vpop.permute.xlu0 %4011
        %4013 = vrot.lane.b32.xlu0 %v3322, 48
        %v4014 = vpop.permute.xlu0 %4013
        %v4018 = vsel %vm3418, %v4009, 0
        %v4021 = vsel %vm3418, %v4010, 0
        %4023 = vmatprep.subr.mxu0 0.0
        %4024 = vmatpush1.msra.mxu0 %v4012
        %4025 = vmatprep.subr.mxu0 0.0
        %4026 = vmatpush1.msra.mxu0 %v4014
        %4027 = vmatprep.subr.mxu0 0.0
        %4028 = vmatpush1.msra.mxu0 0.0
        %4029 = vmatprep.subr.mxu0 0.0
        %4030 = vmatpush1.msra.mxu0 0.0
        %4031 = vmatprep.subr.mxu0 0.0
        %4032 = vmatpush1.msra.mxu0 0.0
        %4033 = vmatprep.subr.mxu0 0.0
        %4034 = vmatpush1.msra.mxu0 0.0
        %4035 = vmatprep.subr.mxu0 0.0
        %4036 = vmatpush1.msra.mxu0 0.0
        %4037 = vmatprep.subr.mxu0 0.0
        %4038 = vmatpush1.msra.mxu0 0.0
        %4039 = vmatprep.subr.mxu0 0.0
        %4040 = vmatpush1.msra.mxu0 0.0
        %4041 = vmatprep.subr.mxu0 0.0
        %4042 = vmatpush1.msra.mxu0 0.0
        %4043 = vmatprep.subr.mxu0 0.0
        %4044 = vmatpush1.msra.mxu0 0.0
        %4045 = vmatprep.subr.mxu0 0.0
        %4046 = vmatpush1.msra.mxu0 0.0
        %4047 = vmatprep.subr.mxu0 0.0
        %4048 = vmatpush1.msra.mxu0 0.0
        %4049 = vmatprep.subr.mxu0 0.0
        %4050 = vmatpush1.msra.mxu0 0.0
        %4051 = vmatprep.subr.mxu0 0.0
        %4052 = vmatpush1.msra.mxu0 0.0
        %4053 = vmatprep.subr.mxu0 0.0
        %4054 = vmatpush1.msra.mxu0 0.0
        %4055 = vmatprep.subr.mxu0 0.0
        %4056 = vmatpush1.msra.mxu0 0.0
        %4057 = vmatprep.subr.mxu0 0.0
        %4058 = vmatpush1.msra.mxu0 0.0
        %4059 = vmatprep.subr.mxu0 0.0
        %4060 = vmatpush1.msra.mxu0 0.0
        %4061 = vmatprep.subr.mxu0 0.0
        %4062 = vmatpush1.msra.mxu0 0.0
        %4063 = vmatprep.subr.mxu0 0.0
        %4064 = vmatpush1.msra.mxu0 0.0
        %4065 = vmatprep.subr.mxu0 0.0
        %4066 = vmatpush1.msra.mxu0 0.0
        %4067 = vmatprep.subr.mxu0 0.0
        %4068 = vmatpush1.msra.mxu0 0.0
        %4069 = vmatprep.subr.mxu0 0.0
        %4070 = vmatpush1.msra.mxu0 0.0
        %4071 = vmatprep.subr.mxu0 0.0
        %4072 = vmatpush1.msra.mxu0 0.0
        %4073 = vmatprep.subr.mxu0 0.0
        %4074 = vmatpush1.msra.mxu0 0.0
        %4075 = vmatprep.subr.mxu0 0.0
        %4076 = vmatpush1.msra.mxu0 0.0
        %4077 = vmatprep.subr.mxu0 0.0
        %4078 = vmatpush1.msra.mxu0 0.0
        %4079 = vmatprep.subr.mxu0 0.0
        %4080 = vmatpush1.msra.mxu0 0.0
        %4081 = vmatprep.subr.mxu0 0.0
        %4082 = vmatpush1.msra.mxu0 0.0
        %4083 = vmatprep.subr.mxu0 0.0
        %4084 = vmatpush1.msra.mxu0 0.0
        %4085 = vmatprep.subr.mxu0 0.0
        %4086 = vmatpush1.msra.mxu0 0.0
        %4087 = vmatprep.mubr.f32.mxu0 0.0
        %4088 = vmatmul.mubr.f32.gmra.mrb[0].mxu0 %v4018
        %v4089 = vpop.f32.mrb[0].mxu0
        %v4090 = vadd.f32 0.0, %v4089
        %v4091 = vpop.f32.mrb[0].mxu0
        %4092 = vmatprep.mubr.f32.mxu0 0.0
        %4093 = vmatmul.mubr.f32.gmra.mrb[0].mxu0 %v4021
        %v4094 = vpop.f32.mrb[0].mxu0
        %v4095 = vadd.f32 0.0, %v4094
        %v4096 = vpop.f32.mrb[0].mxu0
        %4097 = vdwg.mxu0
        %v4099 = vsel %vm1074, %v4090, 0
        %v4102 = vsel %vm1074, %v4095, 0
        %4104 = vmatprep.subr.mxu0 0.0
        %4105 = vmatpush1.msra.mxu0 %v3233
        %4106 = vmatprep.subr.mxu0 0.0
        %4107 = vmatpush1.msra.mxu0 0.0
        %4108 = vmatprep.subr.mxu0 0.0
        %4109 = vmatpush1.msra.mxu0 0.0
        %4110 = vmatprep.subr.mxu0 0.0
        %4111 = vmatpush1.msra.mxu0 0.0
        %4112 = vmatprep.subr.mxu0 0.0
        %4113 = vmatpush1.msra.mxu0 0.0
        %4114 = vmatprep.subr.mxu0 0.0
        %4115 = vmatpush1.msra.mxu0 0.0
        %4116 = vmatprep.subr.mxu0 0.0
        %4117 = vmatpush1.msra.mxu0 0.0
        %4118 = vmatprep.subr.mxu0 0.0
        %4119 = vmatpush1.msra.mxu0 0.0
        %4120 = vmatprep.subr.mxu0 0.0
        %4121 = vmatpush1.msra.mxu0 0.0
        %4122 = vmatprep.subr.mxu0 0.0
        %4123 = vmatpush1.msra.mxu0 0.0
        %4124 = vmatprep.subr.mxu0 0.0
        %4125 = vmatpush1.msra.mxu0 0.0
        %4126 = vmatprep.subr.mxu0 0.0
        %4127 = vmatpush1.msra.mxu0 0.0
        %4128 = vmatprep.subr.mxu0 0.0
        %4129 = vmatpush1.msra.mxu0 0.0
        %4130 = vmatprep.subr.mxu0 0.0
        %4131 = vmatpush1.msra.mxu0 0.0
        %4132 = vmatprep.subr.mxu0 0.0
        %4133 = vmatpush1.msra.mxu0 0.0
        %4134 = vmatprep.subr.mxu0 0.0
        %4135 = vmatpush1.msra.mxu0 0.0
        %4136 = vmatprep.subr.mxu0 0.0
        %4137 = vmatpush1.msra.mxu0 0.0
        %4138 = vmatprep.subr.mxu0 0.0
        %4139 = vmatpush1.msra.mxu0 0.0
        %4140 = vmatprep.subr.mxu0 0.0
        %4141 = vmatpush1.msra.mxu0 0.0
        %4142 = vmatprep.subr.mxu0 0.0
        %4143 = vmatpush1.msra.mxu0 0.0
        %4144 = vmatprep.subr.mxu0 0.0
        %4145 = vmatpush1.msra.mxu0 0.0
        %4146 = vmatprep.subr.mxu0 0.0
        %4147 = vmatpush1.msra.mxu0 0.0
        %4148 = vmatprep.subr.mxu0 0.0
        %4149 = vmatpush1.msra.mxu0 0.0
        %4150 = vmatprep.subr.mxu0 0.0
        %4151 = vmatpush1.msra.mxu0 0.0
        %4152 = vmatprep.subr.mxu0 0.0
        %4153 = vmatpush1.msra.mxu0 0.0
        %4154 = vmatprep.subr.mxu0 0.0
        %4155 = vmatpush1.msra.mxu0 0.0
        %4156 = vmatprep.subr.mxu0 0.0
        %4157 = vmatpush1.msra.mxu0 0.0
        %4158 = vmatprep.subr.mxu0 0.0
        %4159 = vmatpush1.msra.mxu0 0.0
        %4160 = vmatprep.subr.mxu0 0.0
        %4161 = vmatpush1.msra.mxu0 0.0
        %4162 = vmatprep.subr.mxu0 0.0
        %4163 = vmatpush1.msra.mxu0 0.0
        %4164 = vmatprep.subr.mxu0 0.0
        %4165 = vmatpush1.msra.mxu0 0.0
        %4166 = vmatprep.subr.mxu0 0.0
        %4167 = vmatpush1.msra.mxu0 0.0
        %4168 = vmatprep.mubr.f32.mxu0 0.0
        %4169 = vmatmul.mubr.f32.gmra.mrb[0].mxu0 %v4099
        %v4170 = vpop.f32.mrb[0].mxu0
        %v4171 = vadd.f32 0.0, %v4170
        %v4172 = vpop.f32.mrb[0].mxu0
        %4173 = vmatprep.mubr.f32.mxu0 0.0
        %4174 = vmatmul.mubr.f32.gmra.mrb[0].mxu0 %v4102
        %v4175 = vpop.f32.mrb[0].mxu0
        %v4176 = vadd.f32 0.0, %v4175
        %v4177 = vpop.f32.mrb[0].mxu0
        %4178 = vdwg.mxu0
        %v4179 = vadd.f32 %v3886, %v4171
        %v4180 = vadd.f32 %v3891, %v4176
        %4181 = vrot.lane.b32.xlu0 %v3317, 104
        %v4182 = vpop.permute.xlu0 %4181
        %4183 = vrot.lane.b32.xlu0 %v3322, 104
        %v4184 = vpop.permute.xlu0 %4183
        %4185 = vrot.lane.b32.xlu0 %v3317, 72
        %v4186 = vpop.permute.xlu0 %4185
        %4187 = vrot.lane.b32.xlu0 %v3322, 72
        %v4188 = vpop.permute.xlu0 %4187
        %v4189 = vsel %vm1074, %v4182, 0
        %v4191 = vsel %vm1074, %v4184, 0
        %v4193 = vsel %vm1074, %v4186, 0
        %v4195 = vsel %vm1074, %v4188, 0
        %4197 = vmatprep.subr.mxu0 0.0
        %4198 = vmatpush1.xpose.msra.mxu0 %v4193
        %4199 = vmatprep.subr.mxu0 0.0
        %4200 = vmatpush1.xpose.msra.mxu0 %v4195
        %4201 = vmatprep.subr.mxu0 0.0
        %4202 = vmatpush1.xpose.msra.mxu0 0.0
        %4203 = vmatprep.subr.mxu0 0.0
        %4204 = vmatpush1.xpose.msra.mxu0 0.0
        %4205 = vmatprep.subr.mxu0 0.0
        %4206 = vmatpush1.xpose.msra.mxu0 0.0
        %4207 = vmatprep.subr.mxu0 0.0
        %4208 = vmatpush1.xpose.msra.mxu0 0.0
        %4209 = vmatprep.subr.mxu0 0.0
        %4210 = vmatpush1.xpose.msra.mxu0 0.0
        %4211 = vmatprep.subr.mxu0 0.0
        %4212 = vmatpush1.xpose.msra.mxu0 0.0
        %4213 = vmatprep.subr.mxu0 0.0
        %4214 = vmatpush1.xpose.msra.mxu0 0.0
        %4215 = vmatprep.subr.mxu0 0.0
        %4216 = vmatpush1.xpose.msra.mxu0 0.0
        %4217 = vmatprep.subr.mxu0 0.0
        %4218 = vmatpush1.xpose.msra.mxu0 0.0
        %4219 = vmatprep.subr.mxu0 0.0
        %4220 = vmatpush1.xpose.msra.mxu0 0.0
        %4221 = vmatprep.subr.mxu0 0.0
        %4222 = vmatpush1.xpose.msra.mxu0 0.0
        %4223 = vmatprep.subr.mxu0 0.0
        %4224 = vmatpush1.xpose.msra.mxu0 0.0
        %4225 = vmatprep.subr.mxu0 0.0
        %4226 = vmatpush1.xpose.msra.mxu0 0.0
        %4227 = vmatprep.subr.mxu0 0.0
        %4228 = vmatpush1.xpose.msra.mxu0 0.0
        %4229 = vmatprep.subr.mxu0 0.0
        %4230 = vmatpush1.xpose.msra.mxu0 0.0
        %4231 = vmatprep.subr.mxu0 0.0
        %4232 = vmatpush1.xpose.msra.mxu0 0.0
        %4233 = vmatprep.subr.mxu0 0.0
        %4234 = vmatpush1.xpose.msra.mxu0 0.0
        %4235 = vmatprep.subr.mxu0 0.0
        %4236 = vmatpush1.xpose.msra.mxu0 0.0
        %4237 = vmatprep.subr.mxu0 0.0
        %4238 = vmatpush1.xpose.msra.mxu0 0.0
        %4239 = vmatprep.subr.mxu0 0.0
        %4240 = vmatpush1.xpose.msra.mxu0 0.0
        %4241 = vmatprep.subr.mxu0 0.0
        %4242 = vmatpush1.xpose.msra.mxu0 0.0
        %4243 = vmatprep.subr.mxu0 0.0
        %4244 = vmatpush1.xpose.msra.mxu0 0.0
        %4245 = vmatprep.subr.mxu0 0.0
        %4246 = vmatpush1.xpose.msra.mxu0 0.0
        %4247 = vmatprep.subr.mxu0 0.0
        %4248 = vmatpush1.xpose.msra.mxu0 0.0
        %4249 = vmatprep.subr.mxu0 0.0
        %4250 = vmatpush1.xpose.msra.mxu0 0.0
        %4251 = vmatprep.subr.mxu0 0.0
        %4252 = vmatpush1.xpose.msra.mxu0 0.0
        %4253 = vmatprep.subr.mxu0 0.0
        %4254 = vmatpush1.xpose.msra.mxu0 0.0
        %4255 = vmatprep.subr.mxu0 0.0
        %4256 = vmatpush1.xpose.msra.mxu0 0.0
        %4257 = vmatprep.subr.mxu0 0.0
        %4258 = vmatpush1.xpose.msra.mxu0 0.0
        %4259 = vmatprep.subr.mxu0 0.0
        %4260 = vmatpush1.xpose.msra.mxu0 0.0
        %4261 = vmatprep.mubr.f32.mxu0 0.0
        %4262 = vmatmul.mubr.f32.gmra.mrb[0].mxu0 %v4189
        %v4263 = vpop.f32.mrb[0].mxu0
        %v4264 = vadd.f32 0.0, %v4263
        %v4265 = vpop.f32.mrb[0].mxu0
        %4266 = vmatprep.mubr.f32.mxu0 0.0
        %4267 = vmatmul.mubr.f32.gmra.mrb[0].mxu0 %v4191
        %v4268 = vpop.f32.mrb[0].mxu0
        %v4269 = vadd.f32 0.0, %v4268
        %v4270 = vpop.f32.mrb[0].mxu0
        %4271 = vdwg.mxu0
        %v4272 = vmul.f32 %v4264, 0.35355338
        %v4273 = vmul.f32 %v4269, 0.35355338
        %v4274 = vadd.f32 %v4272, %v3236
        %v4275 = vadd.f32 %v4273, %v3237
        %v4276 = vsel %vm3418, %v4274, -inf
        %4277 = vmax.xlane.f32.xlu0 %v4276
        %v4278 = vpop.xlane.xlu0 %4277
        %v4279 = vsel %vm3418, %v4275, -inf
        %4280 = vmax.xlane.f32.xlu0 %v4279
        %v4281 = vpop.xlane.xlu0 %4280
        %v4282 = vsub.f32 %v4274, %v4278
        %v4283 = vsub.f32 %v4275, %v4281
        %v4284 = vmul.f32 %v4282, 1.442695
        %v4285 = vpow.pop %v4284
        %v4286 = vmul.f32 %v4283, 1.442695
        %v4287 = vpow.pop %v4286
        %v4288 = vsel %vm3418, %v4285, 0.0
        %4289 = vadd.xlane.f32.xlu0 %v4288
        %v4290 = vpop.xlane.xlu0 %4289
        %v4291 = vsel %vm3418, %v4287, 0.0
        %4292 = vadd.xlane.f32.xlu0 %v4291
        %v4293 = vpop.xlane.xlu0 %4292
        %v4294 = vrcp.pop %v4290
        %v4295 = vrcp.pop %v4293
        %v4296 = vmul.f32 %v4285, %v4294
        %v4297 = vmul.f32 %v4287, %v4295
        %4298 = vrot.lane.b32.xlu0 %v3317, 40
        %v4299 = vpop.permute.xlu0 %4298
        %4300 = vrot.lane.b32.xlu0 %v3322, 40
        %v4301 = vpop.permute.xlu0 %4300
        %v4305 = vsel %vm3418, %v4296, 0
        %v4308 = vsel %vm3418, %v4297, 0
        %4310 = vmatprep.subr.mxu0 0.0
        %4311 = vmatpush1.msra.mxu0 %v4299
        %4312 = vmatprep.subr.mxu0 0.0
        %4313 = vmatpush1.msra.mxu0 %v4301
        %4314 = vmatprep.subr.mxu0 0.0
        %4315 = vmatpush1.msra.mxu0 0.0
        %4316 = vmatprep.subr.mxu0 0.0
        %4317 = vmatpush1.msra.mxu0 0.0
        %4318 = vmatprep.subr.mxu0 0.0
        %4319 = vmatpush1.msra.mxu0 0.0
        %4320 = vmatprep.subr.mxu0 0.0
        %4321 = vmatpush1.msra.mxu0 0.0
        %4322 = vmatprep.subr.mxu0 0.0
        %4323 = vmatpush1.msra.mxu0 0.0
        %4324 = vmatprep.subr.mxu0 0.0
        %4325 = vmatpush1.msra.mxu0 0.0
        %4326 = vmatprep.subr.mxu0 0.0
        %4327 = vmatpush1.msra.mxu0 0.0
        %4328 = vmatprep.subr.mxu0 0.0
        %4329 = vmatpush1.msra.mxu0 0.0
        %4330 = vmatprep.subr.mxu0 0.0
        %4331 = vmatpush1.msra.mxu0 0.0
        %4332 = vmatprep.subr.mxu0 0.0
        %4333 = vmatpush1.msra.mxu0 0.0
        %4334 = vmatprep.subr.mxu0 0.0
        %4335 = vmatpush1.msra.mxu0 0.0
        %4336 = vmatprep.subr.mxu0 0.0
        %4337 = vmatpush1.msra.mxu0 0.0
        %4338 = vmatprep.subr.mxu0 0.0
        %4339 = vmatpush1.msra.mxu0 0.0
        %4340 = vmatprep.subr.mxu0 0.0
        %4341 = vmatpush1.msra.mxu0 0.0
        %4342 = vmatprep.subr.mxu0 0.0
        %4343 = vmatpush1.msra.mxu0 0.0
        %4344 = vmatprep.subr.mxu0 0.0
        %4345 = vmatpush1.msra.mxu0 0.0
        %4346 = vmatprep.subr.mxu0 0.0
        %4347 = vmatpush1.msra.mxu0 0.0
        %4348 = vmatprep.subr.mxu0 0.0
        %4349 = vmatpush1.msra.mxu0 0.0
        %4350 = vmatprep.subr.mxu0 0.0
        %4351 = vmatpush1.msra.mxu0 0.0
        %4352 = vmatprep.subr.mxu0 0.0
        %4353 = vmatpush1.msra.mxu0 0.0
        %4354 = vmatprep.subr.mxu0 0.0
        %4355 = vmatpush1.msra.mxu0 0.0
        %4356 = vmatprep.subr.mxu0 0.0
        %4357 = vmatpush1.msra.mxu0 0.0
        %4358 = vmatprep.subr.mxu0 0.0
        %4359 = vmatpush1.msra.mxu0 0.0
        %4360 = vmatprep.subr.mxu0 0.0
        %4361 = vmatpush1.msra.mxu0 0.0
        %4362 = vmatprep.subr.mxu0 0.0
        %4363 = vmatpush1.msra.mxu0 0.0
        %4364 = vmatprep.subr.mxu0 0.0
        %4365 = vmatpush1.msra.mxu0 0.0
        %4366 = vmatprep.subr.mxu0 0.0
        %4367 = vmatpush1.msra.mxu0 0.0
        %4368 = vmatprep.subr.mxu0 0.0
        %4369 = vmatpush1.msra.mxu0 0.0
        %4370 = vmatprep.subr.mxu0 0.0
        %4371 = vmatpush1.msra.mxu0 0.0
        %4372 = vmatprep.subr.mxu0 0.0
        %4373 = vmatpush1.msra.mxu0 0.0
        %4374 = vmatprep.mubr.f32.mxu0 0.0
        %4375 = vmatmul.mubr.f32.gmra.mrb[0].mxu0 %v4305
        %v4376 = vpop.f32.mrb[0].mxu0
        %v4377 = vadd.f32 0.0, %v4376
        %v4378 = vpop.f32.mrb[0].mxu0
        %4379 = vmatprep.mubr.f32.mxu0 0.0
        %4380 = vmatmul.mubr.f32.gmra.mrb[0].mxu0 %v4308
        %v4381 = vpop.f32.mrb[0].mxu0
        %v4382 = vadd.f32 0.0, %v4381
        %v4383 = vpop.f32.mrb[0].mxu0
        %4384 = vdwg.mxu0
        %v4386 = vsel %vm1074, %v4377, 0
        %v4389 = vsel %vm1074, %v4382, 0
        %4391 = vmatprep.subr.mxu0 0.0
        %4392 = vmatpush1.msra.mxu0 %v3234
        %4393 = vmatprep.subr.mxu0 0.0
        %4394 = vmatpush1.msra.mxu0 0.0
        %4395 = vmatprep.subr.mxu0 0.0
        %4396 = vmatpush1.msra.mxu0 0.0
        %4397 = vmatprep.subr.mxu0 0.0
        %4398 = vmatpush1.msra.mxu0 0.0
        %4399 = vmatprep.subr.mxu0 0.0
        %4400 = vmatpush1.msra.mxu0 0.0
        %4401 = vmatprep.subr.mxu0 0.0
        %4402 = vmatpush1.msra.mxu0 0.0
        %4403 = vmatprep.subr.mxu0 0.0
        %4404 = vmatpush1.msra.mxu0 0.0
        %4405 = vmatprep.subr.mxu0 0.0
        %4406 = vmatpush1.msra.mxu0 0.0
        %4407 = vmatprep.subr.mxu0 0.0
        %4408 = vmatpush1.msra.mxu0 0.0
        %4409 = vmatprep.subr.mxu0 0.0
        %4410 = vmatpush1.msra.mxu0 0.0
        %4411 = vmatprep.subr.mxu0 0.0
        %4412 = vmatpush1.msra.mxu0 0.0
        %4413 = vmatprep.subr.mxu0 0.0
        %4414 = vmatpush1.msra.mxu0 0.0
        %4415 = vmatprep.subr.mxu0 0.0
        %4416 = vmatpush1.msra.mxu0 0.0
        %4417 = vmatprep.subr.mxu0 0.0
        %4418 = vmatpush1.msra.mxu0 0.0
        %4419 = vmatprep.subr.mxu0 0.0
        %4420 = vmatpush1.msra.mxu0 0.0
        %4421 = vmatprep.subr.mxu0 0.0
        %4422 = vmatpush1.msra.mxu0 0.0
        %4423 = vmatprep.subr.mxu0 0.0
        %4424 = vmatpush1.msra.mxu0 0.0
        %4425 = vmatprep.subr.mxu0 0.0
        %4426 = vmatpush1.msra.mxu0 0.0
        %4427 = vmatprep.subr.mxu0 0.0
        %4428 = vmatpush1.msra.mxu0 0.0
        %4429 = vmatprep.subr.mxu0 0.0
        %4430 = vmatpush1.msra.mxu0 0.0
        %4431 = vmatprep.subr.mxu0 0.0
        %4432 = vmatpush1.msra.mxu0 0.0
        %4433 = vmatprep.subr.mxu0 0.0
        %4434 = vmatpush1.msra.mxu0 0.0
        %4435 = vmatprep.subr.mxu0 0.0
        %4436 = vmatpush1.msra.mxu0 0.0
        %4437 = vmatprep.subr.mxu0 0.0
        %4438 = vmatpush1.msra.mxu0 0.0
        %4439 = vmatprep.subr.mxu0 0.0
        %4440 = vmatpush1.msra.mxu0 0.0
        %4441 = vmatprep.subr.mxu0 0.0
        %4442 = vmatpush1.msra.mxu0 0.0
        %4443 = vmatprep.subr.mxu0 0.0
        %4444 = vmatpush1.msra.mxu0 0.0
        %4445 = vmatprep.subr.mxu0 0.0
        %4446 = vmatpush1.msra.mxu0 0.0
        %4447 = vmatprep.subr.mxu0 0.0
        %4448 = vmatpush1.msra.mxu0 0.0
        %4449 = vmatprep.subr.mxu0 0.0
        %4450 = vmatpush1.msra.mxu0 0.0
        %4451 = vmatprep.subr.mxu0 0.0
        %4452 = vmatpush1.msra.mxu0 0.0
        %4453 = vmatprep.subr.mxu0 0.0
        %4454 = vmatpush1.msra.mxu0 0.0
        %4455 = vmatprep.mubr.f32.mxu0 0.0
        %4456 = vmatmul.mubr.f32.gmra.mrb[0].mxu0 %v4386
        %v4457 = vpop.f32.mrb[0].mxu0
        %v4458 = vadd.f32 0.0, %v4457
        %v4459 = vpop.f32.mrb[0].mxu0
        %4460 = vmatprep.mubr.f32.mxu0 0.0
        %4461 = vmatmul.mubr.f32.gmra.mrb[0].mxu0 %v4389
        %v4462 = vpop.f32.mrb[0].mxu0
        %v4463 = vadd.f32 0.0, %v4462
        %v4464 = vpop.f32.mrb[0].mxu0
        %4465 = vdwg.mxu0
        %v4466 = vadd.f32 %v4179, %v4458
        %v4467 = vadd.f32 %v4180, %v4463
        %v4468 = vadd.f32 %v3224, %v4466
        %v4469 = vadd.f32 %v3225, %v4467
        %v4471 = vlaneseq
        %v4472 = vshrl.u32 %v4471, 7
        %v4473 = vsub.s32 0, %v4472
        %v4474 = vrot.slane %v3235, %v4473
        %v4476 = vadd.f32 %v4468, %v4474
        %v4477 = vadd.f32 %v4469, %v4474
        %v4478 = vsel %vm964, %v4476, 0.0
        %4479 = vadd.xlane.f32.xlu0 %v4478
        %v4480 = vpop.xlane.xlu0 %4479
        %v4481 = vsel %vm964, %v4477, 0.0
        %4482 = vadd.xlane.f32.xlu0 %v4481
        %v4483 = vpop.xlane.xlu0 %4482
        %v4484 = vrcp.pop 32.0
        %v4485 = vmul.f32 %v4480, %v4484
        %v4486 = vmul.f32 %v4483, %v4484
        %v4487 = vsub.f32 %v4476, %v4485
        %v4488 = vsub.f32 %v4477, %v4486
        %v4489 = vmul.f32 %v4487, %v4487
        %v4490 = vmul.f32 %v4488, %v4488
        %v4491 = vsel %vm964, %v4489, 0.0
        %4492 = vadd.xlane.f32.xlu0 %v4491
        %v4493 = vpop.xlane.xlu0 %4492
        %v4494 = vsel %vm964, %v4490, 0.0
        %4495 = vadd.xlane.f32.xlu0 %v4494
        %v4496 = vpop.xlane.xlu0 %4495
        %v4497 = vmul.f32 %v4493, %v4484
        %v4498 = vmul.f32 %v4496, %v4484
        %v4499 = vadd.f32 %v4497, 1e-05
        %v4500 = vadd.f32 %v4498, 1e-05
        %v4501 = vrsqrt.pop %v4499
        %v4502 = vrsqrt.pop %v4500
        %v4503 = vmul.f32 %v4487, %v4501
        %v4504 = vmul.f32 %v4488, %v4502
        %v4505 = vld [vmem:[#allocation13] sm:$0x1]
        %v4507 = vlaneseq
        %v4508 = vshrl.u32 %v4507, 7
        %v4509 = vsub.s32 0, %v4508
        %v4510 = vrot.slane %v4505, %v4509
        %v4512 = vmul.f32 %v4503, %v4510
        %v4513 = vmul.f32 %v4504, %v4510
        %v4514 = vld [vmem:[#allocation14] sm:$0x1]
        %v4516 = vlaneseq
        %v4517 = vshrl.u32 %v4516, 7
        %v4518 = vsub.s32 0, %v4517
        %v4519 = vrot.slane %v4514, %v4518
        %v4521 = vadd.f32 %v4512, %v4519
        %v4522 = vadd.f32 %v4513, %v4519
        %v4523 = vld [vmem:[#allocation25] sm:$0xff]
        %v4524 = vld [vmem:[#allocation25 + $0x8] sm:$0xff]
        %v4526 = vsel %vm3418, %v4523, 0
        %v4529 = vsel %vm3418, %v4524, 0
        %4531 = vmatprep.subr.mxu0 0.0
        %4532 = vmatpush1.msra.mxu0 %v4521
        %4533 = vmatprep.subr.mxu0 0.0
        %4534 = vmatpush1.msra.mxu0 %v4522
        %4535 = vmatprep.subr.mxu0 0.0
        %4536 = vmatpush1.msra.mxu0 0.0
        %4537 = vmatprep.subr.mxu0 0.0
        %4538 = vmatpush1.msra.mxu0 0.0
        %4539 = vmatprep.subr.mxu0 0.0
        %4540 = vmatpush1.msra.mxu0 0.0
        %4541 = vmatprep.subr.mxu0 0.0
        %4542 = vmatpush1.msra.mxu0 0.0
        %4543 = vmatprep.subr.mxu0 0.0
        %4544 = vmatpush1.msra.mxu0 0.0
        %4545 = vmatprep.subr.mxu0 0.0
        %4546 = vmatpush1.msra.mxu0 0.0
        %4547 = vmatprep.subr.mxu0 0.0
        %4548 = vmatpush1.msra.mxu0 0.0
        %4549 = vmatprep.subr.mxu0 0.0
        %4550 = vmatpush1.msra.mxu0 0.0
        %4551 = vmatprep.subr.mxu0 0.0
        %4552 = vmatpush1.msra.mxu0 0.0
        %4553 = vmatprep.subr.mxu0 0.0
        %4554 = vmatpush1.msra.mxu0 0.0
        %4555 = vmatprep.subr.mxu0 0.0
        %4556 = vmatpush1.msra.mxu0 0.0
        %4557 = vmatprep.subr.mxu0 0.0
        %4558 = vmatpush1.msra.mxu0 0.0
        %4559 = vmatprep.subr.mxu0 0.0
        %4560 = vmatpush1.msra.mxu0 0.0
        %4561 = vmatprep.subr.mxu0 0.0
        %4562 = vmatpush1.msra.mxu0 0.0
        %4563 = vmatprep.subr.mxu0 0.0
        %4564 = vmatpush1.msra.mxu0 0.0
        %4565 = vmatprep.subr.mxu0 0.0
        %4566 = vmatpush1.msra.mxu0 0.0
        %4567 = vmatprep.subr.mxu0 0.0
        %4568 = vmatpush1.msra.mxu0 0.0
        %4569 = vmatprep.subr.mxu0 0.0
        %4570 = vmatpush1.msra.mxu0 0.0
        %4571 = vmatprep.subr.mxu0 0.0
        %4572 = vmatpush1.msra.mxu0 0.0
        %4573 = vmatprep.subr.mxu0 0.0
        %4574 = vmatpush1.msra.mxu0 0.0
        %4575 = vmatprep.subr.mxu0 0.0
        %4576 = vmatpush1.msra.mxu0 0.0
        %4577 = vmatprep.subr.mxu0 0.0
        %4578 = vmatpush1.msra.mxu0 0.0
        %4579 = vmatprep.subr.mxu0 0.0
        %4580 = vmatpush1.msra.mxu0 0.0
        %4581 = vmatprep.subr.mxu0 0.0
        %4582 = vmatpush1.msra.mxu0 0.0
        %4583 = vmatprep.subr.mxu0 0.0
        %4584 = vmatpush1.msra.mxu0 0.0
        %4585 = vmatprep.subr.mxu0 0.0
        %4586 = vmatpush1.msra.mxu0 0.0
        %4587 = vmatprep.subr.mxu0 0.0
        %4588 = vmatpush1.msra.mxu0 0.0
        %4589 = vmatprep.subr.mxu0 0.0
        %4590 = vmatpush1.msra.mxu0 0.0
        %4591 = vmatprep.subr.mxu0 0.0
        %4592 = vmatpush1.msra.mxu0 0.0
        %4593 = vmatprep.subr.mxu0 0.0
        %4594 = vmatpush1.msra.mxu0 0.0
        %4595 = vmatprep.mubr.f32.mxu0 0.0
        %4596 = vmatmul.mubr.f32.gmra.mrb[0].mxu0 %v4526
        %v4597 = vpop.f32.mrb[0].mxu0
        %v4598 = vadd.f32 0.0, %v4597
        %v4599 = vpop.f32.mrb[0].mxu0
        %4600 = vmatprep.mubr.f32.mxu0 0.0
        %4601 = vmatmul.mubr.f32.gmra.mrb[0].mxu0 %v4529
        %v4602 = vpop.f32.mrb[0].mxu0
        %v4603 = vadd.f32 0.0, %v4602
        %v4604 = vpop.f32.mrb[0].mxu0
        %4605 = vdwg.mxu0
        %v4606 = vld [vmem:[%s22] sm:$0xff]
        %v4607 = vld [vmem:[%s22 + $0x8] sm:$0xff]
        %v4608 = vld [vmem:[%s22 + $0x10] sm:$0xff]
        %v4609 = vld [vmem:[%s22 + $0x18] sm:$0xff]
        %v4610 = vld [vmem:[%s23] sm:$0x1]
        %v4612 = vlaneseq
        %v4613 = vshrl.u32 %v4612, 7
        %v4614 = vsub.s32 0, %v4613
        %v4615 = vrot.slane %v4610, %v4614
        %v4618 = vsel %vm964, %v4598, 0
        %v4621 = vsel %vm964, %v4603, 0
        %4623 = vmatprep.subr.mxu0 0.0
        %4624 = vmatpush1.msra.mxu0 %v4606
        %4625 = vmatprep.subr.mxu0 0.0
        %4626 = vmatpush1.msra.mxu0 %v4607
        %4627 = vmatprep.subr.mxu0 0.0
        %4628 = vmatpush1.msra.mxu0 %v4608
        %4629 = vmatprep.subr.mxu0 0.0
        %4630 = vmatpush1.msra.mxu0 %v4609
        %4631 = vmatprep.subr.mxu0 0.0
        %4632 = vmatpush1.msra.mxu0 0.0
        %4633 = vmatprep.subr.mxu0 0.0
        %4634 = vmatpush1.msra.mxu0 0.0
        %4635 = vmatprep.subr.mxu0 0.0
        %4636 = vmatpush1.msra.mxu0 0.0
        %4637 = vmatprep.subr.mxu0 0.0
        %4638 = vmatpush1.msra.mxu0 0.0
        %4639 = vmatprep.subr.mxu0 0.0
        %4640 = vmatpush1.msra.mxu0 0.0
        %4641 = vmatprep.subr.mxu0 0.0
        %4642 = vmatpush1.msra.mxu0 0.0
        %4643 = vmatprep.subr.mxu0 0.0
        %4644 = vmatpush1.msra.mxu0 0.0
        %4645 = vmatprep.subr.mxu0 0.0
        %4646 = vmatpush1.msra.mxu0 0.0
        %4647 = vmatprep.subr.mxu0 0.0
        %4648 = vmatpush1.msra.mxu0 0.0
        %4649 = vmatprep.subr.mxu0 0.0
        %4650 = vmatpush1.msra.mxu0 0.0
        %4651 = vmatprep.subr.mxu0 0.0
        %4652 = vmatpush1.msra.mxu0 0.0
        %4653 = vmatprep.subr.mxu0 0.0
        %4654 = vmatpush1.msra.mxu0 0.0
        %4655 = vmatprep.subr.mxu0 0.0
        %4656 = vmatpush1.msra.mxu0 0.0
        %4657 = vmatprep.subr.mxu0 0.0
        %4658 = vmatpush1.msra.mxu0 0.0
        %4659 = vmatprep.subr.mxu0 0.0
        %4660 = vmatpush1.msra.mxu0 0.0
        %4661 = vmatprep.subr.mxu0 0.0
        %4662 = vmatpush1.msra.mxu0 0.0
        %4663 = vmatprep.subr.mxu0 0.0
        %4664 = vmatpush1.msra.mxu0 0.0
        %4665 = vmatprep.subr.mxu0 0.0
        %4666 = vmatpush1.msra.mxu0 0.0
        %4667 = vmatprep.subr.mxu0 0.0
        %4668 = vmatpush1.msra.mxu0 0.0
        %4669 = vmatprep.subr.mxu0 0.0
        %4670 = vmatpush1.msra.mxu0 0.0
        %4671 = vmatprep.subr.mxu0 0.0
        %4672 = vmatpush1.msra.mxu0 0.0
        %4673 = vmatprep.subr.mxu0 0.0
        %4674 = vmatpush1.msra.mxu0 0.0
        %4675 = vmatprep.subr.mxu0 0.0
        %4676 = vmatpush1.msra.mxu0 0.0
        %4677 = vmatprep.subr.mxu0 0.0
        %4678 = vmatpush1.msra.mxu0 0.0
        %4679 = vmatprep.subr.mxu0 0.0
        %4680 = vmatpush1.msra.mxu0 0.0
        %4681 = vmatprep.subr.mxu0 0.0
        %4682 = vmatpush1.msra.mxu0 0.0
        %4683 = vmatprep.subr.mxu0 0.0
        %4684 = vmatpush1.msra.mxu0 0.0
        %4685 = vmatprep.subr.mxu0 0.0
        %4686 = vmatpush1.msra.mxu0 0.0
        %4687 = vmatprep.mubr.f32.mxu0 0.0
        %4688 = vmatmul.mubr.f32.gmra.mrb[0].mxu0 %v4618
        %v4689 = vpop.f32.mrb[0].mxu0
        %v4690 = vadd.f32 %v4615, %v4689
        %v4691 = vpop.f32.mrb[0].mxu0
        %4692 = vmatprep.mubr.f32.mxu0 0.0
        %4693 = vmatmul.mubr.f32.gmra.mrb[0].mxu0 %v4621
        %v4694 = vpop.f32.mrb[0].mxu0
        %v4695 = vadd.f32 %v4615, %v4694
        %v4696 = vpop.f32.mrb[0].mxu0
        %4697 = vdwg.mxu0
        %v4698 = vmax.f32 %v4690, 0.0
        %v4699 = vmax.f32 %v4695, 0.0
        %v4700 = vmul.f32 %v4521, 0.5
        %v4701 = vmul.f32 %v4522, 0.5
        %v4702 = vmul.f32 %v4698, 0.5
        %v4703 = vmul.f32 %v4699, 0.5
        %v4704 = vadd.f32 %v4700, %v4702
        %v4705 = vadd.f32 %v4701, %v4703
        %4706 = vst.msk [vmem:[%s934] sm:$0xff] %vm964, %v4704
        %4707 = vst.msk [vmem:[%s934 + $0x8] sm:$0xff] %vm964, %v4705
        %s4708 = sand.u32 %s563, 1
        %s4709 = scalar_lea.sflag [#allocation4], %s4708
        %s4710 = sand.u32 %s563, 1
        %s4711 = smul.addr %s4710, 16
        %s4712 = scalar_lea.vmem [#allocation26], %s4711
        // Predicated region
        $region177: #{tpu_custom_call.1} parent=115 // pred_check
          %p4713 = pneg %p573
        $region178: #{tpu_custom_call.1} parent=115 // pred_check_branch
          %4715 = sbr.rel (%p4713) target = $region180
        $region179: #{tpu_custom_call.1} parent=115 // pred_region
          %s4717 = ssub.s32 256, 256
          %4718 = vsyncadd %s4709, %s4717
          %s4719 = smul.addr %s46, 2
          %s4720 = smul.addr %s4719, 128
          %s4721 = scalar_lea.hbm %s24, %s4720
          %s4722 = sshll.u32 %s4712, 4
          %s4723 = int_to_ptr.vmem [resolvable:$true] %s4722
          %4728 = dma.vmem_to_hbm [thread:$0]  %s4723, 256, %s4721, %s4709, 128, 128, 8
        $region180: #{tpu_custom_call.1} parent=115 // pred_fallthru
          _
      $region116: #{tpu_custom_call.1} parent=5 // pred_fallthru
        _
      %p4729 = scmp.le.s32.totalorder 2, %s41
      // Predicated region
      $region181: #{tpu_custom_call.1} parent=5 // pred_check
        %p4730 = pneg %p4729
      $region182: #{tpu_custom_call.1} parent=5 // pred_check_branch
        %4732 = sbr.rel (%p4730) target = $region184
      $region183: #{tpu_custom_call.1} parent=5 // pred_region
        %s4733 = ssub.s32 %s41, 2
        // Predicated region
        $region185: #{tpu_custom_call.1} parent=183 // pred_check
          %p4734 = pneg %p579
        $region186: #{tpu_custom_call.1} parent=183 // pred_check_branch
          %4736 = sbr.rel (%p4734) target = $region188
        $region187: #{tpu_custom_call.1} parent=183 // pred_region
          %s4737 = sand.u32 %s564, 1
          %s4738 = scalar_lea.sflag [#allocation4], %s4737
          %s4739 = sand.u32 %s564, 1
          %s4740 = smul.addr %s4739, 16
          %s4741 = scalar_lea.vmem [#allocation26], %s4740
          %4742 = dma.done %s4738, 256
        $region188: #{tpu_custom_call.1} parent=183 // pred_fallthru
          _
      $region184: #{tpu_custom_call.1} parent=5 // pred_fallthru
        _
    $region6: #{tpu_custom_call.1} parent=1 // loop_footer
      %s45 = sadd.s32 1, %s41
    $region7: #{tpu_custom_call.1} parent=1 // loop_footer_branch
      %40 = sbr.rel target = $region3
    $region8: #{tpu_custom_call.1} parent=1 // loop_exit
      _
    %4743 = vsyncpa [#allocation3], 1
    %s4744 = scalar_lea.sflag [#allocation3], 1
    %4745 = vsyncpa %s4744, 1
    %4746 = vsyncpa [#allocation6], 1
    %4747 = vsyncpa [#allocation9], 1
    %4748 = vsyncpa [#allocation12], 1
    %4749 = vsyncpa [#allocation15], 1
    %4750 = vsyncpa [#allocation18], 1
    %4751 = vsyncpa [#allocation21], 1
    %4752 = vsyncpa [#allocation24], 1
    %4753 = vsyncpa [#allocation4], 1
    %s4754 = scalar_lea.sflag [#allocation4], 1
    %4755 = vsyncpa %s4754, 1

</llo_original>
